<compile_context>
chip_gen: v7x
topology: tpu7x:2x2x1
jax: 0.10.0
libtpu: 0.0.40
codegen_flags: <defaults>
</compile_context>

<pallas_src>
import functools
from collections import deque

import numpy as np
import jax
import jax.numpy as jnp
from jax.experimental import pallas as pl
from jax.experimental.pallas import tpu as pltpu


# ----------------------------- Pallas kernel --------------------------------

def _ln(x, g, b):
    # LayerNorm over the feature dim, torch defaults (biased var, eps=1e-5)
    mu = jnp.mean(x, axis=-1, keepdims=True)
    xc = x - mu
    var = jnp.mean(xc * xc, axis=-1, keepdims=True)
    return xc * jax.lax.rsqrt(var + 1e-5) * g + b


def _graphormer_fused_kernel(xin_ref, win_ref, bin_ref, cent_ref, bias_ref,
                             wqkv_ref, bqkv_ref, wo_ref, bo_ref,
                             ln1g_ref, ln1b_ref, ln2g_ref, ln2b_ref,
                             ffw_ref, ffb_ref, wout_ref, bout_ref,
                             y_ref, x_sc, *, n_heads, dk):
    """grid = (batch_graph, layer).  One grid step == one encoder layer of one
    graph.  Node features live in the x_sc VMEM scratch across layers; the
    input projection runs at layer 0 and the output projection at the last
    layer, so the whole forward is one pallas_call."""
    layer = pl.program_id(1)
    n_layers = pl.num_programs(1)

    @pl.when(layer == 0)
    def _():
        # fused node input projection + centrality-encoding add
        x_sc[...] = (jnp.dot(xin_ref[0], win_ref[...],
                             preferred_element_type=jnp.float32)
                     + bin_ref[...] + cent_ref[0])

    x = x_sc[...]                                           # [N, D]
    N = x.shape[0]
    HD = n_heads * dk

    # --- LN1 -> fused QKV (attention scale folded into wq/bq at pack time) ---
    h = _ln(x, ln1g_ref[0], ln1b_ref[0])
    qkv = (jnp.dot(h, wqkv_ref[0], preferred_element_type=jnp.float32)
           + bqkv_ref[0])                                   # [N, 3*H*dk]
    # 128-lane-aligned slices, then one relayout to head-major [H, N, dk]
    q = jnp.transpose(qkv[:, 0:HD].reshape(N, n_heads, dk), (1, 0, 2))
    k = jnp.transpose(qkv[:, HD:2 * HD].reshape(N, n_heads, dk), (1, 0, 2))
    v = jnp.transpose(qkv[:, 2 * HD:3 * HD].reshape(N, n_heads, dk), (1, 0, 2))

    # --- head-batched biased softmax attention (no per-head python loop) ---
    s = (jnp.einsum("hnd,hmd->hnm", q, k,
                    preferred_element_type=jnp.float32)
         + bias_ref[0])                                     # [H, N, N]
    s = s - jnp.max(s, axis=-1, keepdims=True)
    p = jnp.exp(s)
    p = p * pl.reciprocal(jnp.sum(p, axis=-1, keepdims=True), approx=True)
    o = jnp.einsum("hnm,hmd->hnd", p, v,
                   preferred_element_type=jnp.float32)      # [H, N, dk]
    cat = jnp.transpose(o, (1, 0, 2)).reshape(N, HD)        # [N, H*dk] lanes

    # --- out-proj + residual -> LN2 -> FFN + residual ---
    x1 = (jnp.dot(cat, wo_ref[0], preferred_element_type=jnp.float32)
          + bo_ref[0] + x)
    h2 = _ln(x1, ln2g_ref[0], ln2b_ref[0])
    x2 = (jnp.dot(h2, ffw_ref[0], preferred_element_type=jnp.float32)
          + ffb_ref[0] + x1)
    x_sc[...] = x2

    # --- final node output projection fused into the last layer step ---
    # TODO(synk): for realistic workloads pad/pack output so its last dim is a
    # multiple of 128 (lane-dense stores) and pack multiple graphs into the
    # row dimension to raise MXU occupancy.
    @pl.when(layer == n_layers - 1)
    def _():
        y_ref[0] = (jnp.dot(x2, wout_ref[...],
                            preferred_element_type=jnp.float32)
                    + bout_ref[...])


def graphormer_fused(x_in, cent, bias_all, node_in_w, node_in_b, stacked,
                     node_out_w, node_out_b, cfg):
    """x_in: [B,N,Din]; cent: [B,N,D]; bias_all: [B, Lyr, H, N, N];
    stacked: per-layer weights stacked on a leading layer axis."""
    (wqkv, bqkv, wo, bo, ln1g, ln1b, ln2g, ln2b, ffw, ffb) = stacked
    B, N, Din = x_in.shape
    D = cfg["node_dim"]
    H = cfg["n_heads"]
    dk = D                                   # leffff: dim_q == dim_k == node_dim
    num_layers = cfg["num_layers"]
    Dout = cfg["output_dim"]

    # rank-4 bias blocks (safer than rank-5); index_map does b*L + l
    # TODO(synk): for large N store the bias in bf16 (f32 cast on load) or
    # tile it to [1,H,tq,tk] blocks so v7x's 64 MiB VMEM is not exceeded.
    bias_flat = bias_all.reshape(B * num_layers, H, N, N)

    kernel = functools.partial(_graphormer_fused_kernel, n_heads=H, dk=dk)
    return pl.pallas_call(
        kernel,
        out_shape=jax.ShapeDtypeStruct((B, N, Dout), jnp.float32),
        grid=(B, num_layers),
        in_specs=[
            pl.BlockSpec((1, N, Din), lambda b, l: (b, 0, 0)),          # x_in
            pl.BlockSpec((Din, D), lambda b, l: (0, 0)),                # node_in_w
            pl.BlockSpec((1, D), lambda b, l: (0, 0)),                  # node_in_b
            pl.BlockSpec((1, N, D), lambda b, l: (b, 0, 0)),            # cent
            pl.BlockSpec((1, H, N, N),
                         lambda b, l: (b * num_layers + l, 0, 0, 0)),   # bias
            pl.BlockSpec((1, D, 3 * H * dk), lambda b, l: (l, 0, 0)),   # wqkv
            pl.BlockSpec((1, 1, 3 * H * dk), lambda b, l: (l, 0, 0)),   # bqkv
            pl.BlockSpec((1, H * dk, D), lambda b, l: (l, 0, 0)),       # wo
            pl.BlockSpec((1, 1, D), lambda b, l: (l, 0, 0)),            # bo
            pl.BlockSpec((1, 1, D), lambda b, l: (l, 0, 0)),            # ln1_g
            pl.BlockSpec((1, 1, D), lambda b, l: (l, 0, 0)),            # ln1_b
            pl.BlockSpec((1, 1, D), lambda b, l: (l, 0, 0)),            # ln2_g
            pl.BlockSpec((1, 1, D), lambda b, l: (l, 0, 0)),            # ln2_b
            pl.BlockSpec((1, D, D), lambda b, l: (l, 0, 0)),            # ff_w
            pl.BlockSpec((1, 1, D), lambda b, l: (l, 0, 0)),            # ff_b
            pl.BlockSpec((D, Dout), lambda b, l: (0, 0)),               # node_out_w
            pl.BlockSpec((1, Dout), lambda b, l: (0, 0)),               # node_out_b
        ],
        out_specs=pl.BlockSpec((1, N, Dout), lambda b, l: (b, 0, 0)),
        scratch_shapes=[pltpu.VMEM((N, D), jnp.float32)],
        compiler_params=pltpu.CompilerParams(
            dimension_semantics=("parallel", "arbitrary"),   # b across TCs (v7x)
            vmem_limit_bytes=32 * 1024 * 1024),
    )(x_in, node_in_w, node_in_b, cent, bias_flat,
      wqkv, bqkv, wo, bo, ln1g, ln1b, ln2g, ln2b, ffw, ffb,
      node_out_w, node_out_b)


# ----------------------- graph / path precompute (glue) ---------------------
# TODO(synk): shortest-path search (networkx in the original) and the ragged
# path dictionaries have no clean Pallas equivalent; they are densified on host.

def build_graph(n_nodes):
    edges = []
    for i in range(n_nodes):
        edges.append((i, (i + 1) % n_nodes))
        edges.append(((i + 1) % n_nodes, i))
    return np.array(edges, dtype=np.int64).T          # [2, E]


def all_pairs_shortest_paths(edge_index, n_nodes):
    adj = [[] for _ in range(n_nodes)]
    for eid in range(edge_index.shape[1]):
        s, d = int(edge_index[0, eid]), int(edge_index[1, eid])
        adj[s].append((d, eid))
    node_paths, edge_paths = {}, {}
    for src in range(n_nodes):
        prev = {src: (None, None)}
        q = deque([src])
        while q:
            u = q.popleft()
            for v, eid in adj[u]:
                if v not in prev:
                    prev[v] = (u, eid)
                    q.append(v)
        node_paths[src], edge_paths[src] = {}, {}
        for dst in prev:
            npath, epath = [dst], []
            cur = dst
            while prev[cur][0] is not None:
                u, eid = prev[cur]
                epath.append(eid)
                npath.append(u)
                cur = u
            node_paths[src][dst] = npath[::-1]
            edge_paths[src][dst] = epath[::-1]
    return node_paths, edge_paths


def densify_paths(node_paths, edge_paths, n_nodes, max_path_distance):
    L = max_path_distance
    dist_idx = np.zeros((n_nodes, n_nodes), np.int32)
    reach = np.zeros((n_nodes, n_nodes), np.float32)
    path_idx = np.zeros((n_nodes, n_nodes, L), np.int32)
    path_mask = np.zeros((n_nodes, n_nodes, L), np.float32)
    path_len = np.zeros((n_nodes, n_nodes), np.float32)
    for src in node_paths:
        for dst in node_paths[src]:
            reach[src, dst] = 1.0
            dist_idx[src, dst] = min(len(node_paths[src][dst]), L) - 1
            ep = edge_paths[src][dst][:L]
            path_len[src, dst] = float(len(ep))
            for i, eid in enumerate(ep):
                path_idx[src, dst, i] = eid
                path_mask[src, dst, i] = 1.0
    return dist_idx, reach, path_idx, path_mask, path_len


# ------------------------------- parameters ---------------------------------

def _normal(key, shape, scale=0.1):
    return scale * jax.random.normal(key, shape, jnp.float32)


def init_params(key, cfg):
    keys = iter(jax.random.split(key, 512))
    D, De = cfg["node_dim"], cfg["edge_dim"]
    H, L = cfg["n_heads"], cfg["max_path_distance"]
    P = {
        "node_in_w": _normal(next(keys), (cfg["input_node_dim"], D)),
        "node_in_b": _normal(next(keys), (1, D)),
        "edge_in_w": _normal(next(keys), (cfg["input_edge_dim"], De)),
        "edge_in_b": _normal(next(keys), (1, De)),
        "z_in": _normal(next(keys), (cfg["max_in_degree"], D), 1.0),
        "z_out": _normal(next(keys), (cfg["max_out_degree"], D), 1.0),
        "spatial_b": _normal(next(keys), (L,), 1.0),
        "node_out_w": _normal(next(keys), (D, cfg["output_dim"])),
        "node_out_b": _normal(next(keys), (1, cfg["output_dim"])),
        "layers": [],
    }
    for _ in range(cfg["num_layers"]):
        lyr = {
            "wq": _normal(next(keys), (H, D, D)),
            "bq": _normal(next(keys), (H, 1, D)),
            "wk": _normal(next(keys), (H, D, D)),
            "bk": _normal(next(keys), (H, 1, D)),
            "wv": _normal(next(keys), (H, D, D)),
            "bv": _normal(next(keys), (H, 1, D)),
            "edge_vec": _normal(next(keys), (H, L, De), 1.0),
            "wo": _normal(next(keys), (H * D, D)),
            "bo": _normal(next(keys), (1, D)),
            "ln1_g": jnp.ones((1, D), jnp.float32),
            "ln1_b": jnp.zeros((1, D), jnp.float32),
            "ln2_g": jnp.ones((1, D), jnp.float32),
            "ln2_b": jnp.zeros((1, D), jnp.float32),
            "ff_w": _normal(next(keys), (D, D)),
            "ff_b": _normal(next(keys), (1, D)),
        }
        P["layers"].append(lyr)
    return P


def _stack_layer_params(P, cfg):
    """Pack per-layer weights into fused, layer-stacked tensors.
    Attention scale 1/sqrt(dim_q) (dim_q == node_dim, leffff semantics) is
    folded into wq/bq so the kernel never multiplies the score matrix."""
    D = cfg["node_dim"]
    H = cfg["n_heads"]
    dk = D
    scale = 1.0 / float(np.sqrt(D))

    def flat_w(w):                           # [H, D, dk] -> [D, H*dk]
        return jnp.transpose(w, (1, 0, 2)).reshape(D, H * dk)

    def flat_b(b):                           # [H, 1, dk] -> [1, H*dk]
        return b.reshape(1, H * dk)

    cols = {k: [] for k in ("wqkv", "bqkv", "wo", "bo", "ln1g", "ln1b",
                            "ln2g", "ln2b", "ffw", "ffb")}
    for lyr in P["layers"]:
        cols["wqkv"].append(jnp.concatenate(
            [flat_w(lyr["wq"]) * scale, flat_w(lyr["wk"]), flat_w(lyr["wv"])],
            axis=1))
        cols["bqkv"].append(jnp.concatenate(
            [flat_b(lyr["bq"]) * scale, flat_b(lyr["bk"]), flat_b(lyr["bv"])],
            axis=1))
        cols["wo"].append(lyr["wo"])
        cols["bo"].append(lyr["bo"])
        cols["ln1g"].append(lyr["ln1_g"])
        cols["ln1b"].append(lyr["ln1_b"])
        cols["ln2g"].append(lyr["ln2_g"])
        cols["ln2b"].append(lyr["ln2_b"])
        cols["ffw"].append(lyr["ff_w"])
        cols["ffb"].append(lyr["ff_b"])
    st = lambda xs: jnp.stack(xs, axis=0)
    return (st(cols["wqkv"]), st(cols["bqkv"]), st(cols["wo"]), st(cols["bo"]),
            st(cols["ln1g"]), st(cols["ln1b"]), st(cols["ln2g"]),
            st(cols["ln2b"]), st(cols["ffw"]), st(cols["ffb"]))


# -------------------------------- forward -----------------------------------

def graphormer_forward(P, x_in, edge_attr_in, edge_index_list, path_data, cfg):
    """x_in: [B,N,Din]; edge_attr_in: [B,E,De_in]; edge_index_list: list of
    per-graph [2,E] index arrays; path_data: stacked dense path tables."""
    dist_idx, reach, path_idx, path_mask, path_len = path_data
    B, N, _ = x_in.shape

    # centrality encoding: degree count (host) + embedding gather
    in_deg = np.stack([np.minimum(np.bincount(ei[1], minlength=N),
                                  cfg["max_in_degree"] - 1)
                       for ei in edge_index_list])
    out_deg = np.stack([np.minimum(np.bincount(ei[0], minlength=N),
                                   cfg["max_out_degree"] - 1)
                        for ei in edge_index_list])
    cent = P["z_in"][jnp.asarray(in_deg)] + P["z_out"][jnp.asarray(out_deg)]

    # edge input projection: [E, 4] @ [4, 16] is far below pallas_call fixed
    # cost -> plain XLA, fuses into the bias einsum below.
    edge_attr = (jnp.einsum("bef,fd->bed", edge_attr_in, P["edge_in_w"])
                 + P["edge_in_b"])                               # [B, E, De]

    # spatial encoding bias (unreachable pairs keep bias 0, matching reference)
    b_spatial = reach * P["spatial_b"][dist_idx]                 # [B, N, N]

    # edge-encoding bias for ALL layers in one stacked einsum
    gathered = jax.vmap(lambda ea, pi: ea[pi])(edge_attr, path_idx)  # [B,N,N,L,De]
    gathered = gathered * path_mask[..., None]
    edge_vec_all = jnp.stack([lyr["edge_vec"] for lyr in P["layers"]], axis=0)
    dots = jnp.einsum("shle,bnmle->bshnm", edge_vec_all, gathered)
    denom = jnp.maximum(path_len, 1.0)[:, None, None]            # [B,1,1,N,N]
    c = jnp.where(path_len[:, None, None] > 0.0, dots / denom, 0.0)
    bias_all = b_spatial[:, None, None] + c                      # [B,Lyr,H,N,N]

    stacked = _stack_layer_params(P, cfg)

    # ONE fused pallas_call: input proj + centrality, encoder stack, out proj
    return graphormer_fused(x_in, cent, bias_all,
                            P["node_in_w"], P["node_in_b"], stacked,
                            P["node_out_w"], P["node_out_b"], cfg)


# ---------------------------------- main -------------------------------------

if __name__ == "__main__":
    cfg = dict(num_layers=2, input_node_dim=8, node_dim=32,
               input_edge_dim=4, edge_dim=16, output_dim=8, n_heads=4,
               max_in_degree=5, max_out_degree=5, max_path_distance=5)

    B, N = 2, 16                                   # batch of graphs -> parallel grid axis
    edge_index = build_graph(N)                    # [2, 32] ring graph
    E = edge_index.shape[1]
    edge_index_list = [edge_index for _ in range(B)]
    node_paths, edge_paths = all_pairs_shortest_paths(edge_index, N)
    path_np = densify_paths(node_paths, edge_paths, N, cfg["max_path_distance"])
    path_data = tuple(jnp.asarray(np.stack([a] * B, axis=0)) for a in path_np)

    key = jax.random.PRNGKey(0)
    kx, ke, kp = jax.random.split(key, 3)
    x_in = jax.random.normal(kx, (B, N, cfg["input_node_dim"]), jnp.float32)
    edge_attr_in = jax.random.normal(ke, (B, E, cfg["input_edge_dim"]), jnp.float32)
    params = init_params(kp, cfg)

    out = graphormer_forward(params, x_in, edge_attr_in, edge_index_list,
                             path_data, cfg)
    out = jax.block_until_ready(out)
    assert out.shape == (B, N, cfg["output_dim"]), out.shape
    assert bool(jnp.all(jnp.isfinite(out)))
    print("KERNEL_OK")
</pallas_src>

<mosaic_0001>
module attributes {stable_mosaic.version = 11 : i64} {
  func.func @_graphormer_fused_kernel(%arg0: i32, %arg1: i32, %arg2: memref<1x16x8xf32, #tpu.memory_space<vmem>>, %arg3: memref<8x32xf32, #tpu.memory_space<vmem>>, %arg4: memref<1x32xf32, #tpu.memory_space<vmem>>, %arg5: memref<1x16x32xf32, #tpu.memory_space<vmem>>, %arg6: memref<1x4x16x16xf32, #tpu.memory_space<vmem>>, %arg7: memref<1x32x384xf32, #tpu.memory_space<vmem>>, %arg8: memref<1x1x384xf32, #tpu.memory_space<vmem>>, %arg9: memref<1x128x32xf32, #tpu.memory_space<vmem>>, %arg10: memref<1x1x32xf32, #tpu.memory_space<vmem>>, %arg11: memref<1x1x32xf32, #tpu.memory_space<vmem>>, %arg12: memref<1x1x32xf32, #tpu.memory_space<vmem>>, %arg13: memref<1x1x32xf32, #tpu.memory_space<vmem>>, %arg14: memref<1x1x32xf32, #tpu.memory_space<vmem>>, %arg15: memref<1x32x32xf32, #tpu.memory_space<vmem>>, %arg16: memref<1x1x32xf32, #tpu.memory_space<vmem>>, %arg17: memref<32x8xf32, #tpu.memory_space<vmem>>, %arg18: memref<1x8xf32, #tpu.memory_space<vmem>>, %arg19: memref<1x16x8xf32, #tpu.memory_space<vmem>>, %arg20: memref<16x32xf32, #tpu.memory_space<vmem>>) attributes {dimension_semantics = [#tpu.dimension_semantics<parallel>, #tpu.dimension_semantics<arbitrary>], iteration_bounds = array<i64: 2, 2>, scalar_prefetch = 0 : i64, scratch_operands = 1 : i64, tpu.core_type = #tpu.core_type<tc>, window_params = [{transform_indices = @transform_0, window_bounds = array<i64: 1, 16, 8>}, {pipeline_mode = #tpu.pipeline_mode<synchronous>, transform_indices = @transform_1, window_bounds = array<i64: 8, 32>}, {pipeline_mode = #tpu.pipeline_mode<synchronous>, transform_indices = @transform_2, window_bounds = array<i64: 1, 32>}, {transform_indices = @transform_3, window_bounds = array<i64: 1, 16, 32>}, {transform_indices = @transform_4, window_bounds = array<i64: 1, 4, 16, 16>}, {transform_indices = @transform_5, window_bounds = array<i64: 1, 32, 384>}, {transform_indices = @transform_6, window_bounds = array<i64: 1, 1, 384>}, {transform_indices = @transform_7, window_bounds = array<i64: 1, 128, 32>}, {transform_indices = @transform_8, window_bounds = array<i64: 1, 1, 32>}, {transform_indices = @transform_9, window_bounds = array<i64: 1, 1, 32>}, {transform_indices = @transform_10, window_bounds = array<i64: 1, 1, 32>}, {transform_indices = @transform_11, window_bounds = array<i64: 1, 1, 32>}, {transform_indices = @transform_12, window_bounds = array<i64: 1, 1, 32>}, {transform_indices = @transform_13, window_bounds = array<i64: 1, 32, 32>}, {transform_indices = @transform_14, window_bounds = array<i64: 1, 1, 32>}, {pipeline_mode = #tpu.pipeline_mode<synchronous>, transform_indices = @transform_15, window_bounds = array<i64: 32, 8>}, {pipeline_mode = #tpu.pipeline_mode<synchronous>, transform_indices = @transform_16, window_bounds = array<i64: 1, 8>}, {transform_indices = @transform_17, window_bounds = array<i64: 1, 16, 8>}]} {
    %c0_i32 = arith.constant 0 : i32
    %0 = arith.cmpi eq, %arg1, %c0_i32 : i32
    %1 = arith.extui %0 : i1 to i32
    %c0_i32_0 = arith.constant 0 : i32
    %2 = arith.cmpi ne, %1, %c0_i32_0 : i32
    scf.if %2 {
      %c0_55 = arith.constant 0 : index
      %c0_56 = arith.constant 0 : index
      %c0_57 = arith.constant 0 : index
      %105 = vector.load %arg2[%c0_55, %c0_56, %c0_57] : memref<1x16x8xf32, #tpu.memory_space<vmem>>, vector<1x16x8xf32>
      %106 = vector.shape_cast %105 : vector<1x16x8xf32> to vector<16x8xf32>
      %c0_58 = arith.constant 0 : index
      %c0_59 = arith.constant 0 : index
      %107 = vector.load %arg3[%c0_58, %c0_59] : memref<8x32xf32, #tpu.memory_space<vmem>>, vector<8x32xf32>
      %cst_60 = arith.constant dense<0.000000e+00> : vector<16x32xf32>
      %108 = tpu.matmul %106, %107, %cst_60 {dimension_numbers = #tpu.dot_dimension_numbers<[1], [0], [0], [1], [0, 0, 1, 1], [], []>} : vector<16x8xf32>, vector<8x32xf32>, vector<16x32xf32> -> vector<16x32xf32>
      %c0_61 = arith.constant 0 : index
      %c0_62 = arith.constant 0 : index
      %109 = vector.load %arg4[%c0_61, %c0_62] : memref<1x32xf32, #tpu.memory_space<vmem>>, vector<1x32xf32>
      %110 = vector.broadcast %109 : vector<1x32xf32> to vector<16x32xf32>
      %111 = arith.addf %108, %110 : vector<16x32xf32>
      %c0_63 = arith.constant 0 : index
      %c0_64 = arith.constant 0 : index
      %c0_65 = arith.constant 0 : index
      %112 = vector.load %arg5[%c0_63, %c0_64, %c0_65] : memref<1x16x32xf32, #tpu.memory_space<vmem>>, vector<1x16x32xf32>
      %113 = vector.shape_cast %112 : vector<1x16x32xf32> to vector<16x32xf32>
      %114 = arith.addf %111, %113 : vector<16x32xf32>
      %c0_66 = arith.constant 0 : index
      %c0_67 = arith.constant 0 : index
      %115 = vector.load %arg20[%c0_66, %c0_67] : memref<16x32xf32, #tpu.memory_space<vmem>>, vector<16x32xf32>
      tpu.vector_store %arg20[%c0_66, %c0_67], %114 {strides = array<i32>} : memref<16x32xf32, #tpu.memory_space<vmem>>, vector<16x32xf32>,
    } else {
    }
    %c0 = arith.constant 0 : index
    %c0_1 = arith.constant 0 : index
    %3 = vector.load %arg20[%c0, %c0_1] : memref<16x32xf32, #tpu.memory_space<vmem>>, vector<16x32xf32>
    %c0_2 = arith.constant 0 : index
    %c0_3 = arith.constant 0 : index
    %c0_4 = arith.constant 0 : index
    %4 = vector.load %arg11[%c0_2, %c0_3, %c0_4] : memref<1x1x32xf32, #tpu.memory_space<vmem>>, vector<1x1x32xf32>
    %5 = vector.shape_cast %4 : vector<1x1x32xf32> to vector<1x32xf32>
    %c0_5 = arith.constant 0 : index
    %c0_6 = arith.constant 0 : index
    %c0_7 = arith.constant 0 : index
    %6 = vector.load %arg12[%c0_5, %c0_6, %c0_7] : memref<1x1x32xf32, #tpu.memory_space<vmem>>, vector<1x1x32xf32>
    %7 = vector.shape_cast %6 : vector<1x1x32xf32> to vector<1x32xf32>
    %cst = arith.constant dense<0.000000e+00> : vector<16xf32>
    %8 = vector.multi_reduction <add>, %3, %cst [1] : vector<16x32xf32> to vector<16xf32>
    %9 = vector.shape_cast %8 : vector<16xf32> to vector<16x1xf32>
    %cst_8 = arith.constant 3.200000e+01 : f32
    %10 = vector.broadcast %cst_8 : f32 to vector<16x1xf32>
    %11 = arith.divf %9, %10 : vector<16x1xf32>
    %12 = vector.broadcast %11 : vector<16x1xf32> to vector<16x32xf32>
    %13 = arith.subf %3, %12 : vector<16x32xf32>
    %14 = arith.mulf %13, %13 : vector<16x32xf32>
    %cst_9 = arith.constant dense<0.000000e+00> : vector<16xf32>
    %15 = vector.multi_reduction <add>, %14, %cst_9 [1] : vector<16x32xf32> to vector<16xf32>
    %16 = vector.shape_cast %15 : vector<16xf32> to vector<16x1xf32>
    %cst_10 = arith.constant 3.200000e+01 : f32
    %17 = vector.broadcast %cst_10 : f32 to vector<16x1xf32>
    %18 = arith.divf %16, %17 : vector<16x1xf32>
    %cst_11 = arith.constant 9.99999974E-6 : f32
    %19 = vector.broadcast %cst_11 : f32 to vector<16x1xf32>
    %20 = arith.addf %18, %19 : vector<16x1xf32>
    %21 = math.rsqrt %20 : vector<16x1xf32>
    %22 = vector.broadcast %21 : vector<16x1xf32> to vector<16x32xf32>
    %23 = arith.mulf %13, %22 : vector<16x32xf32>
    %24 = vector.broadcast %5 : vector<1x32xf32> to vector<16x32xf32>
    %25 = arith.mulf %23, %24 : vector<16x32xf32>
    %26 = vector.broadcast %7 : vector<1x32xf32> to vector<16x32xf32>
    %27 = arith.addf %25, %26 : vector<16x32xf32>
    %c0_12 = arith.constant 0 : index
    %c0_13 = arith.constant 0 : index
    %c0_14 = arith.constant 0 : index
    %28 = vector.load %arg7[%c0_12, %c0_13, %c0_14] : memref<1x32x384xf32, #tpu.memory_space<vmem>>, vector<1x32x384xf32>
    %29 = vector.shape_cast %28 : vector<1x32x384xf32> to vector<32x384xf32>
    %cst_15 = arith.constant dense<0.000000e+00> : vector<16x384xf32>
    %30 = tpu.matmul %27, %29, %cst_15 {dimension_numbers = #tpu.dot_dimension_numbers<[1], [0], [0], [1], [0, 0, 1, 1], [], []>} : vector<16x32xf32>, vector<32x384xf32>, vector<16x384xf32> -> vector<16x384xf32>
    %c0_16 = arith.constant 0 : index
    %c0_17 = arith.constant 0 : index
    %c0_18 = arith.constant 0 : index
    %31 = vector.load %arg8[%c0_16, %c0_17, %c0_18] : memref<1x1x384xf32, #tpu.memory_space<vmem>>, vector<1x1x384xf32>
    %32 = vector.shape_cast %31 : vector<1x1x384xf32> to vector<1x384xf32>
    %33 = vector.broadcast %32 : vector<1x384xf32> to vector<16x384xf32>
    %34 = arith.addf %30, %33 : vector<16x384xf32>
    %35 = vector.extract_strided_slice %34 {offsets = [0, 0], sizes = [16, 128], strides = [1, 1]} : vector<16x384xf32> to vector<16x128xf32>
    %36 = vector.shape_cast %35 : vector<16x128xf32> to vector<16x4x32xf32>
    %37 = tpu.transpose %36, [1, 0, 2] : vector<16x4x32xf32> -> vector<4x16x32xf32>
    %38 = vector.extract_strided_slice %34 {offsets = [0, 128], sizes = [16, 128], strides = [1, 1]} : vector<16x384xf32> to vector<16x128xf32>
    %39 = vector.shape_cast %38 : vector<16x128xf32> to vector<16x4x32xf32>
    %40 = tpu.transpose %39, [1, 0, 2] : vector<16x4x32xf32> -> vector<4x16x32xf32>
    %41 = vector.extract_strided_slice %34 {offsets = [0, 256], sizes = [16, 128], strides = [1, 1]} : vector<16x384xf32> to vector<16x128xf32>
    %42 = vector.shape_cast %41 : vector<16x128xf32> to vector<16x4x32xf32>
    %43 = tpu.transpose %42, [1, 0, 2] : vector<16x4x32xf32> -> vector<4x16x32xf32>
    "tpu.trace_start"() <{level = 10 : i32, message = "hnd,hmd->hnm"}> : () -> ()
    %cst_19 = arith.constant dense<0.000000e+00> : vector<4x16x16xf32>
    %44 = tpu.matmul %37, %40, %cst_19 {dimension_numbers = #tpu.dot_dimension_numbers<[2], [2], [1], [1], [0, 0, 0, 1, 1, 1], [0], [0]>} : vector<4x16x32xf32>, vector<4x16x32xf32>, vector<4x16x16xf32> -> vector<4x16x16xf32>
    "tpu.trace_stop"() : () -> ()
    %c0_20 = arith.constant 0 : index
    %c0_21 = arith.constant 0 : index
    %c0_22 = arith.constant 0 : index
    %c0_23 = arith.constant 0 : index
    %45 = vector.load %arg6[%c0_20, %c0_21, %c0_22, %c0_23] : memref<1x4x16x16xf32, #tpu.memory_space<vmem>>, vector<1x4x16x16xf32>
    %46 = vector.shape_cast %45 : vector<1x4x16x16xf32> to vector<4x16x16xf32>
    %47 = arith.addf %44, %46 : vector<4x16x16xf32>
    %cst_24 = arith.constant dense<0xFF800000> : vector<4x16xf32>
    %48 = vector.multi_reduction <maximumf>, %47, %cst_24 [2] : vector<4x16x16xf32> to vector<4x16xf32>
    %49 = vector.shape_cast %48 : vector<4x16xf32> to vector<4x16x1xf32>
    %50 = vector.broadcast %49 : vector<4x16x1xf32> to vector<4x16x16xf32>
    %51 = arith.subf %47, %50 : vector<4x16x16xf32>
    %52 = math.exp %51 : vector<4x16x16xf32>
    %cst_25 = arith.constant dense<0.000000e+00> : vector<4x16xf32>
    %53 = vector.multi_reduction <add>, %52, %cst_25 [2] : vector<4x16x16xf32> to vector<4x16xf32>
    %54 = vector.shape_cast %53 : vector<4x16xf32> to vector<4x16x1xf32>
    %55 = tpu.reciprocal %54 {approx = true} : vector<4x16x1xf32> -> vector<4x16x1xf32>
    %56 = vector.broadcast %55 : vector<4x16x1xf32> to vector<4x16x16xf32>
    %57 = arith.mulf %52, %56 : vector<4x16x16xf32>
    "tpu.trace_start"() <{level = 10 : i32, message = "hnm,hmd->hnd"}> : () -> ()
    %cst_26 = arith.constant dense<0.000000e+00> : vector<4x16x32xf32>
    %58 = tpu.matmul %57, %43, %cst_26 {dimension_numbers = #tpu.dot_dimension_numbers<[2], [1], [1], [2], [0, 0, 0, 1, 1, 2], [0], [0]>} : vector<4x16x16xf32>, vector<4x16x32xf32>, vector<4x16x32xf32> -> vector<4x16x32xf32>
    "tpu.trace_stop"() : () -> ()
    %59 = tpu.transpose %58, [1, 0, 2] : vector<4x16x32xf32> -> vector<16x4x32xf32>
    %60 = vector.shape_cast %59 : vector<16x4x32xf32> to vector<16x128xf32>
    %c0_27 = arith.constant 0 : index
    %c0_28 = arith.constant 0 : index
    %c0_29 = arith.constant 0 : index
    %61 = vector.load %arg9[%c0_27, %c0_28, %c0_29] : memref<1x128x32xf32, #tpu.memory_space<vmem>>, vector<1x128x32xf32>
    %62 = vector.shape_cast %61 : vector<1x128x32xf32> to vector<128x32xf32>
    %cst_30 = arith.constant dense<0.000000e+00> : vector<16x32xf32>
    %63 = tpu.matmul %60, %62, %cst_30 {dimension_numbers = #tpu.dot_dimension_numbers<[1], [0], [0], [1], [0, 0, 1, 1], [], []>} : vector<16x128xf32>, vector<128x32xf32>, vector<16x32xf32> -> vector<16x32xf32>
    %c0_31 = arith.constant 0 : index
    %c0_32 = arith.constant 0 : index
    %c0_33 = arith.constant 0 : index
    %64 = vector.load %arg10[%c0_31, %c0_32, %c0_33] : memref<1x1x32xf32, #tpu.memory_space<vmem>>, vector<1x1x32xf32>
    %65 = vector.shape_cast %64 : vector<1x1x32xf32> to vector<1x32xf32>
    %66 = vector.broadcast %65 : vector<1x32xf32> to vector<16x32xf32>
    %67 = arith.addf %63, %66 : vector<16x32xf32>
    %68 = arith.addf %67, %3 : vector<16x32xf32>
    %c0_34 = arith.constant 0 : index
    %c0_35 = arith.constant 0 : index
    %c0_36 = arith.constant 0 : index
    %69 = vector.load %arg13[%c0_34, %c0_35, %c0_36] : memref<1x1x32xf32, #tpu.memory_space<vmem>>, vector<1x1x32xf32>
    %70 = vector.shape_cast %69 : vector<1x1x32xf32> to vector<1x32xf32>
    %c0_37 = arith.constant 0 : index
    %c0_38 = arith.constant 0 : index
    %c0_39 = arith.constant 0 : index
    %71 = vector.load %arg14[%c0_37, %c0_38, %c0_39] : memref<1x1x32xf32, #tpu.memory_space<vmem>>, vector<1x1x32xf32>
    %72 = vector.shape_cast %71 : vector<1x1x32xf32> to vector<1x32xf32>
    %cst_40 = arith.constant dense<0.000000e+00> : vector<16xf32>
    %73 = vector.multi_reduction <add>, %68, %cst_40 [1] : vector<16x32xf32> to vector<16xf32>
    %74 = vector.shape_cast %73 : vector<16xf32> to vector<16x1xf32>
    %cst_41 = arith.constant 3.200000e+01 : f32
    %75 = vector.broadcast %cst_41 : f32 to vector<16x1xf32>
    %76 = arith.divf %74, %75 : vector<16x1xf32>
    %77 = vector.broadcast %76 : vector<16x1xf32> to vector<16x32xf32>
    %78 = arith.subf %68, %77 : vector<16x32xf32>
    %79 = arith.mulf %78, %78 : vector<16x32xf32>
    %cst_42 = arith.constant dense<0.000000e+00> : vector<16xf32>
    %80 = vector.multi_reduction <add>, %79, %cst_42 [1] : vector<16x32xf32> to vector<16xf32>
    %81 = vector.shape_cast %80 : vector<16xf32> to vector<16x1xf32>
    %cst_43 = arith.constant 3.200000e+01 : f32
    %82 = vector.broadcast %cst_43 : f32 to vector<16x1xf32>
    %83 = arith.divf %81, %82 : vector<16x1xf32>
    %cst_44 = arith.constant 9.99999974E-6 : f32
    %84 = vector.broadcast %cst_44 : f32 to vector<16x1xf32>
    %85 = arith.addf %83, %84 : vector<16x1xf32>
    %86 = math.rsqrt %85 : vector<16x1xf32>
    %87 = vector.broadcast %86 : vector<16x1xf32> to vector<16x32xf32>
    %88 = arith.mulf %78, %87 : vector<16x32xf32>
    %89 = vector.broadcast %70 : vector<1x32xf32> to vector<16x32xf32>
    %90 = arith.mulf %88, %89 : vector<16x32xf32>
    %91 = vector.broadcast %72 : vector<1x32xf32> to vector<16x32xf32>
    %92 = arith.addf %90, %91 : vector<16x32xf32>
    %c0_45 = arith.constant 0 : index
    %c0_46 = arith.constant 0 : index
    %c0_47 = arith.constant 0 : index
    %93 = vector.load %arg15[%c0_45, %c0_46, %c0_47] : memref<1x32x32xf32, #tpu.memory_space<vmem>>, vector<1x32x32xf32>
    %94 = vector.shape_cast %93 : vector<1x32x32xf32> to vector<32x32xf32>
    %cst_48 = arith.constant dense<0.000000e+00> : vector<16x32xf32>
    %95 = tpu.matmul %92, %94, %cst_48 {dimension_numbers = #tpu.dot_dimension_numbers<[1], [0], [0], [1], [0, 0, 1, 1], [], []>} : vector<16x32xf32>, vector<32x32xf32>, vector<16x32xf32> -> vector<16x32xf32>
    %c0_49 = arith.constant 0 : index
    %c0_50 = arith.constant 0 : index
    %c0_51 = arith.constant 0 : index
    %96 = vector.load %arg16[%c0_49, %c0_50, %c0_51] : memref<1x1x32xf32, #tpu.memory_space<vmem>>, vector<1x1x32xf32>
    %97 = vector.shape_cast %96 : vector<1x1x32xf32> to vector<1x32xf32>
    %98 = vector.broadcast %97 : vector<1x32xf32> to vector<16x32xf32>
    %99 = arith.addf %95, %98 : vector<16x32xf32>
    %100 = arith.addf %99, %68 : vector<16x32xf32>
    %c0_52 = arith.constant 0 : index
    %c0_53 = arith.constant 0 : index
    %101 = vector.load %arg20[%c0_52, %c0_53] : memref<16x32xf32, #tpu.memory_space<vmem>>, vector<16x32xf32>
    tpu.vector_store %arg20[%c0_52, %c0_53], %100 {strides = array<i32>} : memref<16x32xf32, #tpu.memory_space<vmem>>, vector<16x32xf32>,
    %c1_i32 = arith.constant 1 : i32
    %102 = arith.cmpi eq, %arg1, %c1_i32 : i32
    %103 = arith.extui %102 : i1 to i32
    %c0_i32_54 = arith.constant 0 : i32
    %104 = arith.cmpi ne, %103, %c0_i32_54 : i32
    scf.if %104 {
      %c0_55 = arith.constant 0 : index
      %c0_56 = arith.constant 0 : index
      %105 = vector.load %arg17[%c0_55, %c0_56] : memref<32x8xf32, #tpu.memory_space<vmem>>, vector<32x8xf32>
      %cst_57 = arith.constant dense<0.000000e+00> : vector<16x8xf32>
      %106 = tpu.matmul %100, %105, %cst_57 {dimension_numbers = #tpu.dot_dimension_numbers<[1], [0], [0], [1], [0, 0, 1, 1], [], []>} : vector<16x32xf32>, vector<32x8xf32>, vector<16x8xf32> -> vector<16x8xf32>
      %c0_58 = arith.constant 0 : index
      %c0_59 = arith.constant 0 : index
      %107 = vector.load %arg18[%c0_58, %c0_59] : memref<1x8xf32, #tpu.memory_space<vmem>>, vector<1x8xf32>
      %108 = vector.broadcast %107 : vector<1x8xf32> to vector<16x8xf32>
      %109 = arith.addf %106, %108 : vector<16x8xf32>
      %c0_60 = arith.constant 0 : index
      %c0_61 = arith.constant 0 : index
      %c0_62 = arith.constant 0 : index
      %110 = vector.load %arg19[%c0_60, %c0_61, %c0_62] : memref<1x16x8xf32, #tpu.memory_space<vmem>>, vector<1x16x8xf32>
      %111 = vector.shape_cast %110 : vector<1x16x8xf32> to vector<16x8xf32>
      %112 = vector.shape_cast %109 : vector<16x8xf32> to vector<1x16x8xf32>
      tpu.vector_store %arg19[%c0_60, %c0_61, %c0_62], %112 {strides = array<i32>} : memref<1x16x8xf32, #tpu.memory_space<vmem>>, vector<1x16x8xf32>,
    } else {
    }
    return
  }
  func.func @transform_0(%arg0: i32, %arg1: i32) -> (i32, i32, i32) {
    %c0_i32 = arith.constant 0 : i32
    %c0_i32_0 = arith.constant 0 : i32
    %c0_i32_1 = arith.constant 0 : i32
    return %arg0, %c0_i32, %c0_i32_0 : i32, i32, i32
  }
  func.func @transform_1(%arg0: i32, %arg1: i32) -> (i32, i32) {
    %c0_i32 = arith.constant 0 : i32
    %c0_i32_0 = arith.constant 0 : i32
    %c0_i32_1 = arith.constant 0 : i32
    return %c0_i32, %c0_i32_0 : i32, i32
  }
  func.func @transform_2(%arg0: i32, %arg1: i32) -> (i32, i32) {
    %c0_i32 = arith.constant 0 : i32
    %c0_i32_0 = arith.constant 0 : i32
    %c0_i32_1 = arith.constant 0 : i32
    return %c0_i32, %c0_i32_0 : i32, i32
  }
  func.func @transform_3(%arg0: i32, %arg1: i32) -> (i32, i32, i32) {
    %c0_i32 = arith.constant 0 : i32
    %c0_i32_0 = arith.constant 0 : i32
    %c0_i32_1 = arith.constant 0 : i32
    return %arg0, %c0_i32, %c0_i32_0 : i32, i32, i32
  }
  func.func @transform_4(%arg0: i32, %arg1: i32) -> (i32, i32, i32, i32) {
    %c2_i32 = arith.constant 2 : i32
    %0 = arith.muli %arg0, %c2_i32 : i32
    %1 = arith.addi %0, %arg1 : i32
    %c0_i32 = arith.constant 0 : i32
    %c0_i32_0 = arith.constant 0 : i32
    %c0_i32_1 = arith.constant 0 : i32
    %c0_i32_2 = arith.constant 0 : i32
    return %1, %c0_i32, %c0_i32_0, %c0_i32_1 : i32, i32, i32, i32
  }
  func.func @transform_5(%arg0: i32, %arg1: i32) -> (i32, i32, i32) {
    %c0_i32 = arith.constant 0 : i32
    %c0_i32_0 = arith.constant 0 : i32
    %c0_i32_1 = arith.constant 0 : i32
    return %arg1, %c0_i32, %c0_i32_0 : i32, i32, i32
  }
  func.func @transform_6(%arg0: i32, %arg1: i32) -> (i32, i32, i32) {
    %c0_i32 = arith.constant 0 : i32
    %c0_i32_0 = arith.constant 0 : i32
    %c0_i32_1 = arith.constant 0 : i32
    return %arg1, %c0_i32, %c0_i32_0 : i32, i32, i32
  }
  func.func @transform_7(%arg0: i32, %arg1: i32) -> (i32, i32, i32) {
    %c0_i32 = arith.constant 0 : i32
    %c0_i32_0 = arith.constant 0 : i32
    %c0_i32_1 = arith.constant 0 : i32
    return %arg1, %c0_i32, %c0_i32_0 : i32, i32, i32
  }
  func.func @transform_8(%arg0: i32, %arg1: i32) -> (i32, i32, i32) {
    %c0_i32 = arith.constant 0 : i32
    %c0_i32_0 = arith.constant 0 : i32
    %c0_i32_1 = arith.constant 0 : i32
    return %arg1, %c0_i32, %c0_i32_0 : i32, i32, i32
  }
  func.func @transform_9(%arg0: i32, %arg1: i32) -> (i32, i32, i32) {
    %c0_i32 = arith.constant 0 : i32
    %c0_i32_0 = arith.constant 0 : i32
    %c0_i32_1 = arith.constant 0 : i32
    return %arg1, %c0_i32, %c0_i32_0 : i32, i32, i32
  }
  func.func @transform_10(%arg0: i32, %arg1: i32) -> (i32, i32, i32) {
    %c0_i32 = arith.constant 0 : i32
    %c0_i32_0 = arith.constant 0 : i32
    %c0_i32_1 = arith.constant 0 : i32
    return %arg1, %c0_i32, %c0_i32_0 : i32, i32, i32
  }
  func.func @transform_11(%arg0: i32, %arg1: i32) -> (i32, i32, i32) {
    %c0_i32 = arith.constant 0 : i32
    %c0_i32_0 = arith.constant 0 : i32
    %c0_i32_1 = arith.constant 0 : i32
    return %arg1, %c0_i32, %c0_i32_0 : i32, i32, i32
  }
  func.func @transform_12(%arg0: i32, %arg1: i32) -> (i32, i32, i32) {
    %c0_i32 = arith.constant 0 : i32
    %c0_i32_0 = arith.constant 0 : i32
    %c0_i32_1 = arith.constant 0 : i32
    return %arg1, %c0_i32, %c0_i32_0 : i32, i32, i32
  }
  func.func @transform_13(%arg0: i32, %arg1: i32) -> (i32, i32, i32) {
    %c0_i32 = arith.constant 0 : i32
    %c0_i32_0 = arith.constant 0 : i32
    %c0_i32_1 = arith.constant 0 : i32
    return %arg1, %c0_i32, %c0_i32_0 : i32, i32, i32
  }
  func.func @transform_14(%arg0: i32, %arg1: i32) -> (i32, i32, i32) {
    %c0_i32 = arith.constant 0 : i32
    %c0_i32_0 = arith.constant 0 : i32
    %c0_i32_1 = arith.constant 0 : i32
    return %arg1, %c0_i32, %c0_i32_0 : i32, i32, i32
  }
  func.func @transform_15(%arg0: i32, %arg1: i32) -> (i32, i32) {
    %c0_i32 = arith.constant 0 : i32
    %c0_i32_0 = arith.constant 0 : i32
    %c0_i32_1 = arith.constant 0 : i32
    return %c0_i32, %c0_i32_0 : i32, i32
  }
  func.func @transform_16(%arg0: i32, %arg1: i32) -> (i32, i32) {
    %c0_i32 = arith.constant 0 : i32
    %c0_i32_0 = arith.constant 0 : i32
    %c0_i32_1 = arith.constant 0 : i32
    return %c0_i32, %c0_i32_0 : i32, i32
  }
  func.func @transform_17(%arg0: i32, %arg1: i32) -> (i32, i32, i32) {
    %c0_i32 = arith.constant 0 : i32
    %c0_i32_0 = arith.constant 0 : i32
    %c0_i32_1 = arith.constant 0 : i32
    return %arg0, %c0_i32, %c0_i32_0 : i32, i32, i32
  }
}

</mosaic_0001>

<llo_original>
// kernel: tpu_custom_call.1
$region0: #{tpu_custom_call.1}
  #allocation0 [shape = 'u32[]', space=smem, size = 0x4, offset = 0x4, fixed_abs, tag = 'smem constant byte address 0x4 - core index']
  #allocation1 [shape = 'u32[144,128]{1,0:T(1,128)}', space=vmem, size = 0x12000, scoped, tag = 'internal scratch']
  #allocation2 [shape = 'f32[16,32]{1,0:T(8,128)}', space=vmem, size = 0x2000, scoped, tag = 'scratch operand']
  %s0 = inlined_call_operand.vmem [shape: f32[2,16,8], index: 0, kind: input, shape index: {}]
  %s1 = inlined_call_operand.vmem [shape: f32[8,32], index: 1, kind: input, shape index: {}]
  %s2 = inlined_call_operand.hbm [shape: f32[1,32], index: 2, kind: input, shape index: {}]
  %s3 = inlined_call_operand.vmem [shape: f32[2,16,32], index: 3, kind: input, shape index: {}]
  %s4 = inlined_call_operand.vmem [shape: f32[4,4,16,16], index: 4, kind: input, shape index: {}]
  %s5 = inlined_call_operand.hbm [shape: f32[2,32,384], index: 5, kind: input, shape index: {}]
  %s6 = inlined_call_operand.hbm [shape: f32[2,1,384], index: 6, kind: input, shape index: {}]
  %s7 = inlined_call_operand.vmem [shape: f32[2,128,32], index: 7, kind: input, shape index: {}]
  %s8 = inlined_call_operand.vmem [shape: f32[2,1,32], index: 8, kind: input, shape index: {}]
  %s9 = inlined_call_operand.vmem [shape: f32[2,1,32], index: 9, kind: input, shape index: {}]
  %s10 = inlined_call_operand.vmem [shape: f32[2,1,32], index: 10, kind: input, shape index: {}]
  %s11 = inlined_call_operand.vmem [shape: f32[2,1,32], index: 11, kind: input, shape index: {}]
  %s12 = inlined_call_operand.vmem [shape: f32[2,1,32], index: 12, kind: input, shape index: {}]
  %s13 = inlined_call_operand.vmem [shape: f32[2,32,32], index: 13, kind: input, shape index: {}]
  %s14 = inlined_call_operand.vmem [shape: f32[2,1,32], index: 14, kind: input, shape index: {}]
  %s15 = inlined_call_operand.vmem [shape: f32[32,8], index: 15, kind: input, shape index: {}]
  %s16 = inlined_call_operand.vmem [shape: f32[1,8], index: 16, kind: input, shape index: {}]
  %s17 = inlined_call_operand.vmem [shape: f32[2,16,8], index: 17, kind: output, shape index: {}]
  %s18 = sld [smem:[#allocation0]]
  $region121: #{tpu_custom_call.1} parent=0
    _
  %s20 = ssub.s32 1, %s18
  %s21 = scalar_select 0, %s20, %s18
  $region1: #{tpu_custom_call.1} parent=0
    #allocation3 [shape = 'u8[512]{0}', space=vmem, size = 0x400, scoped, tag = 'input window, operand 2, single buffered']
    #allocation4 [shape = 's32[2]{0}', space=sflag, size = 0x8, scoped, tag = 'scoped memory for tpu_custom_call.1']
    #allocation5 [shape = 'u8[98304]{0}', space=vmem, size = 0x18000, scoped, tag = 'input window, operand 5']
    #allocation6 [shape = 's32[2]{0}', space=sflag, size = 0x8, scoped, tag = 'scoped memory for tpu_custom_call.1']
    #allocation7 [shape = 'u8[3072]{0}', space=vmem, size = 0xc00, scoped, tag = 'input window, operand 6']
    %22 = vsyncpa [#allocation4], 0
    %23 = vsyncpa [#allocation6], 0
    %s24 = scalar_lea.sflag [#allocation6], 1
    %25 = vsyncpa %s24, 0
    loop: start=0, step=1, limit=6
    $region2: #{tpu_custom_call.1} parent=1 // loop_pre_header
      _
    $region3: #{tpu_custom_call.1} parent=1 // loop_header
      %s27 = sphi 0, %s31
      %p28 = scmp.ge.s32.totalorder %s27, 6
      %s34 = sphi 0, %s46
      %s35 = sphi 0, %s42
      %s36 = sphi 0, %s34
      %s37 = sphi 0, %s35
      %s38 = sphi 0, %s36
      %s39 = sphi 0, %s37
      %s49 = sphi 0, %s51
      %s52 = sphi 0, %s49
      %s53 = sphi 0, %s52
      %s69 = sphi 0, %s53
      %s73 = sphi 0, %s73
      %s75 = sphi 0, %s73
      %s76 = sphi 0, %s75
      %s90 = sphi 0, %s76
      %s94 = sphi 0, %s94
      %s96 = sphi 0, %s94
      %s97 = sphi 0, %s96
      %s111 = sphi 0, %s97
      %s117 = sphi 0, %s119
      %s120 = sphi 0, %s117
      %s121 = sphi 0, %s120
      %s137 = sphi 0, %s121
      %s147 = sphi 0, %s149
      %s150 = sphi 0, %s147
      %s151 = sphi 0, %s150
      %s167 = sphi 0, %s151
      %s173 = sphi 0, %s175
      %s176 = sphi 0, %s173
      %s177 = sphi 0, %s176
      %s193 = sphi 0, %s177
      %s199 = sphi 0, %s201
      %s202 = sphi 0, %s199
      %s203 = sphi 0, %s202
      %s219 = sphi 0, %s203
      %s225 = sphi 0, %s227
      %s228 = sphi 0, %s225
      %s229 = sphi 0, %s228
      %s245 = sphi 0, %s229
      %s251 = sphi 0, %s253
      %s254 = sphi 0, %s251
      %s255 = sphi 0, %s254
      %s271 = sphi 0, %s255
      %s277 = sphi 0, %s279
      %s280 = sphi 0, %s277
      %s281 = sphi 0, %s280
      %s297 = sphi 0, %s281
      %s303 = sphi 0, %s305
      %s306 = sphi 0, %s303
      %s307 = sphi 0, %s306
      %s323 = sphi 0, %s307
      %s329 = sphi 0, %s331
      %s332 = sphi 0, %s329
      %s333 = sphi 0, %s332
      %s349 = sphi 0, %s333
      %s355 = sphi 0, %s357
      %s358 = sphi 0, %s355
      %s359 = sphi 0, %s358
      %s375 = sphi 0, %s359
      %s381 = sphi 0, %s383
      %s384 = sphi 0, %s381
      %s385 = sphi 0, %s384
      %s401 = sphi 0, %s385
      %s407 = sphi 0, %s409
      %s410 = sphi 0, %s407
      %s411 = sphi 0, %s410
      %s427 = sphi 0, %s411
      %s431 = sphi 0, %s431
      %s433 = sphi 0, %s431
      %s434 = sphi 0, %s433
      %s448 = sphi 0, %s434
      %s452 = sphi 0, %s452
      %s454 = sphi 0, %s452
      %s455 = sphi 0, %s454
      %s469 = sphi 0, %s455
      %s475 = sphi 0, %s477
      %s478 = sphi 0, %s475
      %s479 = sphi 0, %s478
      %s495 = sphi 0, %s479
    $region4: #{tpu_custom_call.1} parent=1 // loop_header_branch
      %30 = sbr.rel (%p28) target = $region8
    $region5: #{tpu_custom_call.1} parent=1 // loop_body
      %s32 = ssub.s32 %s27, 1
      %s33 = ssub.s32 %s27, 2
      %s40 = sadd.s32 1, %s35
      %p41 = scmp.ge.s32.totalorder %s40, 2
      %s42 = scalar_select %p41, 0, %s40
      %s43 = sadd.s32 1, %s34
      %s44 = scalar_select %p41, %s43, %s34
      %p45 = scmp.ge.s32.totalorder %s44, 2
      %s46 = scalar_select %p45, 0, %s44
      %s47 = ssub.s32 %s34, %s46
      %p48 = scmp.eq.s32.totalorder %s47, 0
      %s50 = sadd.s32 %s49, 1
      %s51 = scalar_select %p48, %s49, %s50
      %p54 = pneg %p48
      %p55 = scmp.eq.s32.totalorder %s27, 3
      %p56 = por %p54, %p55
      %p57 = scmp.ne.s32.totalorder %s49, %s52
      %p58 = scmp.eq.s32.totalorder %s27, 0
      %p59 = por %p57, %p58
      %p60 = scmp.ne.s32.totalorder %s49, %s52
      %p61 = scmp.eq.s32.totalorder %s32, 3
      %p62 = por %p60, %p61
      %p63 = scmp.ne.s32.totalorder %s52, %s53
      %p64 = scmp.eq.s32.totalorder %s32, 0
      %p65 = por %p63, %p64
      %p66 = scmp.ne.s32.totalorder %s52, %s53
      %p67 = scmp.eq.s32.totalorder %s33, 3
      %p68 = por %p66, %p67
      %p70 = scmp.ne.s32.totalorder %s53, %s69
      %p71 = scmp.eq.s32.totalorder %s33, 0
      %p72 = por %p70, %p71
      %s74 = sadd.s32 %s73, 1
      %p77 = scmp.eq.s32.totalorder %s27, 3
      %p78 = scmp.ne.s32.totalorder %s73, %s75
      %p79 = scmp.eq.s32.totalorder %s27, 0
      %p80 = por %p78, %p79
      %p81 = scmp.ne.s32.totalorder %s73, %s75
      %p82 = scmp.eq.s32.totalorder %s32, 3
      %p83 = por %p81, %p82
      %p84 = scmp.ne.s32.totalorder %s75, %s76
      %p85 = scmp.eq.s32.totalorder %s32, 0
      %p86 = por %p84, %p85
      %p87 = scmp.ne.s32.totalorder %s75, %s76
      %p88 = scmp.eq.s32.totalorder %s33, 3
      %p89 = por %p87, %p88
      %p91 = scmp.ne.s32.totalorder %s76, %s90
      %p92 = scmp.eq.s32.totalorder %s33, 0
      %p93 = por %p91, %p92
      %s95 = sadd.s32 %s94, 1
      %p98 = scmp.eq.s32.totalorder %s27, 3
      %p99 = scmp.ne.s32.totalorder %s94, %s96
      %p100 = scmp.eq.s32.totalorder %s27, 0
      %p101 = por %p99, %p100
      %p102 = scmp.ne.s32.totalorder %s94, %s96
      %p103 = scmp.eq.s32.totalorder %s32, 3
      %p104 = por %p102, %p103
      %p105 = scmp.ne.s32.totalorder %s96, %s97
      %p106 = scmp.eq.s32.totalorder %s32, 0
      %p107 = por %p105, %p106
      %p108 = scmp.ne.s32.totalorder %s96, %s97
      %p109 = scmp.eq.s32.totalorder %s33, 3
      %p110 = por %p108, %p109
      %p112 = scmp.ne.s32.totalorder %s97, %s111
      %p113 = scmp.eq.s32.totalorder %s33, 0
      %p114 = por %p112, %p113
      %s115 = ssub.s32 %s34, %s46
      %p116 = scmp.eq.s32.totalorder %s115, 0
      %s118 = sadd.s32 %s117, 1
      %s119 = scalar_select %p116, %s117, %s118
      %p122 = pneg %p116
      %p123 = scmp.eq.s32.totalorder %s27, 3
      %p124 = por %p122, %p123
      %p125 = scmp.ne.s32.totalorder %s117, %s120
      %p126 = scmp.eq.s32.totalorder %s27, 0
      %p127 = por %p125, %p126
      %p128 = scmp.ne.s32.totalorder %s117, %s120
      %p129 = scmp.eq.s32.totalorder %s32, 3
      %p130 = por %p128, %p129
      %p131 = scmp.ne.s32.totalorder %s120, %s121
      %p132 = scmp.eq.s32.totalorder %s32, 0
      %p133 = por %p131, %p132
      %p134 = scmp.ne.s32.totalorder %s120, %s121
      %p135 = scmp.eq.s32.totalorder %s33, 3
      %p136 = por %p134, %p135
      %p138 = scmp.ne.s32.totalorder %s121, %s137
      %p139 = scmp.eq.s32.totalorder %s33, 0
      %p140 = por %p138, %p139
      %s141 = smul.u32 %s34, 2
      %s142 = sadd.s32 %s141, %s35
      %s143 = smul.u32 %s46, 2
      %s144 = sadd.s32 %s143, %s42
      %s145 = ssub.s32 %s142, %s144
      %p146 = scmp.eq.s32.totalorder %s145, 0
      %s148 = sadd.s32 %s147, 1
      %s149 = scalar_select %p146, %s147, %s148
      %p152 = pneg %p146
      %p153 = scmp.eq.s32.totalorder %s27, 3
      %p154 = por %p152, %p153
      %p155 = scmp.ne.s32.totalorder %s147, %s150
      %p156 = scmp.eq.s32.totalorder %s27, 0
      %p157 = por %p155, %p156
      %p158 = scmp.ne.s32.totalorder %s147, %s150
      %p159 = scmp.eq.s32.totalorder %s32, 3
      %p160 = por %p158, %p159
      %p161 = scmp.ne.s32.totalorder %s150, %s151
      %p162 = scmp.eq.s32.totalorder %s32, 0
      %p163 = por %p161, %p162
      %p164 = scmp.ne.s32.totalorder %s150, %s151
      %p165 = scmp.eq.s32.totalorder %s33, 3
      %p166 = por %p164, %p165
      %p168 = scmp.ne.s32.totalorder %s151, %s167
      %p169 = scmp.eq.s32.totalorder %s33, 0
      %p170 = por %p168, %p169
      %s171 = ssub.s32 %s35, %s42
      %p172 = scmp.eq.s32.totalorder %s171, 0
      %s174 = sadd.s32 %s173, 1
      %s175 = scalar_select %p172, %s173, %s174
      %p178 = pneg %p172
      %p179 = scmp.eq.s32.totalorder %s27, 3
      %p180 = por %p178, %p179
      %p181 = scmp.ne.s32.totalorder %s173, %s176
      %p182 = scmp.eq.s32.totalorder %s27, 0
      %p183 = por %p181, %p182
      %p184 = scmp.ne.s32.totalorder %s173, %s176
      %p185 = scmp.eq.s32.totalorder %s32, 3
      %p186 = por %p184, %p185
      %p187 = scmp.ne.s32.totalorder %s176, %s177
      %p188 = scmp.eq.s32.totalorder %s32, 0
      %p189 = por %p187, %p188
      %p190 = scmp.ne.s32.totalorder %s176, %s177
      %p191 = scmp.eq.s32.totalorder %s33, 3
      %p192 = por %p190, %p191
      %p194 = scmp.ne.s32.totalorder %s177, %s193
      %p195 = scmp.eq.s32.totalorder %s33, 0
      %p196 = por %p194, %p195
      %s197 = ssub.s32 %s35, %s42
      %p198 = scmp.eq.s32.totalorder %s197, 0
      %s200 = sadd.s32 %s199, 1
      %s201 = scalar_select %p198, %s199, %s200
      %p204 = pneg %p198
      %p205 = scmp.eq.s32.totalorder %s27, 3
      %p206 = por %p204, %p205
      %p207 = scmp.ne.s32.totalorder %s199, %s202
      %p208 = scmp.eq.s32.totalorder %s27, 0
      %p209 = por %p207, %p208
      %p210 = scmp.ne.s32.totalorder %s199, %s202
      %p211 = scmp.eq.s32.totalorder %s32, 3
      %p212 = por %p210, %p211
      %p213 = scmp.ne.s32.totalorder %s202, %s203
      %p214 = scmp.eq.s32.totalorder %s32, 0
      %p215 = por %p213, %p214
      %p216 = scmp.ne.s32.totalorder %s202, %s203
      %p217 = scmp.eq.s32.totalorder %s33, 3
      %p218 = por %p216, %p217
      %p220 = scmp.ne.s32.totalorder %s203, %s219
      %p221 = scmp.eq.s32.totalorder %s33, 0
      %p222 = por %p220, %p221
      %s223 = ssub.s32 %s35, %s42
      %p224 = scmp.eq.s32.totalorder %s223, 0
      %s226 = sadd.s32 %s225, 1
      %s227 = scalar_select %p224, %s225, %s226
      %p230 = pneg %p224
      %p231 = scmp.eq.s32.totalorder %s27, 3
      %p232 = por %p230, %p231
      %p233 = scmp.ne.s32.totalorder %s225, %s228
      %p234 = scmp.eq.s32.totalorder %s27, 0
      %p235 = por %p233, %p234
      %p236 = scmp.ne.s32.totalorder %s225, %s228
      %p237 = scmp.eq.s32.totalorder %s32, 3
      %p238 = por %p236, %p237
      %p239 = scmp.ne.s32.totalorder %s228, %s229
      %p240 = scmp.eq.s32.totalorder %s32, 0
      %p241 = por %p239, %p240
      %p242 = scmp.ne.s32.totalorder %s228, %s229
      %p243 = scmp.eq.s32.totalorder %s33, 3
      %p244 = por %p242, %p243
      %p246 = scmp.ne.s32.totalorder %s229, %s245
      %p247 = scmp.eq.s32.totalorder %s33, 0
      %p248 = por %p246, %p247
      %s249 = ssub.s32 %s35, %s42
      %p250 = scmp.eq.s32.totalorder %s249, 0
      %s252 = sadd.s32 %s251, 1
      %s253 = scalar_select %p250, %s251, %s252
      %p256 = pneg %p250
      %p257 = scmp.eq.s32.totalorder %s27, 3
      %p258 = por %p256, %p257
      %p259 = scmp.ne.s32.totalorder %s251, %s254
      %p260 = scmp.eq.s32.totalorder %s27, 0
      %p261 = por %p259, %p260
      %p262 = scmp.ne.s32.totalorder %s251, %s254
      %p263 = scmp.eq.s32.totalorder %s32, 3
      %p264 = por %p262, %p263
      %p265 = scmp.ne.s32.totalorder %s254, %s255
      %p266 = scmp.eq.s32.totalorder %s32, 0
      %p267 = por %p265, %p266
      %p268 = scmp.ne.s32.totalorder %s254, %s255
      %p269 = scmp.eq.s32.totalorder %s33, 3
      %p270 = por %p268, %p269
      %p272 = scmp.ne.s32.totalorder %s255, %s271
      %p273 = scmp.eq.s32.totalorder %s33, 0
      %p274 = por %p272, %p273
      %s275 = ssub.s32 %s35, %s42
      %p276 = scmp.eq.s32.totalorder %s275, 0
      %s278 = sadd.s32 %s277, 1
      %s279 = scalar_select %p276, %s277, %s278
      %p282 = pneg %p276
      %p283 = scmp.eq.s32.totalorder %s27, 3
      %p284 = por %p282, %p283
      %p285 = scmp.ne.s32.totalorder %s277, %s280
      %p286 = scmp.eq.s32.totalorder %s27, 0
      %p287 = por %p285, %p286
      %p288 = scmp.ne.s32.totalorder %s277, %s280
      %p289 = scmp.eq.s32.totalorder %s32, 3
      %p290 = por %p288, %p289
      %p291 = scmp.ne.s32.totalorder %s280, %s281
      %p292 = scmp.eq.s32.totalorder %s32, 0
      %p293 = por %p291, %p292
      %p294 = scmp.ne.s32.totalorder %s280, %s281
      %p295 = scmp.eq.s32.totalorder %s33, 3
      %p296 = por %p294, %p295
      %p298 = scmp.ne.s32.totalorder %s281, %s297
      %p299 = scmp.eq.s32.totalorder %s33, 0
      %p300 = por %p298, %p299
      %s301 = ssub.s32 %s35, %s42
      %p302 = scmp.eq.s32.totalorder %s301, 0
      %s304 = sadd.s32 %s303, 1
      %s305 = scalar_select %p302, %s303, %s304
      %p308 = pneg %p302
      %p309 = scmp.eq.s32.totalorder %s27, 3
      %p310 = por %p308, %p309
      %p311 = scmp.ne.s32.totalorder %s303, %s306
      %p312 = scmp.eq.s32.totalorder %s27, 0
      %p313 = por %p311, %p312
      %p314 = scmp.ne.s32.totalorder %s303, %s306
      %p315 = scmp.eq.s32.totalorder %s32, 3
      %p316 = por %p314, %p315
      %p317 = scmp.ne.s32.totalorder %s306, %s307
      %p318 = scmp.eq.s32.totalorder %s32, 0
      %p319 = por %p317, %p318
      %p320 = scmp.ne.s32.totalorder %s306, %s307
      %p321 = scmp.eq.s32.totalorder %s33, 3
      %p322 = por %p320, %p321
      %p324 = scmp.ne.s32.totalorder %s307, %s323
      %p325 = scmp.eq.s32.totalorder %s33, 0
      %p326 = por %p324, %p325
      %s327 = ssub.s32 %s35, %s42
      %p328 = scmp.eq.s32.totalorder %s327, 0
      %s330 = sadd.s32 %s329, 1
      %s331 = scalar_select %p328, %s329, %s330
      %p334 = pneg %p328
      %p335 = scmp.eq.s32.totalorder %s27, 3
      %p336 = por %p334, %p335
      %p337 = scmp.ne.s32.totalorder %s329, %s332
      %p338 = scmp.eq.s32.totalorder %s27, 0
      %p339 = por %p337, %p338
      %p340 = scmp.ne.s32.totalorder %s329, %s332
      %p341 = scmp.eq.s32.totalorder %s32, 3
      %p342 = por %p340, %p341
      %p343 = scmp.ne.s32.totalorder %s332, %s333
      %p344 = scmp.eq.s32.totalorder %s32, 0
      %p345 = por %p343, %p344
      %p346 = scmp.ne.s32.totalorder %s332, %s333
      %p347 = scmp.eq.s32.totalorder %s33, 3
      %p348 = por %p346, %p347
      %p350 = scmp.ne.s32.totalorder %s333, %s349
      %p351 = scmp.eq.s32.totalorder %s33, 0
      %p352 = por %p350, %p351
      %s353 = ssub.s32 %s35, %s42
      %p354 = scmp.eq.s32.totalorder %s353, 0
      %s356 = sadd.s32 %s355, 1
      %s357 = scalar_select %p354, %s355, %s356
      %p360 = pneg %p354
      %p361 = scmp.eq.s32.totalorder %s27, 3
      %p362 = por %p360, %p361
      %p363 = scmp.ne.s32.totalorder %s355, %s358
      %p364 = scmp.eq.s32.totalorder %s27, 0
      %p365 = por %p363, %p364
      %p366 = scmp.ne.s32.totalorder %s355, %s358
      %p367 = scmp.eq.s32.totalorder %s32, 3
      %p368 = por %p366, %p367
      %p369 = scmp.ne.s32.totalorder %s358, %s359
      %p370 = scmp.eq.s32.totalorder %s32, 0
      %p371 = por %p369, %p370
      %p372 = scmp.ne.s32.totalorder %s358, %s359
      %p373 = scmp.eq.s32.totalorder %s33, 3
      %p374 = por %p372, %p373
      %p376 = scmp.ne.s32.totalorder %s359, %s375
      %p377 = scmp.eq.s32.totalorder %s33, 0
      %p378 = por %p376, %p377
      %s379 = ssub.s32 %s35, %s42
      %p380 = scmp.eq.s32.totalorder %s379, 0
      %s382 = sadd.s32 %s381, 1
      %s383 = scalar_select %p380, %s381, %s382
      %p386 = pneg %p380
      %p387 = scmp.eq.s32.totalorder %s27, 3
      %p388 = por %p386, %p387
      %p389 = scmp.ne.s32.totalorder %s381, %s384
      %p390 = scmp.eq.s32.totalorder %s27, 0
      %p391 = por %p389, %p390
      %p392 = scmp.ne.s32.totalorder %s381, %s384
      %p393 = scmp.eq.s32.totalorder %s32, 3
      %p394 = por %p392, %p393
      %p395 = scmp.ne.s32.totalorder %s384, %s385
      %p396 = scmp.eq.s32.totalorder %s32, 0
      %p397 = por %p395, %p396
      %p398 = scmp.ne.s32.totalorder %s384, %s385
      %p399 = scmp.eq.s32.totalorder %s33, 3
      %p400 = por %p398, %p399
      %p402 = scmp.ne.s32.totalorder %s385, %s401
      %p403 = scmp.eq.s32.totalorder %s33, 0
      %p404 = por %p402, %p403
      %s405 = ssub.s32 %s35, %s42
      %p406 = scmp.eq.s32.totalorder %s405, 0
      %s408 = sadd.s32 %s407, 1
      %s409 = scalar_select %p406, %s407, %s408
      %p412 = pneg %p406
      %p413 = scmp.eq.s32.totalorder %s27, 3
      %p414 = por %p412, %p413
      %p415 = scmp.ne.s32.totalorder %s407, %s410
      %p416 = scmp.eq.s32.totalorder %s27, 0
      %p417 = por %p415, %p416
      %p418 = scmp.ne.s32.totalorder %s407, %s410
      %p419 = scmp.eq.s32.totalorder %s32, 3
      %p420 = por %p418, %p419
      %p421 = scmp.ne.s32.totalorder %s410, %s411
      %p422 = scmp.eq.s32.totalorder %s32, 0
      %p423 = por %p421, %p422
      %p424 = scmp.ne.s32.totalorder %s410, %s411
      %p425 = scmp.eq.s32.totalorder %s33, 3
      %p426 = por %p424, %p425
      %p428 = scmp.ne.s32.totalorder %s411, %s427
      %p429 = scmp.eq.s32.totalorder %s33, 0
      %p430 = por %p428, %p429
      %s432 = sadd.s32 %s431, 1
      %p435 = scmp.eq.s32.totalorder %s27, 3
      %p436 = scmp.ne.s32.totalorder %s431, %s433
      %p437 = scmp.eq.s32.totalorder %s27, 0
      %p438 = por %p436, %p437
      %p439 = scmp.ne.s32.totalorder %s431, %s433
      %p440 = scmp.eq.s32.totalorder %s32, 3
      %p441 = por %p439, %p440
      %p442 = scmp.ne.s32.totalorder %s433, %s434
      %p443 = scmp.eq.s32.totalorder %s32, 0
      %p444 = por %p442, %p443
      %p445 = scmp.ne.s32.totalorder %s433, %s434
      %p446 = scmp.eq.s32.totalorder %s33, 3
      %p447 = por %p445, %p446
      %p449 = scmp.ne.s32.totalorder %s434, %s448
      %p450 = scmp.eq.s32.totalorder %s33, 0
      %p451 = por %p449, %p450
      %s453 = sadd.s32 %s452, 1
      %p456 = scmp.eq.s32.totalorder %s27, 3
      %p457 = scmp.ne.s32.totalorder %s452, %s454
      %p458 = scmp.eq.s32.totalorder %s27, 0
      %p459 = por %p457, %p458
      %p460 = scmp.ne.s32.totalorder %s452, %s454
      %p461 = scmp.eq.s32.totalorder %s32, 3
      %p462 = por %p460, %p461
      %p463 = scmp.ne.s32.totalorder %s454, %s455
      %p464 = scmp.eq.s32.totalorder %s32, 0
      %p465 = por %p463, %p464
      %p466 = scmp.ne.s32.totalorder %s454, %s455
      %p467 = scmp.eq.s32.totalorder %s33, 3
      %p468 = por %p466, %p467
      %p470 = scmp.ne.s32.totalorder %s455, %s469
      %p471 = scmp.eq.s32.totalorder %s33, 0
      %p472 = por %p470, %p471
      %s473 = ssub.s32 %s34, %s46
      %p474 = scmp.eq.s32.totalorder %s473, 0
      %s476 = sadd.s32 %s475, 1
      %s477 = scalar_select %p474, %s475, %s476
      %p480 = pneg %p474
      %p481 = scmp.eq.s32.totalorder %s27, 3
      %p482 = por %p480, %p481
      %p483 = scmp.ne.s32.totalorder %s475, %s478
      %p484 = scmp.eq.s32.totalorder %s27, 0
      %p485 = por %p483, %p484
      %p486 = scmp.ne.s32.totalorder %s475, %s478
      %p487 = scmp.eq.s32.totalorder %s32, 3
      %p488 = por %p486, %p487
      %p489 = scmp.ne.s32.totalorder %s478, %s479
      %p490 = scmp.eq.s32.totalorder %s32, 0
      %p491 = por %p489, %p490
      %p492 = scmp.ne.s32.totalorder %s478, %s479
      %p493 = scmp.eq.s32.totalorder %s33, 3
      %p494 = por %p492, %p493
      %p496 = scmp.ne.s32.totalorder %s479, %s495
      %p497 = scmp.eq.s32.totalorder %s33, 0
      %p498 = por %p496, %p497
      %p499 = scmp.le.s32.totalorder 1, %s27
      %p500 = scmp.lt.s32.totalorder %s27, 5
      %p501 = pnand %p499, %p500
      %p502 = pneg %p501
      // Predicated region
      $region9: #{tpu_custom_call.1} parent=5 // pred_check
        _
      $region10: #{tpu_custom_call.1} parent=5 // pred_check_branch
        %504 = sbr.rel (%p501) target = $region12
      $region11: #{tpu_custom_call.1} parent=5 // pred_region
        %s505 = ssub.s32 %s27, 1
        // Predicated region
        $region13: #{tpu_custom_call.1} parent=11 // pred_check
          %p506 = pneg %p86
        $region14: #{tpu_custom_call.1} parent=11 // pred_check_branch
          %508 = sbr.rel (%p506) target = $region16
        $region15: #{tpu_custom_call.1} parent=11 // pred_region
          _
        $region16: #{tpu_custom_call.1} parent=11 // pred_fallthru
          _
        // Predicated region
        $region17: #{tpu_custom_call.1} parent=11 // pred_check
          %p509 = pneg %p107
        $region18: #{tpu_custom_call.1} parent=11 // pred_check_branch
          %511 = sbr.rel (%p509) target = $region20
        $region19: #{tpu_custom_call.1} parent=11 // pred_region
          %s513 = ssub.s32 16, 16
          %514 = vsyncadd [#allocation4], %s513
          %s516 = sshll.u32 [#allocation3], 4
          %s517 = int_to_ptr.vmem [resolvable:$true] %s516
          %519 = dma.hbm_to_vmem [thread:$0]  %s2, 16, %s517, [#allocation4]
        $region20: #{tpu_custom_call.1} parent=11 // pred_fallthru
          _
        // Predicated region
        $region21: #{tpu_custom_call.1} parent=11 // pred_check
          %p520 = pneg %p444
        $region22: #{tpu_custom_call.1} parent=11 // pred_check_branch
          %522 = sbr.rel (%p520) target = $region24
        $region23: #{tpu_custom_call.1} parent=11 // pred_region
          _
        $region24: #{tpu_custom_call.1} parent=11 // pred_fallthru
          _
        // Predicated region
        $region25: #{tpu_custom_call.1} parent=11 // pred_check
          %p523 = pneg %p465
        $region26: #{tpu_custom_call.1} parent=11 // pred_check_branch
          %525 = sbr.rel (%p523) target = $region28
        $region27: #{tpu_custom_call.1} parent=11 // pred_region
          _
        $region28: #{tpu_custom_call.1} parent=11 // pred_fallthru
          _
      $region12: #{tpu_custom_call.1} parent=5 // pred_fallthru
        _
      %p526 = scmp.lt.s32.totalorder %s27, 4
      // Predicated region
      $region29: #{tpu_custom_call.1} parent=5 // pred_check
        %p527 = pneg %p526
      $region30: #{tpu_custom_call.1} parent=5 // pred_check_branch
        %529 = sbr.rel (%p527) target = $region32
      $region31: #{tpu_custom_call.1} parent=5 // pred_region
        // Predicated region
        $region33: #{tpu_custom_call.1} parent=31 // pred_check
          %p530 = pneg %p59
        $region34: #{tpu_custom_call.1} parent=31 // pred_check_branch
          %532 = sbr.rel (%p530) target = $region36
        $region35: #{tpu_custom_call.1} parent=31 // pred_region
          %p533 = scmp.lt.s32.totalorder %s34, 1
          %s534 = scalar_select %p533, %s34, 1
          %s535 = smul.addr %s534, 2
          %s536 = smul.addr %s535, 8
          %s537 = scalar_lea.vmem %s0, %s536
        $region36: #{tpu_custom_call.1} parent=31 // pred_fallthru
          _
        // Predicated region
        $region37: #{tpu_custom_call.1} parent=31 // pred_check
          %p538 = pneg %p127
        $region38: #{tpu_custom_call.1} parent=31 // pred_check_branch
          %540 = sbr.rel (%p538) target = $region40
        $region39: #{tpu_custom_call.1} parent=31 // pred_region
          %p541 = scmp.lt.s32.totalorder %s34, 1
          %s542 = scalar_select %p541, %s34, 1
          %s543 = smul.addr %s542, 2
          %s544 = smul.addr %s543, 8
          %s545 = scalar_lea.vmem %s3, %s544
        $region40: #{tpu_custom_call.1} parent=31 // pred_fallthru
          _
        // Predicated region
        $region41: #{tpu_custom_call.1} parent=31 // pred_check
          %p546 = pneg %p157
        $region42: #{tpu_custom_call.1} parent=31 // pred_check_branch
          %548 = sbr.rel (%p546) target = $region44
        $region43: #{tpu_custom_call.1} parent=31 // pred_region
          %s549 = smul.u32 %s34, 2
          %s550 = sadd.s32 %s549, %s35
          %p551 = scmp.lt.s32.totalorder %s550, 3
          %s552 = scalar_select %p551, %s550, 3
          %s553 = smul.addr %s552, 8
          %s554 = smul.addr %s553, 8
          %s555 = scalar_lea.vmem %s4, %s554
          %s556 = smul.u32 %s34, 2
          %s557 = sadd.s32 %s556, %s35
        $region44: #{tpu_custom_call.1} parent=31 // pred_fallthru
          _
        // Predicated region
        $region45: #{tpu_custom_call.1} parent=31 // pred_check
          %p558 = pneg %p183
        $region46: #{tpu_custom_call.1} parent=31 // pred_check_branch
          %560 = sbr.rel (%p558) target = $region48
        $region47: #{tpu_custom_call.1} parent=31 // pred_region
          %s561 = sand.u32 %s27, 1
          %s562 = scalar_lea.sflag [#allocation6], %s561
          %s563 = sand.u32 %s173, 1
          %s564 = smul.addr %s563, 96
          %s565 = scalar_lea.vmem [#allocation5], %s564
          %s567 = ssub.s32 1536, 1536
          %568 = vsyncadd %s562, %s567
          %s569 = smul.addr %s35, 12
          %s570 = smul.addr %s569, 128
          %s571 = scalar_lea.hbm %s5, %s570
          %s572 = sshll.u32 %s565, 4
          %s573 = int_to_ptr.vmem [resolvable:$true] %s572
          %578 = dma.hbm_to_vmem [thread:$0]  %s571, 1536, %s573, %s562, 384, 384, 24
        $region48: #{tpu_custom_call.1} parent=31 // pred_fallthru
          _
        // Predicated region
        $region49: #{tpu_custom_call.1} parent=31 // pred_check
          %p579 = pneg %p209
        $region50: #{tpu_custom_call.1} parent=31 // pred_check_branch
          %581 = sbr.rel (%p579) target = $region52
        $region51: #{tpu_custom_call.1} parent=31 // pred_region
          %s582 = sand.u32 %s27, 1
          %s583 = scalar_lea.sflag [#allocation6], %s582
          %s584 = sand.u32 %s199, 1
          %s585 = smul.addr %s584, 3
          %s586 = scalar_lea.vmem [#allocation7], %s585
          %s588 = ssub.s32 48, 48
          %589 = vsyncadd %s583, %s588
          %s590 = smul.addr %s35, 3
          %s591 = smul.addr %s590, 16
          %s592 = scalar_lea.hbm %s6, %s591
          %s594 = sshll.u32 %s586, 4
          %s595 = int_to_ptr.vmem [resolvable:$true] %s594
          %597 = dma.hbm_to_vmem [thread:$0]  %s592, 48, %s595, %s583
        $region52: #{tpu_custom_call.1} parent=31 // pred_fallthru
          _
        // Predicated region
        $region53: #{tpu_custom_call.1} parent=31 // pred_check
          %p598 = pneg %p235
        $region54: #{tpu_custom_call.1} parent=31 // pred_check_branch
          %600 = sbr.rel (%p598) target = $region56
        $region55: #{tpu_custom_call.1} parent=31 // pred_region
          %p601 = scmp.lt.s32.totalorder %s35, 1
          %s602 = scalar_select %p601, %s35, 1
          %s603 = smul.addr %s602, 16
          %s604 = smul.addr %s603, 8
          %s605 = scalar_lea.vmem %s7, %s604
        $region56: #{tpu_custom_call.1} parent=31 // pred_fallthru
          _
        // Predicated region
        $region57: #{tpu_custom_call.1} parent=31 // pred_check
          %p606 = pneg %p261
        $region58: #{tpu_custom_call.1} parent=31 // pred_check_branch
          %608 = sbr.rel (%p606) target = $region60
        $region59: #{tpu_custom_call.1} parent=31 // pred_region
          %p609 = scmp.lt.s32.totalorder %s35, 1
          %s610 = scalar_select %p609, %s35, 1
          %s611 = scalar_lea.vmem %s8, %s610
        $region60: #{tpu_custom_call.1} parent=31 // pred_fallthru
          _
        // Predicated region
        $region61: #{tpu_custom_call.1} parent=31 // pred_check
          %p612 = pneg %p287
        $region62: #{tpu_custom_call.1} parent=31 // pred_check_branch
          %614 = sbr.rel (%p612) target = $region64
        $region63: #{tpu_custom_call.1} parent=31 // pred_region
          %p615 = scmp.lt.s32.totalorder %s35, 1
          %s616 = scalar_select %p615, %s35, 1
          %s617 = scalar_lea.vmem %s9, %s616
        $region64: #{tpu_custom_call.1} parent=31 // pred_fallthru
          _
        // Predicated region
        $region65: #{tpu_custom_call.1} parent=31 // pred_check
          %p618 = pneg %p313
        $region66: #{tpu_custom_call.1} parent=31 // pred_check_branch
          %620 = sbr.rel (%p618) target = $region68
        $region67: #{tpu_custom_call.1} parent=31 // pred_region
          %p621 = scmp.lt.s32.totalorder %s35, 1
          %s622 = scalar_select %p621, %s35, 1
          %s623 = scalar_lea.vmem %s10, %s622
        $region68: #{tpu_custom_call.1} parent=31 // pred_fallthru
          _
        // Predicated region
        $region69: #{tpu_custom_call.1} parent=31 // pred_check
          %p624 = pneg %p339
        $region70: #{tpu_custom_call.1} parent=31 // pred_check_branch
          %626 = sbr.rel (%p624) target = $region72
        $region71: #{tpu_custom_call.1} parent=31 // pred_region
          %p627 = scmp.lt.s32.totalorder %s35, 1
          %s628 = scalar_select %p627, %s35, 1
          %s629 = scalar_lea.vmem %s11, %s628
        $region72: #{tpu_custom_call.1} parent=31 // pred_fallthru
          _
        // Predicated region
        $region73: #{tpu_custom_call.1} parent=31 // pred_check
          %p630 = pneg %p365
        $region74: #{tpu_custom_call.1} parent=31 // pred_check_branch
          %632 = sbr.rel (%p630) target = $region76
        $region75: #{tpu_custom_call.1} parent=31 // pred_region
          %p633 = scmp.lt.s32.totalorder %s35, 1
          %s634 = scalar_select %p633, %s35, 1
          %s635 = scalar_lea.vmem %s12, %s634
        $region76: #{tpu_custom_call.1} parent=31 // pred_fallthru
          _
        // Predicated region
        $region77: #{tpu_custom_call.1} parent=31 // pred_check
          %p636 = pneg %p391
        $region78: #{tpu_custom_call.1} parent=31 // pred_check_branch
          %638 = sbr.rel (%p636) target = $region80
        $region79: #{tpu_custom_call.1} parent=31 // pred_region
          %p639 = scmp.lt.s32.totalorder %s35, 1
          %s640 = scalar_select %p639, %s35, 1
          %s641 = smul.addr %s640, 4
          %s642 = smul.addr %s641, 8
          %s643 = scalar_lea.vmem %s13, %s642
        $region80: #{tpu_custom_call.1} parent=31 // pred_fallthru
          _
        // Predicated region
        $region81: #{tpu_custom_call.1} parent=31 // pred_check
          %p644 = pneg %p417
        $region82: #{tpu_custom_call.1} parent=31 // pred_check_branch
          %646 = sbr.rel (%p644) target = $region84
        $region83: #{tpu_custom_call.1} parent=31 // pred_region
          %p647 = scmp.lt.s32.totalorder %s35, 1
          %s648 = scalar_select %p647, %s35, 1
          %s649 = scalar_lea.vmem %s14, %s648
        $region84: #{tpu_custom_call.1} parent=31 // pred_fallthru
          _
      $region32: #{tpu_custom_call.1} parent=5 // pred_fallthru
        _
      %p650 = scmp.le.s32.totalorder 1, %s27
      %p651 = scmp.lt.s32.totalorder %s27, 5
      %p652 = pnand %p650, %p651
      %p653 = pneg %p652
      // Predicated region
      $region85: #{tpu_custom_call.1} parent=5 // pred_check
        _
      $region86: #{tpu_custom_call.1} parent=5 // pred_check_branch
        %655 = sbr.rel (%p652) target = $region88
      $region87: #{tpu_custom_call.1} parent=5 // pred_region
        %s656 = ssub.s32 %s27, 1
        // Predicated region
        $region89: #{tpu_custom_call.1} parent=87 // pred_check
          %p657 = pneg %p107
        $region90: #{tpu_custom_call.1} parent=87 // pred_check_branch
          %659 = sbr.rel (%p657) target = $region92
        $region91: #{tpu_custom_call.1} parent=87 // pred_region
          %660 = dma.done [#allocation4], 16
        $region92: #{tpu_custom_call.1} parent=87 // pred_fallthru
          _
        %s661 = sand.u32 %s32, 1
        %s662 = scalar_lea.sflag [#allocation6], %s661
        %s663 = sand.u32 %s176, 1
        %s664 = smul.addr %s663, 96
        %s665 = scalar_lea.vmem [#allocation5], %s664
        // Predicated region
        $region93: #{tpu_custom_call.1} parent=87 // pred_check
          %p666 = pneg %p189
        $region94: #{tpu_custom_call.1} parent=87 // pred_check_branch
          %668 = sbr.rel (%p666) target = $region96
        $region95: #{tpu_custom_call.1} parent=87 // pred_region
          %669 = dma.done %s662, 1536
        $region96: #{tpu_custom_call.1} parent=87 // pred_fallthru
          _
        %s670 = sand.u32 %s32, 1
        %s671 = scalar_lea.sflag [#allocation6], %s670
        %s672 = sand.u32 %s202, 1
        %s673 = smul.addr %s672, 3
        %s674 = scalar_lea.vmem [#allocation7], %s673
        // Predicated region
        $region97: #{tpu_custom_call.1} parent=87 // pred_check
          %p675 = pneg %p215
        $region98: #{tpu_custom_call.1} parent=87 // pred_check_branch
          %677 = sbr.rel (%p675) target = $region100
        $region99: #{tpu_custom_call.1} parent=87 // pred_region
          %678 = dma.done %s671, 48
        $region100: #{tpu_custom_call.1} parent=87 // pred_fallthru
          _
        %p679 = scmp.lt.s32.totalorder %s36, 1
        %s680 = scalar_select %p679, %s36, 1
        %s681 = smul.addr %s680, 2
        %s682 = smul.addr %s681, 8
        %s683 = scalar_lea.vmem %s0, %s682
        %p684 = pneg %p65
        %p685 = pneg %p62
        %p686 = pneg %p86
        %p687 = pneg %p83
        %p688 = pneg %p107
        %p689 = pneg %p104
        %p690 = scmp.lt.s32.totalorder %s36, 1
        %s691 = scalar_select %p690, %s36, 1
        %s692 = smul.addr %s691, 2
        %s693 = smul.addr %s692, 8
        %s694 = scalar_lea.vmem %s3, %s693
        %p695 = pneg %p133
        %p696 = pneg %p130
        %s697 = smul.u32 %s36, 2
        %s698 = sadd.s32 %s697, %s37
        %p699 = scmp.lt.s32.totalorder %s698, 3
        %s700 = scalar_select %p699, %s698, 3
        %s701 = smul.addr %s700, 8
        %s702 = smul.addr %s701, 8
        %s703 = scalar_lea.vmem %s4, %s702
        %p704 = pneg %p163
        %p705 = pneg %p160
        %s706 = sand.u32 %s32, 1
        %s707 = scalar_lea.sflag [#allocation6], %s706
        %s708 = sand.u32 %s176, 1
        %s709 = smul.addr %s708, 96
        %s710 = scalar_lea.vmem [#allocation5], %s709
        %p711 = pneg %p189
        %p712 = pneg %p186
        %s713 = sand.u32 %s32, 1
        %s714 = scalar_lea.sflag [#allocation6], %s713
        %s715 = sand.u32 %s202, 1
        %s716 = smul.addr %s715, 3
        %s717 = scalar_lea.vmem [#allocation7], %s716
        %p718 = pneg %p215
        %p719 = pneg %p212
        %p720 = scmp.lt.s32.totalorder %s37, 1
        %s721 = scalar_select %p720, %s37, 1
        %s722 = smul.addr %s721, 16
        %s723 = smul.addr %s722, 8
        %s724 = scalar_lea.vmem %s7, %s723
        %p725 = pneg %p241
        %p726 = pneg %p238
        %p727 = scmp.lt.s32.totalorder %s37, 1
        %s728 = scalar_select %p727, %s37, 1
        %s729 = scalar_lea.vmem %s8, %s728
        %p730 = pneg %p267
        %p731 = pneg %p264
        %p732 = scmp.lt.s32.totalorder %s37, 1
        %s733 = scalar_select %p732, %s37, 1
        %s734 = scalar_lea.vmem %s9, %s733
        %p735 = pneg %p293
        %p736 = pneg %p290
        %p737 = scmp.lt.s32.totalorder %s37, 1
        %s738 = scalar_select %p737, %s37, 1
        %s739 = scalar_lea.vmem %s10, %s738
        %p740 = pneg %p319
        %p741 = pneg %p316
        %p742 = scmp.lt.s32.totalorder %s37, 1
        %s743 = scalar_select %p742, %s37, 1
        %s744 = scalar_lea.vmem %s11, %s743
        %p745 = pneg %p345
        %p746 = pneg %p342
        %p747 = scmp.lt.s32.totalorder %s37, 1
        %s748 = scalar_select %p747, %s37, 1
        %s749 = scalar_lea.vmem %s12, %s748
        %p750 = pneg %p371
        %p751 = pneg %p368
        %p752 = scmp.lt.s32.totalorder %s37, 1
        %s753 = scalar_select %p752, %s37, 1
        %s754 = smul.addr %s753, 4
        %s755 = smul.addr %s754, 8
        %s756 = scalar_lea.vmem %s13, %s755
        %p757 = pneg %p397
        %p758 = pneg %p394
        %p759 = scmp.lt.s32.totalorder %s37, 1
        %s760 = scalar_select %p759, %s37, 1
        %s761 = scalar_lea.vmem %s14, %s760
        %p762 = pneg %p423
        %p763 = pneg %p420
        %p764 = pneg %p444
        %p765 = pneg %p441
        %p766 = pneg %p465
        %p767 = pneg %p462
        %p768 = pneg %p491
        %p769 = pneg %p488
        %p770 = scmp.lt.s32.totalorder %s36, 1
        %s771 = scalar_select %p770, %s36, 1
        %s772 = smul.addr %s771, 2
        %s773 = smul.addr %s772, 8
        %s774 = scalar_lea.vmem %s17, %s773
        %p775 = scmp.lt.s32.totalorder %s36, 1
        %s776 = scalar_select %p775, %s36, 1
        %s777 = smul.addr %s776, 2
        %s778 = smul.addr %s777, 8
        %s779 = scalar_lea.vmem %s0, %s778
        %p780 = scmp.lt.s32.totalorder %s36, 1
        %s781 = scalar_select %p780, %s36, 1
        %s782 = smul.addr %s781, 2
        %s783 = smul.addr %s782, 8
        %s784 = scalar_lea.vmem %s3, %s783
        %s785 = smul.u32 %s36, 2
        %s786 = sadd.s32 %s785, %s37
        %p787 = scmp.lt.s32.totalorder %s786, 3
        %s788 = scalar_select %p787, %s786, 3
        %s789 = smul.addr %s788, 8
        %s790 = smul.addr %s789, 8
        %s791 = scalar_lea.vmem %s4, %s790
        %s792 = smul.u32 %s36, 2
        %s793 = sadd.s32 %s792, %s37
        %p794 = scmp.lt.s32.totalorder %s37, 1
        %s795 = scalar_select %p794, %s37, 1
        %s796 = smul.addr %s795, 16
        %s797 = smul.addr %s796, 8
        %s798 = scalar_lea.vmem %s7, %s797
        %p799 = scmp.lt.s32.totalorder %s37, 1
        %s800 = scalar_select %p799, %s37, 1
        %s801 = scalar_lea.vmem %s8, %s800
        %p802 = scmp.lt.s32.totalorder %s37, 1
        %s803 = scalar_select %p802, %s37, 1
        %s804 = scalar_lea.vmem %s9, %s803
        %p805 = scmp.lt.s32.totalorder %s37, 1
        %s806 = scalar_select %p805, %s37, 1
        %s807 = scalar_lea.vmem %s10, %s806
        %p808 = scmp.lt.s32.totalorder %s37, 1
        %s809 = scalar_select %p808, %s37, 1
        %s810 = scalar_lea.vmem %s11, %s809
        %p811 = scmp.lt.s32.totalorder %s37, 1
        %s812 = scalar_select %p811, %s37, 1
        %s813 = scalar_lea.vmem %s12, %s812
        %p814 = scmp.lt.s32.totalorder %s37, 1
        %s815 = scalar_select %p814, %s37, 1
        %s816 = smul.addr %s815, 4
        %s817 = smul.addr %s816, 8
        %s818 = scalar_lea.vmem %s13, %s817
        %p819 = scmp.lt.s32.totalorder %s37, 1
        %s820 = scalar_select %p819, %s37, 1
        %s821 = scalar_lea.vmem %s14, %s820
        %p822 = scmp.lt.s32.totalorder %s36, 1
        %s823 = scalar_select %p822, %s36, 1
        %s824 = smul.addr %s823, 2
        %s825 = smul.addr %s824, 8
        %s826 = scalar_lea.vmem %s17, %s825
        %p827 = scmp.eq.s32.totalorder %s37, 0
        // Predicated region
        $region101: #{tpu_custom_call.1} parent=87 // pred_check
          %p828 = pneg %p827
        $region102: #{tpu_custom_call.1} parent=87 // pred_check_branch
          %830 = sbr.rel (%p828) target = $region104
        $region103: #{tpu_custom_call.1} parent=87 // pred_region
          %v831 = vld [vmem:[%s779] sm:$0xff]
          %v832 = vld [vmem:[%s779 + $0x8] sm:$0xff]
          %v833 = vld [vmem:[%s1] sm:$0xff]
          %v834 = vld [vmem:[#allocation3] sm:$0x1]
          %v836 = vlaneseq
          %v837 = vshrl.u32 %v836, 7
          %v838 = vsub.s32 0, %v837
          %v839 = vrot.slane %v834, %v838
          %vm841 = vcmask 64512
          %v843 = vsel %vm841, %v831, 0
          %v846 = vsel %vm841, %v832, 0
          %848 = vmatprep.subr.mxu0 0.0
          %849 = vmatpush1.msra.mxu0 %v833
          %850 = vmatprep.subr.mxu0 0.0
          %851 = vmatpush1.msra.mxu0 0.0
          %852 = vmatprep.subr.mxu0 0.0
          %853 = vmatpush1.msra.mxu0 0.0
          %854 = vmatprep.subr.mxu0 0.0
          %855 = vmatpush1.msra.mxu0 0.0
          %856 = vmatprep.subr.mxu0 0.0
          %857 = vmatpush1.msra.mxu0 0.0
          %858 = vmatprep.subr.mxu0 0.0
          %859 = vmatpush1.msra.mxu0 0.0
          %860 = vmatprep.subr.mxu0 0.0
          %861 = vmatpush1.msra.mxu0 0.0
          %862 = vmatprep.subr.mxu0 0.0
          %863 = vmatpush1.msra.mxu0 0.0
          %864 = vmatprep.subr.mxu0 0.0
          %865 = vmatpush1.msra.mxu0 0.0
          %866 = vmatprep.subr.mxu0 0.0
          %867 = vmatpush1.msra.mxu0 0.0
          %868 = vmatprep.subr.mxu0 0.0
          %869 = vmatpush1.msra.mxu0 0.0
          %870 = vmatprep.subr.mxu0 0.0
          %871 = vmatpush1.msra.mxu0 0.0
          %872 = vmatprep.subr.mxu0 0.0
          %873 = vmatpush1.msra.mxu0 0.0
          %874 = vmatprep.subr.mxu0 0.0
          %875 = vmatpush1.msra.mxu0 0.0
          %876 = vmatprep.subr.mxu0 0.0
          %877 = vmatpush1.msra.mxu0 0.0
          %878 = vmatprep.subr.mxu0 0.0
          %879 = vmatpush1.msra.mxu0 0.0
          %880 = vmatprep.subr.mxu0 0.0
          %881 = vmatpush1.msra.mxu0 0.0
          %882 = vmatprep.subr.mxu0 0.0
          %883 = vmatpush1.msra.mxu0 0.0
          %884 = vmatprep.subr.mxu0 0.0
          %885 = vmatpush1.msra.mxu0 0.0
          %886 = vmatprep.subr.mxu0 0.0
          %887 = vmatpush1.msra.mxu0 0.0
          %888 = vmatprep.subr.mxu0 0.0
          %889 = vmatpush1.msra.mxu0 0.0
          %890 = vmatprep.subr.mxu0 0.0
          %891 = vmatpush1.msra.mxu0 0.0
          %892 = vmatprep.subr.mxu0 0.0
          %893 = vmatpush1.msra.mxu0 0.0
          %894 = vmatprep.subr.mxu0 0.0
          %895 = vmatpush1.msra.mxu0 0.0
          %896 = vmatprep.subr.mxu0 0.0
          %897 = vmatpush1.msra.mxu0 0.0
          %898 = vmatprep.subr.mxu0 0.0
          %899 = vmatpush1.msra.mxu0 0.0
          %900 = vmatprep.subr.mxu0 0.0
          %901 = vmatpush1.msra.mxu0 0.0
          %902 = vmatprep.subr.mxu0 0.0
          %903 = vmatpush1.msra.mxu0 0.0
          %904 = vmatprep.subr.mxu0 0.0
          %905 = vmatpush1.msra.mxu0 0.0
          %906 = vmatprep.subr.mxu0 0.0
          %907 = vmatpush1.msra.mxu0 0.0
          %908 = vmatprep.subr.mxu0 0.0
          %909 = vmatpush1.msra.mxu0 0.0
          %910 = vmatprep.subr.mxu0 0.0
          %911 = vmatpush1.msra.mxu0 0.0
          %912 = vmatprep.mubr.f32.mxu0 0.0
          %913 = vmatmul.mubr.f32.gmra.mrb[0].mxu0 %v843
          %v914 = vpop.f32.mrb[0].mxu0
          %v915 = vadd.f32 %v839, %v914
          %v916 = vpop.f32.mrb[0].mxu0
          %917 = vmatprep.mubr.f32.mxu0 0.0
          %918 = vmatmul.mubr.f32.gmra.mrb[0].mxu0 %v846
          %v919 = vpop.f32.mrb[0].mxu0
          %v920 = vadd.f32 %v839, %v919
          %v921 = vpop.f32.mrb[0].mxu0
          %922 = vdwg.mxu0
          %v923 = vld [vmem:[%s784] sm:$0xff]
          %v924 = vld [vmem:[%s784 + $0x8] sm:$0xff]
          %v925 = vadd.f32 %v915, %v923
          %v926 = vadd.f32 %v920, %v924
          %vm927 = vcmask 261120
          %928 = vst.msk [vmem:[#allocation2] sm:$0xff] %vm927, %v925
          %929 = vst.msk [vmem:[#allocation2 + $0x8] sm:$0xff] %vm927, %v926
        $region104: #{tpu_custom_call.1} parent=87 // pred_fallthru
          _
        %v930 = vld [vmem:[#allocation2] sm:$0xff]
        %v931 = vld [vmem:[#allocation2 + $0x8] sm:$0xff]
        %v932 = vld [vmem:[%s804] sm:$0x1]
        %v933 = vld [vmem:[%s807] sm:$0x1]
        %vm934 = vcmask 261120
        %v935 = vsel %vm934, %v930, 0.0
        %936 = vadd.xlane.f32.xlu0 %v935
        %v937 = vpop.xlane.xlu0 %936
        %v938 = vsel %vm934, %v931, 0.0
        %939 = vadd.xlane.f32.xlu0 %v938
        %v940 = vpop.xlane.xlu0 %939
        %v941 = vrcp.pop 32.0
        %v942 = vmul.f32 %v937, %v941
        %v943 = vmul.f32 %v940, %v941
        %v944 = vsub.f32 %v930, %v942
        %v945 = vsub.f32 %v931, %v943
        %v946 = vmul.f32 %v944, %v944
        %v947 = vmul.f32 %v945, %v945
        %v948 = vsel %vm934, %v946, 0.0
        %949 = vadd.xlane.f32.xlu0 %v948
        %v950 = vpop.xlane.xlu0 %949
        %v951 = vsel %vm934, %v947, 0.0
        %952 = vadd.xlane.f32.xlu0 %v951
        %v953 = vpop.xlane.xlu0 %952
        %v954 = vmul.f32 %v950, %v941
        %v955 = vmul.f32 %v953, %v941
        %v956 = vadd.f32 %v954, 1e-05
        %v957 = vadd.f32 %v955, 1e-05
        %v958 = vrsqrt.pop %v956
        %v959 = vrsqrt.pop %v957
        %v960 = vmul.f32 %v944, %v958
        %v961 = vmul.f32 %v945, %v959
        %v963 = vlaneseq
        %v964 = vshrl.u32 %v963, 7
        %v965 = vsub.s32 0, %v964
        %v966 = vrot.slane %v932, %v965
        %v968 = vmul.f32 %v960, %v966
        %v969 = vmul.f32 %v961, %v966
        %v971 = vlaneseq
        %v972 = vshrl.u32 %v971, 7
        %v973 = vsub.s32 0, %v972
        %v974 = vrot.slane %v933, %v973
        %v976 = vadd.f32 %v968, %v974
        %v977 = vadd.f32 %v969, %v974
        %v978 = vld [vmem:[%s665] sm:$0xff]
        %v979 = vld [vmem:[%s665 + $0x8] sm:$0xff]
        %v980 = vld [vmem:[%s665 + $0x10] sm:$0xff]
        %v981 = vld [vmem:[%s665 + $0x18] sm:$0xff]
        %v982 = vld [vmem:[%s665 + $0x20] sm:$0xff]
        %v983 = vld [vmem:[%s665 + $0x28] sm:$0xff]
        %v984 = vld [vmem:[%s665 + $0x30] sm:$0xff]
        %v985 = vld [vmem:[%s665 + $0x38] sm:$0xff]
        %v986 = vld [vmem:[%s665 + $0x40] sm:$0xff]
        %v987 = vld [vmem:[%s665 + $0x48] sm:$0xff]
        %v988 = vld [vmem:[%s665 + $0x50] sm:$0xff]
        %v989 = vld [vmem:[%s665 + $0x58] sm:$0xff]
        %v990 = vld [vmem:[%s674] sm:$0x7]
        %v992 = vlaneseq
        %v993 = vshrl.u32 %v992, 7
        %v994 = vsub.s32 0, %v993
        %v995 = vrot.slane %v990, %v994
        %v996 = vlaneseq
        %v997 = vshrl.u32 %v996, 7
        %v998 = vsub.s32 1, %v997
        %v999 = vrot.slane %v990, %v998
        %v1000 = vlaneseq
        %v1001 = vshrl.u32 %v1000, 7
        %v1002 = vsub.s32 2, %v1001
        %v1003 = vrot.slane %v990, %v1002
        %v1008 = vsel %vm934, %v976, 0
        %v1011 = vsel %vm934, %v977, 0
        %1013 = vmatprep.subr.mxu0 %v979
        %1014 = vmatpush1.msra.mxu0 %v978
        %1015 = vmatprep.subr.mxu0 %v982
        %1016 = vmatpush1.msra.mxu0 %v981
        %1017 = vmatprep.subr.mxu0 %v985
        %1018 = vmatpush1.msra.mxu0 %v984
        %1019 = vmatprep.subr.mxu0 %v988
        %1020 = vmatpush1.msra.mxu0 %v987
        %1021 = vmatprep.subr.mxu0 0.0
        %1022 = vmatpush1.msra.mxu0 0.0
        %1023 = vmatprep.subr.mxu0 0.0
        %1024 = vmatpush1.msra.mxu0 0.0
        %1025 = vmatprep.subr.mxu0 0.0
        %1026 = vmatpush1.msra.mxu0 0.0
        %1027 = vmatprep.subr.mxu0 0.0
        %1028 = vmatpush1.msra.mxu0 0.0
        %1029 = vmatprep.subr.mxu0 0.0
        %1030 = vmatpush1.msra.mxu0 0.0
        %1031 = vmatprep.subr.mxu0 0.0
        %1032 = vmatpush1.msra.mxu0 0.0
        %1033 = vmatprep.subr.mxu0 0.0
        %1034 = vmatpush1.msra.mxu0 0.0
        %1035 = vmatprep.subr.mxu0 0.0
        %1036 = vmatpush1.msra.mxu0 0.0
        %1037 = vmatprep.subr.mxu0 0.0
        %1038 = vmatpush1.msra.mxu0 0.0
        %1039 = vmatprep.subr.mxu0 0.0
        %1040 = vmatpush1.msra.mxu0 0.0
        %1041 = vmatprep.subr.mxu0 0.0
        %1042 = vmatpush1.msra.mxu0 0.0
        %1043 = vmatprep.subr.mxu0 0.0
        %1044 = vmatpush1.msra.mxu0 0.0
        %1045 = vmatprep.subr.mxu0 0.0
        %1046 = vmatpush1.msra.mxu0 0.0
        %1047 = vmatprep.subr.mxu0 0.0
        %1048 = vmatpush1.msra.mxu0 0.0
        %1049 = vmatprep.subr.mxu0 0.0
        %1050 = vmatpush1.msra.mxu0 0.0
        %1051 = vmatprep.subr.mxu0 0.0
        %1052 = vmatpush1.msra.mxu0 0.0
        %1053 = vmatprep.subr.mxu0 0.0
        %1054 = vmatpush1.msra.mxu0 0.0
        %1055 = vmatprep.subr.mxu0 0.0
        %1056 = vmatpush1.msra.mxu0 0.0
        %1057 = vmatprep.subr.mxu0 0.0
        %1058 = vmatpush1.msra.mxu0 0.0
        %1059 = vmatprep.subr.mxu0 0.0
        %1060 = vmatpush1.msra.mxu0 0.0
        %1061 = vmatprep.subr.mxu0 0.0
        %1062 = vmatpush1.msra.mxu0 0.0
        %1063 = vmatprep.subr.mxu0 0.0
        %1064 = vmatpush1.msra.mxu0 0.0
        %1065 = vmatprep.subr.mxu0 0.0
        %1066 = vmatpush1.msra.mxu0 0.0
        %1067 = vmatprep.subr.mxu0 0.0
        %1068 = vmatpush1.msra.mxu0 0.0
        %1069 = vmatprep.subr.mxu0 0.0
        %1070 = vmatpush1.msra.mxu0 0.0
        %1071 = vmatprep.subr.mxu0 0.0
        %1072 = vmatpush1.msra.mxu0 0.0
        %1073 = vmatprep.subr.mxu0 0.0
        %1074 = vmatpush1.msra.mxu0 0.0
        %1075 = vmatprep.subr.mxu0 0.0
        %1076 = vmatpush1.msra.mxu0 0.0
        %1077 = vmatprep.mubr.f32.mxu0 0.0
        %1078 = vmatmul.mubr.f32.gmra.mrb[0].mxu0 %v1008
        %v1079 = vpop.f32.mrb[0].mxu0
        %v1080 = vadd.f32 %v995, %v1079
        %v1081 = vpop.f32.mrb[0].mxu0
        %v1082 = vadd.f32 %v999, %v1081
        %1083 = vmatprep.mubr.f32.mxu0 0.0
        %1084 = vmatmul.mubr.f32.gmra.mrb[0].mxu0 %v1011
        %v1085 = vpop.f32.mrb[0].mxu0
        %v1086 = vadd.f32 %v995, %v1085
        %v1087 = vpop.f32.mrb[0].mxu0
        %v1088 = vadd.f32 %v999, %v1087
        %1089 = vdwg.mxu0
        %1090 = vmatprep.subr.mxu0 0.0
        %1091 = vmatpush1.msra.mxu0 %v980
        %1092 = vmatprep.subr.mxu0 0.0
        %1093 = vmatpush1.msra.mxu0 %v983
        %1094 = vmatprep.subr.mxu0 0.0
        %1095 = vmatpush1.msra.mxu0 %v986
        %1096 = vmatprep.subr.mxu0 0.0
        %1097 = vmatpush1.msra.mxu0 %v989
        %1098 = vmatprep.subr.mxu0 0.0
        %1099 = vmatpush1.msra.mxu0 0.0
        %1100 = vmatprep.subr.mxu0 0.0
        %1101 = vmatpush1.msra.mxu0 0.0
        %1102 = vmatprep.subr.mxu0 0.0
        %1103 = vmatpush1.msra.mxu0 0.0
        %1104 = vmatprep.subr.mxu0 0.0
        %1105 = vmatpush1.msra.mxu0 0.0
        %1106 = vmatprep.subr.mxu0 0.0
        %1107 = vmatpush1.msra.mxu0 0.0
        %1108 = vmatprep.subr.mxu0 0.0
        %1109 = vmatpush1.msra.mxu0 0.0
        %1110 = vmatprep.subr.mxu0 0.0
        %1111 = vmatpush1.msra.mxu0 0.0
        %1112 = vmatprep.subr.mxu0 0.0
        %1113 = vmatpush1.msra.mxu0 0.0
        %1114 = vmatprep.subr.mxu0 0.0
        %1115 = vmatpush1.msra.mxu0 0.0
        %1116 = vmatprep.subr.mxu0 0.0
        %1117 = vmatpush1.msra.mxu0 0.0
        %1118 = vmatprep.subr.mxu0 0.0
        %1119 = vmatpush1.msra.mxu0 0.0
        %1120 = vmatprep.subr.mxu0 0.0
        %1121 = vmatpush1.msra.mxu0 0.0
        %1122 = vmatprep.subr.mxu0 0.0
        %1123 = vmatpush1.msra.mxu0 0.0
        %1124 = vmatprep.subr.mxu0 0.0
        %1125 = vmatpush1.msra.mxu0 0.0
        %1126 = vmatprep.subr.mxu0 0.0
        %1127 = vmatpush1.msra.mxu0 0.0
        %1128 = vmatprep.subr.mxu0 0.0
        %1129 = vmatpush1.msra.mxu0 0.0
        %1130 = vmatprep.subr.mxu0 0.0
        %1131 = vmatpush1.msra.mxu0 0.0
        %1132 = vmatprep.subr.mxu0 0.0
        %1133 = vmatpush1.msra.mxu0 0.0
        %1134 = vmatprep.subr.mxu0 0.0
        %1135 = vmatpush1.msra.mxu0 0.0
        %1136 = vmatprep.subr.mxu0 0.0
        %1137 = vmatpush1.msra.mxu0 0.0
        %1138 = vmatprep.subr.mxu0 0.0
        %1139 = vmatpush1.msra.mxu0 0.0
        %1140 = vmatprep.subr.mxu0 0.0
        %1141 = vmatpush1.msra.mxu0 0.0
        %1142 = vmatprep.subr.mxu0 0.0
        %1143 = vmatpush1.msra.mxu0 0.0
        %1144 = vmatprep.subr.mxu0 0.0
        %1145 = vmatpush1.msra.mxu0 0.0
        %1146 = vmatprep.subr.mxu0 0.0
        %1147 = vmatpush1.msra.mxu0 0.0
        %1148 = vmatprep.subr.mxu0 0.0
        %1149 = vmatpush1.msra.mxu0 0.0
        %1150 = vmatprep.subr.mxu0 0.0
        %1151 = vmatpush1.msra.mxu0 0.0
        %1152 = vmatprep.subr.mxu0 0.0
        %1153 = vmatpush1.msra.mxu0 0.0
        %1154 = vmatprep.mubr.f32.mxu0 0.0
        %1155 = vmatmul.mubr.f32.gmra.mrb[0].mxu0 %v1008
        %v1156 = vpop.f32.mrb[0].mxu0
        %v1157 = vadd.f32 %v1003, %v1156
        %v1158 = vpop.f32.mrb[0].mxu0
        %1159 = vmatprep.mubr.f32.mxu0 0.0
        %1160 = vmatmul.mubr.f32.gmra.mrb[0].mxu0 %v1011
        %v1161 = vpop.f32.mrb[0].mxu0
        %v1162 = vadd.f32 %v1003, %v1161
        %v1163 = vpop.f32.mrb[0].mxu0
        %1164 = vdwg.mxu0
        %1167 = vrot.lane.b32.xlu0 %v1080, 96
        %v1168 = vpop.permute.xlu0 %1167
        %1169 = vrot.lane.b32.xlu0 %v1086, 96
        %v1170 = vpop.permute.xlu0 %1169
        %1173 = vrot.lane.b32.xlu0 %v1080, 64
        %v1174 = vpop.permute.xlu0 %1173
        %1175 = vrot.lane.b32.xlu0 %v1086, 64
        %v1176 = vpop.permute.xlu0 %1175
        %1179 = vrot.lane.b32.xlu0 %v1080, 32
        %v1180 = vpop.permute.xlu0 %1179
        %1181 = vrot.lane.b32.xlu0 %v1086, 32
        %v1182 = vpop.permute.xlu0 %1181
        %v1185 = vcombine.low %v1080, %v1174
        %v1186 = vcombine.high %v1080, %v1174
        %v1188 = vunpack.c.l.s4 1983009808
        %v1189 = vunpack.c.0.s8 %v1188
        %v1190 = vlaneseq
        %v1191 = vshrl.u32 %v1190, 7
        %v1192 = vsub.s32 %v1189, %v1191
        %v1193 = vrot.slane %v1185, %v1192
        %v1195 = vunpack.c.l.s4 1983009808
        %v1196 = vunpack.c.0.s8 %v1195
        %v1197 = vlaneseq
        %v1198 = vshrl.u32 %v1197, 7
        %v1199 = vsub.s32 %v1196, %v1198
        %v1200 = vrot.slane %v1186, %v1199
        %v1201 = vcombine.low %v1168, %v1180
        %v1202 = vcombine.high %v1168, %v1180
        %v1204 = vunpack.c.l.s4 1983009808
        %v1205 = vunpack.c.0.s8 %v1204
        %v1206 = vlaneseq
        %v1207 = vshrl.u32 %v1206, 7
        %v1208 = vsub.s32 %v1205, %v1207
        %v1209 = vrot.slane %v1201, %v1208
        %v1211 = vunpack.c.l.s4 1983009808
        %v1212 = vunpack.c.0.s8 %v1211
        %v1213 = vlaneseq
        %v1214 = vshrl.u32 %v1213, 7
        %v1215 = vsub.s32 %v1212, %v1214
        %v1216 = vrot.slane %v1202, %v1215
        %v1217 = vcombine.low %v1193, %v1209
        %v1218 = vcombine.high %v1193, %v1209
        %v1220 = vunpack.c.l.s4 1934713408
        %v1221 = vunpack.c.0.s8 %v1220
        %v1222 = vlaneseq
        %v1223 = vshrl.u32 %v1222, 7
        %v1224 = vsub.s32 %v1221, %v1223
        %v1225 = vrot.slane %v1217, %v1224
        %v1227 = vunpack.c.l.s4 1934713408
        %v1228 = vunpack.c.0.s8 %v1227
        %v1229 = vlaneseq
        %v1230 = vshrl.u32 %v1229, 7
        %v1231 = vsub.s32 %v1228, %v1230
        %v1232 = vrot.slane %v1218, %v1231
        %v1233 = vcombine.low %v1200, %v1216
        %v1234 = vcombine.high %v1200, %v1216
        %v1236 = vunpack.c.l.s4 1934713408
        %v1237 = vunpack.c.0.s8 %v1236
        %v1238 = vlaneseq
        %v1239 = vshrl.u32 %v1238, 7
        %v1240 = vsub.s32 %v1237, %v1239
        %v1241 = vrot.slane %v1233, %v1240
        %v1243 = vunpack.c.l.s4 1934713408
        %v1244 = vunpack.c.0.s8 %v1243
        %v1245 = vlaneseq
        %v1246 = vshrl.u32 %v1245, 7
        %v1247 = vsub.s32 %v1244, %v1246
        %v1248 = vrot.slane %v1234, %v1247
        %v1249 = vcombine.high %v1225, 0.0
        %v1250 = vcombine.high %v1232, 0.0
        %v1251 = vcombine.high %v1241, 0.0
        %v1252 = vcombine.high %v1248, 0.0
        %v1253 = vcombine.low %v1086, %v1176
        %v1254 = vcombine.high %v1086, %v1176
        %v1256 = vunpack.c.l.s4 1983009808
        %v1257 = vunpack.c.0.s8 %v1256
        %v1258 = vlaneseq
        %v1259 = vshrl.u32 %v1258, 7
        %v1260 = vsub.s32 %v1257, %v1259
        %v1261 = vrot.slane %v1253, %v1260
        %v1263 = vunpack.c.l.s4 1983009808
        %v1264 = vunpack.c.0.s8 %v1263
        %v1265 = vlaneseq
        %v1266 = vshrl.u32 %v1265, 7
        %v1267 = vsub.s32 %v1264, %v1266
        %v1268 = vrot.slane %v1254, %v1267
        %v1269 = vcombine.low %v1170, %v1182
        %v1270 = vcombine.high %v1170, %v1182
        %v1272 = vunpack.c.l.s4 1983009808
        %v1273 = vunpack.c.0.s8 %v1272
        %v1274 = vlaneseq
        %v1275 = vshrl.u32 %v1274, 7
        %v1276 = vsub.s32 %v1273, %v1275
        %v1277 = vrot.slane %v1269, %v1276
        %v1279 = vunpack.c.l.s4 1983009808
        %v1280 = vunpack.c.0.s8 %v1279
        %v1281 = vlaneseq
        %v1282 = vshrl.u32 %v1281, 7
        %v1283 = vsub.s32 %v1280, %v1282
        %v1284 = vrot.slane %v1270, %v1283
        %v1285 = vcombine.low %v1261, %v1277
        %v1286 = vcombine.high %v1261, %v1277
        %v1288 = vunpack.c.l.s4 1934713408
        %v1289 = vunpack.c.0.s8 %v1288
        %v1290 = vlaneseq
        %v1291 = vshrl.u32 %v1290, 7
        %v1292 = vsub.s32 %v1289, %v1291
        %v1293 = vrot.slane %v1285, %v1292
        %v1295 = vunpack.c.l.s4 1934713408
        %v1296 = vunpack.c.0.s8 %v1295
        %v1297 = vlaneseq
        %v1298 = vshrl.u32 %v1297, 7
        %v1299 = vsub.s32 %v1296, %v1298
        %v1300 = vrot.slane %v1286, %v1299
        %v1301 = vcombine.low %v1268, %v1284
        %v1302 = vcombine.high %v1268, %v1284
        %v1304 = vunpack.c.l.s4 1934713408
        %v1305 = vunpack.c.0.s8 %v1304
        %v1306 = vlaneseq
        %v1307 = vshrl.u32 %v1306, 7
        %v1308 = vsub.s32 %v1305, %v1307
        %v1309 = vrot.slane %v1301, %v1308
        %v1311 = vunpack.c.l.s4 1934713408
        %v1312 = vunpack.c.0.s8 %v1311
        %v1313 = vlaneseq
        %v1314 = vshrl.u32 %v1313, 7
        %v1315 = vsub.s32 %v1312, %v1314
        %v1316 = vrot.slane %v1302, %v1315
        %v1317 = vcombine.high %v1293, 0.0
        %v1318 = vcombine.high %v1300, 0.0
        %v1319 = vcombine.high %v1309, 0.0
        %v1320 = vcombine.high %v1316, 0.0
        %v1321 = vcombine.low %v1225, %v1232
        %v1323 = vunpack.c.l.s4 1983009808
        %v1324 = vunpack.c.0.s8 %v1323
        %v1325 = vlaneseq
        %v1326 = vshrl.u32 %v1325, 7
        %v1327 = vsub.s32 %v1324, %v1326
        %v1328 = vrot.slane %v1321, %v1327
        %v1329 = vcombine.low %v1249, %v1250
        %v1331 = vunpack.c.l.s4 1983009808
        %v1332 = vunpack.c.0.s8 %v1331
        %v1333 = vlaneseq
        %v1334 = vshrl.u32 %v1333, 7
        %v1335 = vsub.s32 %v1332, %v1334
        %v1336 = vrot.slane %v1329, %v1335
        %v1337 = vcombine.low %v1241, %v1248
        %v1339 = vunpack.c.l.s4 1983009808
        %v1340 = vunpack.c.0.s8 %v1339
        %v1341 = vlaneseq
        %v1342 = vshrl.u32 %v1341, 7
        %v1343 = vsub.s32 %v1340, %v1342
        %v1344 = vrot.slane %v1337, %v1343
        %v1345 = vcombine.low %v1251, %v1252
        %v1347 = vunpack.c.l.s4 1983009808
        %v1348 = vunpack.c.0.s8 %v1347
        %v1349 = vlaneseq
        %v1350 = vshrl.u32 %v1349, 7
        %v1351 = vsub.s32 %v1348, %v1350
        %v1352 = vrot.slane %v1345, %v1351
        %v1353 = vcombine.low %v1328, %v1336
        %v1354 = vcombine.high %v1328, %v1336
        %v1356 = vunpack.c.l.s4 1934713408
        %v1357 = vunpack.c.0.s8 %v1356
        %v1358 = vlaneseq
        %v1359 = vshrl.u32 %v1358, 7
        %v1360 = vsub.s32 %v1357, %v1359
        %v1361 = vrot.slane %v1353, %v1360
        %v1363 = vunpack.c.l.s4 1934713408
        %v1364 = vunpack.c.0.s8 %v1363
        %v1365 = vlaneseq
        %v1366 = vshrl.u32 %v1365, 7
        %v1367 = vsub.s32 %v1364, %v1366
        %v1368 = vrot.slane %v1354, %v1367
        %v1369 = vcombine.low %v1344, %v1352
        %v1370 = vcombine.high %v1344, %v1352
        %v1372 = vunpack.c.l.s4 1934713408
        %v1373 = vunpack.c.0.s8 %v1372
        %v1374 = vlaneseq
        %v1375 = vshrl.u32 %v1374, 7
        %v1376 = vsub.s32 %v1373, %v1375
        %v1377 = vrot.slane %v1369, %v1376
        %v1379 = vunpack.c.l.s4 1934713408
        %v1380 = vunpack.c.0.s8 %v1379
        %v1381 = vlaneseq
        %v1382 = vshrl.u32 %v1381, 7
        %v1383 = vsub.s32 %v1380, %v1382
        %v1384 = vrot.slane %v1370, %v1383
        %v1385 = vcombine.low %v1361, %v1377
        %v1386 = vcombine.high %v1361, %v1377
        %v1387 = vcombine.low %v1368, %v1384
        %v1388 = vcombine.high %v1368, %v1384
        %v1389 = vcombine.low %v1293, %v1300
        %v1391 = vunpack.c.l.s4 1983009808
        %v1392 = vunpack.c.0.s8 %v1391
        %v1393 = vlaneseq
        %v1394 = vshrl.u32 %v1393, 7
        %v1395 = vsub.s32 %v1392, %v1394
        %v1396 = vrot.slane %v1389, %v1395
        %v1397 = vcombine.low %v1317, %v1318
        %v1399 = vunpack.c.l.s4 1983009808
        %v1400 = vunpack.c.0.s8 %v1399
        %v1401 = vlaneseq
        %v1402 = vshrl.u32 %v1401, 7
        %v1403 = vsub.s32 %v1400, %v1402
        %v1404 = vrot.slane %v1397, %v1403
        %v1405 = vcombine.low %v1309, %v1316
        %v1407 = vunpack.c.l.s4 1983009808
        %v1408 = vunpack.c.0.s8 %v1407
        %v1409 = vlaneseq
        %v1410 = vshrl.u32 %v1409, 7
        %v1411 = vsub.s32 %v1408, %v1410
        %v1412 = vrot.slane %v1405, %v1411
        %v1413 = vcombine.low %v1319, %v1320
        %v1415 = vunpack.c.l.s4 1983009808
        %v1416 = vunpack.c.0.s8 %v1415
        %v1417 = vlaneseq
        %v1418 = vshrl.u32 %v1417, 7
        %v1419 = vsub.s32 %v1416, %v1418
        %v1420 = vrot.slane %v1413, %v1419
        %v1421 = vcombine.low %v1396, %v1404
        %v1422 = vcombine.high %v1396, %v1404
        %v1424 = vunpack.c.l.s4 1934713408
        %v1425 = vunpack.c.0.s8 %v1424
        %v1426 = vlaneseq
        %v1427 = vshrl.u32 %v1426, 7
        %v1428 = vsub.s32 %v1425, %v1427
        %v1429 = vrot.slane %v1421, %v1428
        %v1431 = vunpack.c.l.s4 1934713408
        %v1432 = vunpack.c.0.s8 %v1431
        %v1433 = vlaneseq
        %v1434 = vshrl.u32 %v1433, 7
        %v1435 = vsub.s32 %v1432, %v1434
        %v1436 = vrot.slane %v1422, %v1435
        %v1437 = vcombine.low %v1412, %v1420
        %v1438 = vcombine.high %v1412, %v1420
        %v1440 = vunpack.c.l.s4 1934713408
        %v1441 = vunpack.c.0.s8 %v1440
        %v1442 = vlaneseq
        %v1443 = vshrl.u32 %v1442, 7
        %v1444 = vsub.s32 %v1441, %v1443
        %v1445 = vrot.slane %v1437, %v1444
        %v1447 = vunpack.c.l.s4 1934713408
        %v1448 = vunpack.c.0.s8 %v1447
        %v1449 = vlaneseq
        %v1450 = vshrl.u32 %v1449, 7
        %v1451 = vsub.s32 %v1448, %v1450
        %v1452 = vrot.slane %v1438, %v1451
        %v1453 = vcombine.low %v1429, %v1445
        %v1454 = vcombine.high %v1429, %v1445
        %v1455 = vcombine.low %v1436, %v1452
        %v1456 = vcombine.high %v1436, %v1452
        %1459 = vrot.lane.b32.xlu0 %v1082, 96
        %v1460 = vpop.permute.xlu0 %1459
        %1461 = vrot.lane.b32.xlu0 %v1088, 96
        %v1462 = vpop.permute.xlu0 %1461
        %1465 = vrot.lane.b32.xlu0 %v1082, 64
        %v1466 = vpop.permute.xlu0 %1465
        %1467 = vrot.lane.b32.xlu0 %v1088, 64
        %v1468 = vpop.permute.xlu0 %1467
        %1471 = vrot.lane.b32.xlu0 %v1082, 32
        %v1472 = vpop.permute.xlu0 %1471
        %1473 = vrot.lane.b32.xlu0 %v1088, 32
        %v1474 = vpop.permute.xlu0 %1473
        %v1477 = vcombine.low %v1082, %v1466
        %v1478 = vcombine.high %v1082, %v1466
        %v1480 = vunpack.c.l.s4 1983009808
        %v1481 = vunpack.c.0.s8 %v1480
        %v1482 = vlaneseq
        %v1483 = vshrl.u32 %v1482, 7
        %v1484 = vsub.s32 %v1481, %v1483
        %v1485 = vrot.slane %v1477, %v1484
        %v1487 = vunpack.c.l.s4 1983009808
        %v1488 = vunpack.c.0.s8 %v1487
        %v1489 = vlaneseq
        %v1490 = vshrl.u32 %v1489, 7
        %v1491 = vsub.s32 %v1488, %v1490
        %v1492 = vrot.slane %v1478, %v1491
        %v1493 = vcombine.low %v1460, %v1472
        %v1494 = vcombine.high %v1460, %v1472
        %v1496 = vunpack.c.l.s4 1983009808
        %v1497 = vunpack.c.0.s8 %v1496
        %v1498 = vlaneseq
        %v1499 = vshrl.u32 %v1498, 7
        %v1500 = vsub.s32 %v1497, %v1499
        %v1501 = vrot.slane %v1493, %v1500
        %v1503 = vunpack.c.l.s4 1983009808
        %v1504 = vunpack.c.0.s8 %v1503
        %v1505 = vlaneseq
        %v1506 = vshrl.u32 %v1505, 7
        %v1507 = vsub.s32 %v1504, %v1506
        %v1508 = vrot.slane %v1494, %v1507
        %v1509 = vcombine.low %v1485, %v1501
        %v1510 = vcombine.high %v1485, %v1501
        %v1512 = vunpack.c.l.s4 1934713408
        %v1513 = vunpack.c.0.s8 %v1512
        %v1514 = vlaneseq
        %v1515 = vshrl.u32 %v1514, 7
        %v1516 = vsub.s32 %v1513, %v1515
        %v1517 = vrot.slane %v1509, %v1516
        %v1519 = vunpack.c.l.s4 1934713408
        %v1520 = vunpack.c.0.s8 %v1519
        %v1521 = vlaneseq
        %v1522 = vshrl.u32 %v1521, 7
        %v1523 = vsub.s32 %v1520, %v1522
        %v1524 = vrot.slane %v1510, %v1523
        %v1525 = vcombine.low %v1492, %v1508
        %v1526 = vcombine.high %v1492, %v1508
        %v1528 = vunpack.c.l.s4 1934713408
        %v1529 = vunpack.c.0.s8 %v1528
        %v1530 = vlaneseq
        %v1531 = vshrl.u32 %v1530, 7
        %v1532 = vsub.s32 %v1529, %v1531
        %v1533 = vrot.slane %v1525, %v1532
        %v1535 = vunpack.c.l.s4 1934713408
        %v1536 = vunpack.c.0.s8 %v1535
        %v1537 = vlaneseq
        %v1538 = vshrl.u32 %v1537, 7
        %v1539 = vsub.s32 %v1536, %v1538
        %v1540 = vrot.slane %v1526, %v1539
        %v1541 = vcombine.high %v1517, 0.0
        %v1542 = vcombine.high %v1524, 0.0
        %v1543 = vcombine.high %v1533, 0.0
        %v1544 = vcombine.high %v1540, 0.0
        %v1545 = vcombine.low %v1088, %v1468
        %v1546 = vcombine.high %v1088, %v1468
        %v1548 = vunpack.c.l.s4 1983009808
        %v1549 = vunpack.c.0.s8 %v1548
        %v1550 = vlaneseq
        %v1551 = vshrl.u32 %v1550, 7
        %v1552 = vsub.s32 %v1549, %v1551
        %v1553 = vrot.slane %v1545, %v1552
        %v1555 = vunpack.c.l.s4 1983009808
        %v1556 = vunpack.c.0.s8 %v1555
        %v1557 = vlaneseq
        %v1558 = vshrl.u32 %v1557, 7
        %v1559 = vsub.s32 %v1556, %v1558
        %v1560 = vrot.slane %v1546, %v1559
        %v1561 = vcombine.low %v1462, %v1474
        %v1562 = vcombine.high %v1462, %v1474
        %v1564 = vunpack.c.l.s4 1983009808
        %v1565 = vunpack.c.0.s8 %v1564
        %v1566 = vlaneseq
        %v1567 = vshrl.u32 %v1566, 7
        %v1568 = vsub.s32 %v1565, %v1567
        %v1569 = vrot.slane %v1561, %v1568
        %v1571 = vunpack.c.l.s4 1983009808
        %v1572 = vunpack.c.0.s8 %v1571
        %v1573 = vlaneseq
        %v1574 = vshrl.u32 %v1573, 7
        %v1575 = vsub.s32 %v1572, %v1574
        %v1576 = vrot.slane %v1562, %v1575
        %v1577 = vcombine.low %v1553, %v1569
        %v1578 = vcombine.high %v1553, %v1569
        %v1580 = vunpack.c.l.s4 1934713408
        %v1581 = vunpack.c.0.s8 %v1580
        %v1582 = vlaneseq
        %v1583 = vshrl.u32 %v1582, 7
        %v1584 = vsub.s32 %v1581, %v1583
        %v1585 = vrot.slane %v1577, %v1584
        %v1587 = vunpack.c.l.s4 1934713408
        %v1588 = vunpack.c.0.s8 %v1587
        %v1589 = vlaneseq
        %v1590 = vshrl.u32 %v1589, 7
        %v1591 = vsub.s32 %v1588, %v1590
        %v1592 = vrot.slane %v1578, %v1591
        %v1593 = vcombine.low %v1560, %v1576
        %v1594 = vcombine.high %v1560, %v1576
        %v1596 = vunpack.c.l.s4 1934713408
        %v1597 = vunpack.c.0.s8 %v1596
        %v1598 = vlaneseq
        %v1599 = vshrl.u32 %v1598, 7
        %v1600 = vsub.s32 %v1597, %v1599
        %v1601 = vrot.slane %v1593, %v1600
        %v1603 = vunpack.c.l.s4 1934713408
        %v1604 = vunpack.c.0.s8 %v1603
        %v1605 = vlaneseq
        %v1606 = vshrl.u32 %v1605, 7
        %v1607 = vsub.s32 %v1604, %v1606
        %v1608 = vrot.slane %v1594, %v1607
        %v1609 = vcombine.high %v1585, 0.0
        %v1610 = vcombine.high %v1592, 0.0
        %v1611 = vcombine.high %v1601, 0.0
        %v1612 = vcombine.high %v1608, 0.0
        %v1613 = vcombine.low %v1517, %v1524
        %v1615 = vunpack.c.l.s4 1983009808
        %v1616 = vunpack.c.0.s8 %v1615
        %v1617 = vlaneseq
        %v1618 = vshrl.u32 %v1617, 7
        %v1619 = vsub.s32 %v1616, %v1618
        %v1620 = vrot.slane %v1613, %v1619
        %v1621 = vcombine.low %v1541, %v1542
        %v1623 = vunpack.c.l.s4 1983009808
        %v1624 = vunpack.c.0.s8 %v1623
        %v1625 = vlaneseq
        %v1626 = vshrl.u32 %v1625, 7
        %v1627 = vsub.s32 %v1624, %v1626
        %v1628 = vrot.slane %v1621, %v1627
        %v1629 = vcombine.low %v1533, %v1540
        %v1631 = vunpack.c.l.s4 1983009808
        %v1632 = vunpack.c.0.s8 %v1631
        %v1633 = vlaneseq
        %v1634 = vshrl.u32 %v1633, 7
        %v1635 = vsub.s32 %v1632, %v1634
        %v1636 = vrot.slane %v1629, %v1635
        %v1637 = vcombine.low %v1543, %v1544
        %v1639 = vunpack.c.l.s4 1983009808
        %v1640 = vunpack.c.0.s8 %v1639
        %v1641 = vlaneseq
        %v1642 = vshrl.u32 %v1641, 7
        %v1643 = vsub.s32 %v1640, %v1642
        %v1644 = vrot.slane %v1637, %v1643
        %v1645 = vcombine.low %v1620, %v1628
        %v1646 = vcombine.high %v1620, %v1628
        %v1648 = vunpack.c.l.s4 1934713408
        %v1649 = vunpack.c.0.s8 %v1648
        %v1650 = vlaneseq
        %v1651 = vshrl.u32 %v1650, 7
        %v1652 = vsub.s32 %v1649, %v1651
        %v1653 = vrot.slane %v1645, %v1652
        %v1655 = vunpack.c.l.s4 1934713408
        %v1656 = vunpack.c.0.s8 %v1655
        %v1657 = vlaneseq
        %v1658 = vshrl.u32 %v1657, 7
        %v1659 = vsub.s32 %v1656, %v1658
        %v1660 = vrot.slane %v1646, %v1659
        %v1661 = vcombine.low %v1636, %v1644
        %v1662 = vcombine.high %v1636, %v1644
        %v1664 = vunpack.c.l.s4 1934713408
        %v1665 = vunpack.c.0.s8 %v1664
        %v1666 = vlaneseq
        %v1667 = vshrl.u32 %v1666, 7
        %v1668 = vsub.s32 %v1665, %v1667
        %v1669 = vrot.slane %v1661, %v1668
        %v1671 = vunpack.c.l.s4 1934713408
        %v1672 = vunpack.c.0.s8 %v1671
        %v1673 = vlaneseq
        %v1674 = vshrl.u32 %v1673, 7
        %v1675 = vsub.s32 %v1672, %v1674
        %v1676 = vrot.slane %v1662, %v1675
        %v1677 = vcombine.low %v1653, %v1669
        %v1678 = vcombine.high %v1653, %v1669
        %v1679 = vcombine.low %v1660, %v1676
        %v1680 = vcombine.high %v1660, %v1676
        %v1681 = vcombine.low %v1585, %v1592
        %v1683 = vunpack.c.l.s4 1983009808
        %v1684 = vunpack.c.0.s8 %v1683
        %v1685 = vlaneseq
        %v1686 = vshrl.u32 %v1685, 7
        %v1687 = vsub.s32 %v1684, %v1686
        %v1688 = vrot.slane %v1681, %v1687
        %v1689 = vcombine.low %v1609, %v1610
        %v1691 = vunpack.c.l.s4 1983009808
        %v1692 = vunpack.c.0.s8 %v1691
        %v1693 = vlaneseq
        %v1694 = vshrl.u32 %v1693, 7
        %v1695 = vsub.s32 %v1692, %v1694
        %v1696 = vrot.slane %v1689, %v1695
        %v1697 = vcombine.low %v1601, %v1608
        %v1699 = vunpack.c.l.s4 1983009808
        %v1700 = vunpack.c.0.s8 %v1699
        %v1701 = vlaneseq
        %v1702 = vshrl.u32 %v1701, 7
        %v1703 = vsub.s32 %v1700, %v1702
        %v1704 = vrot.slane %v1697, %v1703
        %v1705 = vcombine.low %v1611, %v1612
        %v1707 = vunpack.c.l.s4 1983009808
        %v1708 = vunpack.c.0.s8 %v1707
        %v1709 = vlaneseq
        %v1710 = vshrl.u32 %v1709, 7
        %v1711 = vsub.s32 %v1708, %v1710
        %v1712 = vrot.slane %v1705, %v1711
        %v1713 = vcombine.low %v1688, %v1696
        %v1714 = vcombine.high %v1688, %v1696
        %v1716 = vunpack.c.l.s4 1934713408
        %v1717 = vunpack.c.0.s8 %v1716
        %v1718 = vlaneseq
        %v1719 = vshrl.u32 %v1718, 7
        %v1720 = vsub.s32 %v1717, %v1719
        %v1721 = vrot.slane %v1713, %v1720
        %v1723 = vunpack.c.l.s4 1934713408
        %v1724 = vunpack.c.0.s8 %v1723
        %v1725 = vlaneseq
        %v1726 = vshrl.u32 %v1725, 7
        %v1727 = vsub.s32 %v1724, %v1726
        %v1728 = vrot.slane %v1714, %v1727
        %v1729 = vcombine.low %v1704, %v1712
        %v1730 = vcombine.high %v1704, %v1712
        %v1732 = vunpack.c.l.s4 1934713408
        %v1733 = vunpack.c.0.s8 %v1732
        %v1734 = vlaneseq
        %v1735 = vshrl.u32 %v1734, 7
        %v1736 = vsub.s32 %v1733, %v1735
        %v1737 = vrot.slane %v1729, %v1736
        %v1739 = vunpack.c.l.s4 1934713408
        %v1740 = vunpack.c.0.s8 %v1739
        %v1741 = vlaneseq
        %v1742 = vshrl.u32 %v1741, 7
        %v1743 = vsub.s32 %v1740, %v1742
        %v1744 = vrot.slane %v1730, %v1743
        %v1745 = vcombine.low %v1721, %v1737
        %v1746 = vcombine.high %v1721, %v1737
        %v1747 = vcombine.low %v1728, %v1744
        %v1748 = vcombine.high %v1728, %v1744
        %1751 = vrot.lane.b32.xlu0 %v1157, 96
        %v1752 = vpop.permute.xlu0 %1751
        %1753 = vrot.lane.b32.xlu0 %v1162, 96
        %v1754 = vpop.permute.xlu0 %1753
        %1757 = vrot.lane.b32.xlu0 %v1157, 64
        %v1758 = vpop.permute.xlu0 %1757
        %1759 = vrot.lane.b32.xlu0 %v1162, 64
        %v1760 = vpop.permute.xlu0 %1759
        %1763 = vrot.lane.b32.xlu0 %v1157, 32
        %v1764 = vpop.permute.xlu0 %1763
        %1765 = vrot.lane.b32.xlu0 %v1162, 32
        %v1766 = vpop.permute.xlu0 %1765
        %v1769 = vcombine.low %v1157, %v1758
        %v1770 = vcombine.high %v1157, %v1758
        %v1772 = vunpack.c.l.s4 1983009808
        %v1773 = vunpack.c.0.s8 %v1772
        %v1774 = vlaneseq
        %v1775 = vshrl.u32 %v1774, 7
        %v1776 = vsub.s32 %v1773, %v1775
        %v1777 = vrot.slane %v1769, %v1776
        %v1779 = vunpack.c.l.s4 1983009808
        %v1780 = vunpack.c.0.s8 %v1779
        %v1781 = vlaneseq
        %v1782 = vshrl.u32 %v1781, 7
        %v1783 = vsub.s32 %v1780, %v1782
        %v1784 = vrot.slane %v1770, %v1783
        %v1785 = vcombine.low %v1752, %v1764
        %v1786 = vcombine.high %v1752, %v1764
        %v1788 = vunpack.c.l.s4 1983009808
        %v1789 = vunpack.c.0.s8 %v1788
        %v1790 = vlaneseq
        %v1791 = vshrl.u32 %v1790, 7
        %v1792 = vsub.s32 %v1789, %v1791
        %v1793 = vrot.slane %v1785, %v1792
        %v1795 = vunpack.c.l.s4 1983009808
        %v1796 = vunpack.c.0.s8 %v1795
        %v1797 = vlaneseq
        %v1798 = vshrl.u32 %v1797, 7
        %v1799 = vsub.s32 %v1796, %v1798
        %v1800 = vrot.slane %v1786, %v1799
        %v1801 = vcombine.low %v1777, %v1793
        %v1802 = vcombine.high %v1777, %v1793
        %v1804 = vunpack.c.l.s4 1934713408
        %v1805 = vunpack.c.0.s8 %v1804
        %v1806 = vlaneseq
        %v1807 = vshrl.u32 %v1806, 7
        %v1808 = vsub.s32 %v1805, %v1807
        %v1809 = vrot.slane %v1801, %v1808
        %v1811 = vunpack.c.l.s4 1934713408
        %v1812 = vunpack.c.0.s8 %v1811
        %v1813 = vlaneseq
        %v1814 = vshrl.u32 %v1813, 7
        %v1815 = vsub.s32 %v1812, %v1814
        %v1816 = vrot.slane %v1802, %v1815
        %v1817 = vcombine.low %v1784, %v1800
        %v1818 = vcombine.high %v1784, %v1800
        %v1820 = vunpack.c.l.s4 1934713408
        %v1821 = vunpack.c.0.s8 %v1820
        %v1822 = vlaneseq
        %v1823 = vshrl.u32 %v1822, 7
        %v1824 = vsub.s32 %v1821, %v1823
        %v1825 = vrot.slane %v1817, %v1824
        %v1827 = vunpack.c.l.s4 1934713408
        %v1828 = vunpack.c.0.s8 %v1827
        %v1829 = vlaneseq
        %v1830 = vshrl.u32 %v1829, 7
        %v1831 = vsub.s32 %v1828, %v1830
        %v1832 = vrot.slane %v1818, %v1831
        %v1833 = vcombine.high %v1809, 0.0
        %v1834 = vcombine.high %v1816, 0.0
        %v1835 = vcombine.high %v1825, 0.0
        %v1836 = vcombine.high %v1832, 0.0
        %v1837 = vcombine.low %v1162, %v1760
        %v1838 = vcombine.high %v1162, %v1760
        %v1840 = vunpack.c.l.s4 1983009808
        %v1841 = vunpack.c.0.s8 %v1840
        %v1842 = vlaneseq
        %v1843 = vshrl.u32 %v1842, 7
        %v1844 = vsub.s32 %v1841, %v1843
        %v1845 = vrot.slane %v1837, %v1844
        %v1847 = vunpack.c.l.s4 1983009808
        %v1848 = vunpack.c.0.s8 %v1847
        %v1849 = vlaneseq
        %v1850 = vshrl.u32 %v1849, 7
        %v1851 = vsub.s32 %v1848, %v1850
        %v1852 = vrot.slane %v1838, %v1851
        %v1853 = vcombine.low %v1754, %v1766
        %v1854 = vcombine.high %v1754, %v1766
        %v1856 = vunpack.c.l.s4 1983009808
        %v1857 = vunpack.c.0.s8 %v1856
        %v1858 = vlaneseq
        %v1859 = vshrl.u32 %v1858, 7
        %v1860 = vsub.s32 %v1857, %v1859
        %v1861 = vrot.slane %v1853, %v1860
        %v1863 = vunpack.c.l.s4 1983009808
        %v1864 = vunpack.c.0.s8 %v1863
        %v1865 = vlaneseq
        %v1866 = vshrl.u32 %v1865, 7
        %v1867 = vsub.s32 %v1864, %v1866
        %v1868 = vrot.slane %v1854, %v1867
        %v1869 = vcombine.low %v1845, %v1861
        %v1870 = vcombine.high %v1845, %v1861
        %v1872 = vunpack.c.l.s4 1934713408
        %v1873 = vunpack.c.0.s8 %v1872
        %v1874 = vlaneseq
        %v1875 = vshrl.u32 %v1874, 7
        %v1876 = vsub.s32 %v1873, %v1875
        %v1877 = vrot.slane %v1869, %v1876
        %v1879 = vunpack.c.l.s4 1934713408
        %v1880 = vunpack.c.0.s8 %v1879
        %v1881 = vlaneseq
        %v1882 = vshrl.u32 %v1881, 7
        %v1883 = vsub.s32 %v1880, %v1882
        %v1884 = vrot.slane %v1870, %v1883
        %v1885 = vcombine.low %v1852, %v1868
        %v1886 = vcombine.high %v1852, %v1868
        %v1888 = vunpack.c.l.s4 1934713408
        %v1889 = vunpack.c.0.s8 %v1888
        %v1890 = vlaneseq
        %v1891 = vshrl.u32 %v1890, 7
        %v1892 = vsub.s32 %v1889, %v1891
        %v1893 = vrot.slane %v1885, %v1892
        %v1895 = vunpack.c.l.s4 1934713408
        %v1896 = vunpack.c.0.s8 %v1895
        %v1897 = vlaneseq
        %v1898 = vshrl.u32 %v1897, 7
        %v1899 = vsub.s32 %v1896, %v1898
        %v1900 = vrot.slane %v1886, %v1899
        %v1901 = vcombine.high %v1877, 0.0
        %v1902 = vcombine.high %v1884, 0.0
        %v1903 = vcombine.high %v1893, 0.0
        %v1904 = vcombine.high %v1900, 0.0
        %v1905 = vcombine.low %v1809, %v1816
        %v1907 = vunpack.c.l.s4 1983009808
        %v1908 = vunpack.c.0.s8 %v1907
        %v1909 = vlaneseq
        %v1910 = vshrl.u32 %v1909, 7
        %v1911 = vsub.s32 %v1908, %v1910
        %v1912 = vrot.slane %v1905, %v1911
        %v1913 = vcombine.low %v1833, %v1834
        %v1915 = vunpack.c.l.s4 1983009808
        %v1916 = vunpack.c.0.s8 %v1915
        %v1917 = vlaneseq
        %v1918 = vshrl.u32 %v1917, 7
        %v1919 = vsub.s32 %v1916, %v1918
        %v1920 = vrot.slane %v1913, %v1919
        %v1921 = vcombine.low %v1825, %v1832
        %v1923 = vunpack.c.l.s4 1983009808
        %v1924 = vunpack.c.0.s8 %v1923
        %v1925 = vlaneseq
        %v1926 = vshrl.u32 %v1925, 7
        %v1927 = vsub.s32 %v1924, %v1926
        %v1928 = vrot.slane %v1921, %v1927
        %v1929 = vcombine.low %v1835, %v1836
        %v1931 = vunpack.c.l.s4 1983009808
        %v1932 = vunpack.c.0.s8 %v1931
        %v1933 = vlaneseq
        %v1934 = vshrl.u32 %v1933, 7
        %v1935 = vsub.s32 %v1932, %v1934
        %v1936 = vrot.slane %v1929, %v1935
        %v1937 = vcombine.low %v1912, %v1920
        %v1938 = vcombine.high %v1912, %v1920
        %v1940 = vunpack.c.l.s4 1934713408
        %v1941 = vunpack.c.0.s8 %v1940
        %v1942 = vlaneseq
        %v1943 = vshrl.u32 %v1942, 7
        %v1944 = vsub.s32 %v1941, %v1943
        %v1945 = vrot.slane %v1937, %v1944
        %v1947 = vunpack.c.l.s4 1934713408
        %v1948 = vunpack.c.0.s8 %v1947
        %v1949 = vlaneseq
        %v1950 = vshrl.u32 %v1949, 7
        %v1951 = vsub.s32 %v1948, %v1950
        %v1952 = vrot.slane %v1938, %v1951
        %v1953 = vcombine.low %v1928, %v1936
        %v1954 = vcombine.high %v1928, %v1936
        %v1956 = vunpack.c.l.s4 1934713408
        %v1957 = vunpack.c.0.s8 %v1956
        %v1958 = vlaneseq
        %v1959 = vshrl.u32 %v1958, 7
        %v1960 = vsub.s32 %v1957, %v1959
        %v1961 = vrot.slane %v1953, %v1960
        %v1963 = vunpack.c.l.s4 1934713408
        %v1964 = vunpack.c.0.s8 %v1963
        %v1965 = vlaneseq
        %v1966 = vshrl.u32 %v1965, 7
        %v1967 = vsub.s32 %v1964, %v1966
        %v1968 = vrot.slane %v1954, %v1967
        %v1969 = vcombine.low %v1945, %v1961
        %v1970 = vcombine.high %v1945, %v1961
        %v1971 = vcombine.low %v1952, %v1968
        %v1972 = vcombine.high %v1952, %v1968
        %v1973 = vcombine.low %v1877, %v1884
        %v1975 = vunpack.c.l.s4 1983009808
        %v1976 = vunpack.c.0.s8 %v1975
        %v1977 = vlaneseq
        %v1978 = vshrl.u32 %v1977, 7
        %v1979 = vsub.s32 %v1976, %v1978
        %v1980 = vrot.slane %v1973, %v1979
        %v1981 = vcombine.low %v1901, %v1902
        %v1983 = vunpack.c.l.s4 1983009808
        %v1984 = vunpack.c.0.s8 %v1983
        %v1985 = vlaneseq
        %v1986 = vshrl.u32 %v1985, 7
        %v1987 = vsub.s32 %v1984, %v1986
        %v1988 = vrot.slane %v1981, %v1987
        %v1989 = vcombine.low %v1893, %v1900
        %v1991 = vunpack.c.l.s4 1983009808
        %v1992 = vunpack.c.0.s8 %v1991
        %v1993 = vlaneseq
        %v1994 = vshrl.u32 %v1993, 7
        %v1995 = vsub.s32 %v1992, %v1994
        %v1996 = vrot.slane %v1989, %v1995
        %v1997 = vcombine.low %v1903, %v1904
        %v1999 = vunpack.c.l.s4 1983009808
        %v2000 = vunpack.c.0.s8 %v1999
        %v2001 = vlaneseq
        %v2002 = vshrl.u32 %v2001, 7
        %v2003 = vsub.s32 %v2000, %v2002
        %v2004 = vrot.slane %v1997, %v2003
        %v2005 = vcombine.low %v1980, %v1988
        %v2006 = vcombine.high %v1980, %v1988
        %v2008 = vunpack.c.l.s4 1934713408
        %v2009 = vunpack.c.0.s8 %v2008
        %v2010 = vlaneseq
        %v2011 = vshrl.u32 %v2010, 7
        %v2012 = vsub.s32 %v2009, %v2011
        %v2013 = vrot.slane %v2005, %v2012
        %v2015 = vunpack.c.l.s4 1934713408
        %v2016 = vunpack.c.0.s8 %v2015
        %v2017 = vlaneseq
        %v2018 = vshrl.u32 %v2017, 7
        %v2019 = vsub.s32 %v2016, %v2018
        %v2020 = vrot.slane %v2006, %v2019
        %v2021 = vcombine.low %v1996, %v2004
        %v2022 = vcombine.high %v1996, %v2004
        %v2024 = vunpack.c.l.s4 1934713408
        %v2025 = vunpack.c.0.s8 %v2024
        %v2026 = vlaneseq
        %v2027 = vshrl.u32 %v2026, 7
        %v2028 = vsub.s32 %v2025, %v2027
        %v2029 = vrot.slane %v2021, %v2028
        %v2031 = vunpack.c.l.s4 1934713408
        %v2032 = vunpack.c.0.s8 %v2031
        %v2033 = vlaneseq
        %v2034 = vshrl.u32 %v2033, 7
        %v2035 = vsub.s32 %v2032, %v2034
        %v2036 = vrot.slane %v2022, %v2035
        %v2037 = vcombine.low %v2013, %v2029
        %v2038 = vcombine.high %v2013, %v2029
        %v2039 = vcombine.low %v2020, %v2036
        %v2040 = vcombine.high %v2020, %v2036
        %v2041 = vld [vmem:[%s791] sm:$0xff]
        %v2042 = vld [vmem:[%s791 + $0x8] sm:$0xff]
        %v2043 = vld [vmem:[%s791 + $0x10] sm:$0xff]
        %v2044 = vld [vmem:[%s791 + $0x18] sm:$0xff]
        %v2045 = vld [vmem:[%s791 + $0x20] sm:$0xff]
        %v2046 = vld [vmem:[%s791 + $0x28] sm:$0xff]
        %v2047 = vld [vmem:[%s791 + $0x30] sm:$0xff]
        %v2048 = vld [vmem:[%s791 + $0x38] sm:$0xff]
        %v2050 = vsel %vm934, %v1385, 0
        %v2053 = vsel %vm934, %v1453, 0
        %v2056 = vsel %vm934, %v1677, 0
        %v2059 = vsel %vm934, %v1745, 0
        %2061 = vmatprep.subr.mxu0 0.0
        %2062 = vmatpush1.xpose.msra.mxu0 %v2056
        %2063 = vmatprep.subr.mxu0 0.0
        %2064 = vmatpush1.xpose.msra.mxu0 %v2059
        %2065 = vmatprep.subr.mxu0 0.0
        %2066 = vmatpush1.xpose.msra.mxu0 0.0
        %2067 = vmatprep.subr.mxu0 0.0
        %2068 = vmatpush1.xpose.msra.mxu0 0.0
        %2069 = vmatprep.subr.mxu0 0.0
        %2070 = vmatpush1.xpose.msra.mxu0 0.0
        %2071 = vmatprep.subr.mxu0 0.0
        %2072 = vmatpush1.xpose.msra.mxu0 0.0
        %2073 = vmatprep.subr.mxu0 0.0
        %2074 = vmatpush1.xpose.msra.mxu0 0.0
        %2075 = vmatprep.subr.mxu0 0.0
        %2076 = vmatpush1.xpose.msra.mxu0 0.0
        %2077 = vmatprep.subr.mxu0 0.0
        %2078 = vmatpush1.xpose.msra.mxu0 0.0
        %2079 = vmatprep.subr.mxu0 0.0
        %2080 = vmatpush1.xpose.msra.mxu0 0.0
        %2081 = vmatprep.subr.mxu0 0.0
        %2082 = vmatpush1.xpose.msra.mxu0 0.0
        %2083 = vmatprep.subr.mxu0 0.0
        %2084 = vmatpush1.xpose.msra.mxu0 0.0
        %2085 = vmatprep.subr.mxu0 0.0
        %2086 = vmatpush1.xpose.msra.mxu0 0.0
        %2087 = vmatprep.subr.mxu0 0.0
        %2088 = vmatpush1.xpose.msra.mxu0 0.0
        %2089 = vmatprep.subr.mxu0 0.0
        %2090 = vmatpush1.xpose.msra.mxu0 0.0
        %2091 = vmatprep.subr.mxu0 0.0
        %2092 = vmatpush1.xpose.msra.mxu0 0.0
        %2093 = vmatprep.subr.mxu0 0.0
        %2094 = vmatpush1.xpose.msra.mxu0 0.0
        %2095 = vmatprep.subr.mxu0 0.0
        %2096 = vmatpush1.xpose.msra.mxu0 0.0
        %2097 = vmatprep.subr.mxu0 0.0
        %2098 = vmatpush1.xpose.msra.mxu0 0.0
        %2099 = vmatprep.subr.mxu0 0.0
        %2100 = vmatpush1.xpose.msra.mxu0 0.0
        %2101 = vmatprep.subr.mxu0 0.0
        %2102 = vmatpush1.xpose.msra.mxu0 0.0
        %2103 = vmatprep.subr.mxu0 0.0
        %2104 = vmatpush1.xpose.msra.mxu0 0.0
        %2105 = vmatprep.subr.mxu0 0.0
        %2106 = vmatpush1.xpose.msra.mxu0 0.0
        %2107 = vmatprep.subr.mxu0 0.0
        %2108 = vmatpush1.xpose.msra.mxu0 0.0
        %2109 = vmatprep.subr.mxu0 0.0
        %2110 = vmatpush1.xpose.msra.mxu0 0.0
        %2111 = vmatprep.subr.mxu0 0.0
        %2112 = vmatpush1.xpose.msra.mxu0 0.0
        %2113 = vmatprep.subr.mxu0 0.0
        %2114 = vmatpush1.xpose.msra.mxu0 0.0
        %2115 = vmatprep.subr.mxu0 0.0
        %2116 = vmatpush1.xpose.msra.mxu0 0.0
        %2117 = vmatprep.subr.mxu0 0.0
        %2118 = vmatpush1.xpose.msra.mxu0 0.0
        %2119 = vmatprep.subr.mxu0 0.0
        %2120 = vmatpush1.xpose.msra.mxu0 0.0
        %2121 = vmatprep.subr.mxu0 0.0
        %2122 = vmatpush1.xpose.msra.mxu0 0.0
        %2123 = vmatprep.subr.mxu0 0.0
        %2124 = vmatpush1.xpose.msra.mxu0 0.0
        %2125 = vmatprep.mubr.f32.mxu0 0.0
        %2126 = vmatmul.mubr.f32.gmra.mrb[0].mxu0 %v2050
        %v2127 = vpop.f32.mrb[0].mxu0
        %v2128 = vadd.f32 %v2041, %v2127
        %v2129 = vpop.f32.mrb[0].mxu0
        %2130 = vmatprep.mubr.f32.mxu0 0.0
        %2131 = vmatmul.mubr.f32.gmra.mrb[0].mxu0 %v2053
        %v2132 = vpop.f32.mrb[0].mxu0
        %v2133 = vadd.f32 %v2042, %v2132
        %v2134 = vpop.f32.mrb[0].mxu0
        %2135 = vdwg.mxu0
        %v2137 = vsel %vm934, %v1386, 0
        %v2140 = vsel %vm934, %v1454, 0
        %v2143 = vsel %vm934, %v1678, 0
        %v2146 = vsel %vm934, %v1746, 0
        %2148 = vmatprep.subr.mxu0 0.0
        %2149 = vmatpush1.xpose.msra.mxu0 %v2143
        %2150 = vmatprep.subr.mxu0 0.0
        %2151 = vmatpush1.xpose.msra.mxu0 %v2146
        %2152 = vmatprep.subr.mxu0 0.0
        %2153 = vmatpush1.xpose.msra.mxu0 0.0
        %2154 = vmatprep.subr.mxu0 0.0
        %2155 = vmatpush1.xpose.msra.mxu0 0.0
        %2156 = vmatprep.subr.mxu0 0.0
        %2157 = vmatpush1.xpose.msra.mxu0 0.0
        %2158 = vmatprep.subr.mxu0 0.0
        %2159 = vmatpush1.xpose.msra.mxu0 0.0
        %2160 = vmatprep.subr.mxu0 0.0
        %2161 = vmatpush1.xpose.msra.mxu0 0.0
        %2162 = vmatprep.subr.mxu0 0.0
        %2163 = vmatpush1.xpose.msra.mxu0 0.0
        %2164 = vmatprep.subr.mxu0 0.0
        %2165 = vmatpush1.xpose.msra.mxu0 0.0
        %2166 = vmatprep.subr.mxu0 0.0
        %2167 = vmatpush1.xpose.msra.mxu0 0.0
        %2168 = vmatprep.subr.mxu0 0.0
        %2169 = vmatpush1.xpose.msra.mxu0 0.0
        %2170 = vmatprep.subr.mxu0 0.0
        %2171 = vmatpush1.xpose.msra.mxu0 0.0
        %2172 = vmatprep.subr.mxu0 0.0
        %2173 = vmatpush1.xpose.msra.mxu0 0.0
        %2174 = vmatprep.subr.mxu0 0.0
        %2175 = vmatpush1.xpose.msra.mxu0 0.0
        %2176 = vmatprep.subr.mxu0 0.0
        %2177 = vmatpush1.xpose.msra.mxu0 0.0
        %2178 = vmatprep.subr.mxu0 0.0
        %2179 = vmatpush1.xpose.msra.mxu0 0.0
        %2180 = vmatprep.subr.mxu0 0.0
        %2181 = vmatpush1.xpose.msra.mxu0 0.0
        %2182 = vmatprep.subr.mxu0 0.0
        %2183 = vmatpush1.xpose.msra.mxu0 0.0
        %2184 = vmatprep.subr.mxu0 0.0
        %2185 = vmatpush1.xpose.msra.mxu0 0.0
        %2186 = vmatprep.subr.mxu0 0.0
        %2187 = vmatpush1.xpose.msra.mxu0 0.0
        %2188 = vmatprep.subr.mxu0 0.0
        %2189 = vmatpush1.xpose.msra.mxu0 0.0
        %2190 = vmatprep.subr.mxu0 0.0
        %2191 = vmatpush1.xpose.msra.mxu0 0.0
        %2192 = vmatprep.subr.mxu0 0.0
        %2193 = vmatpush1.xpose.msra.mxu0 0.0
        %2194 = vmatprep.subr.mxu0 0.0
        %2195 = vmatpush1.xpose.msra.mxu0 0.0
        %2196 = vmatprep.subr.mxu0 0.0
        %2197 = vmatpush1.xpose.msra.mxu0 0.0
        %2198 = vmatprep.subr.mxu0 0.0
        %2199 = vmatpush1.xpose.msra.mxu0 0.0
        %2200 = vmatprep.subr.mxu0 0.0
        %2201 = vmatpush1.xpose.msra.mxu0 0.0
        %2202 = vmatprep.subr.mxu0 0.0
        %2203 = vmatpush1.xpose.msra.mxu0 0.0
        %2204 = vmatprep.subr.mxu0 0.0
        %2205 = vmatpush1.xpose.msra.mxu0 0.0
        %2206 = vmatprep.subr.mxu0 0.0
        %2207 = vmatpush1.xpose.msra.mxu0 0.0
        %2208 = vmatprep.subr.mxu0 0.0
        %2209 = vmatpush1.xpose.msra.mxu0 0.0
        %2210 = vmatprep.subr.mxu0 0.0
        %2211 = vmatpush1.xpose.msra.mxu0 0.0
        %2212 = vmatprep.mubr.f32.mxu0 0.0
        %2213 = vmatmul.mubr.f32.gmra.mrb[0].mxu0 %v2137
        %v2214 = vpop.f32.mrb[0].mxu0
        %v2215 = vadd.f32 %v2043, %v2214
        %v2216 = vpop.f32.mrb[0].mxu0
        %2217 = vmatprep.mubr.f32.mxu0 0.0
        %2218 = vmatmul.mubr.f32.gmra.mrb[0].mxu0 %v2140
        %v2219 = vpop.f32.mrb[0].mxu0
        %v2220 = vadd.f32 %v2044, %v2219
        %v2221 = vpop.f32.mrb[0].mxu0
        %2222 = vdwg.mxu0
        %v2224 = vsel %vm934, %v1387, 0
        %v2227 = vsel %vm934, %v1455, 0
        %v2230 = vsel %vm934, %v1679, 0
        %v2233 = vsel %vm934, %v1747, 0
        %2235 = vmatprep.subr.mxu0 0.0
        %2236 = vmatpush1.xpose.msra.mxu0 %v2230
        %2237 = vmatprep.subr.mxu0 0.0
        %2238 = vmatpush1.xpose.msra.mxu0 %v2233
        %2239 = vmatprep.subr.mxu0 0.0
        %2240 = vmatpush1.xpose.msra.mxu0 0.0
        %2241 = vmatprep.subr.mxu0 0.0
        %2242 = vmatpush1.xpose.msra.mxu0 0.0
        %2243 = vmatprep.subr.mxu0 0.0
        %2244 = vmatpush1.xpose.msra.mxu0 0.0
        %2245 = vmatprep.subr.mxu0 0.0
        %2246 = vmatpush1.xpose.msra.mxu0 0.0
        %2247 = vmatprep.subr.mxu0 0.0
        %2248 = vmatpush1.xpose.msra.mxu0 0.0
        %2249 = vmatprep.subr.mxu0 0.0
        %2250 = vmatpush1.xpose.msra.mxu0 0.0
        %2251 = vmatprep.subr.mxu0 0.0
        %2252 = vmatpush1.xpose.msra.mxu0 0.0
        %2253 = vmatprep.subr.mxu0 0.0
        %2254 = vmatpush1.xpose.msra.mxu0 0.0
        %2255 = vmatprep.subr.mxu0 0.0
        %2256 = vmatpush1.xpose.msra.mxu0 0.0
        %2257 = vmatprep.subr.mxu0 0.0
        %2258 = vmatpush1.xpose.msra.mxu0 0.0
        %2259 = vmatprep.subr.mxu0 0.0
        %2260 = vmatpush1.xpose.msra.mxu0 0.0
        %2261 = vmatprep.subr.mxu0 0.0
        %2262 = vmatpush1.xpose.msra.mxu0 0.0
        %2263 = vmatprep.subr.mxu0 0.0
        %2264 = vmatpush1.xpose.msra.mxu0 0.0
        %2265 = vmatprep.subr.mxu0 0.0
        %2266 = vmatpush1.xpose.msra.mxu0 0.0
        %2267 = vmatprep.subr.mxu0 0.0
        %2268 = vmatpush1.xpose.msra.mxu0 0.0
        %2269 = vmatprep.subr.mxu0 0.0
        %2270 = vmatpush1.xpose.msra.mxu0 0.0
        %2271 = vmatprep.subr.mxu0 0.0
        %2272 = vmatpush1.xpose.msra.mxu0 0.0
        %2273 = vmatprep.subr.mxu0 0.0
        %2274 = vmatpush1.xpose.msra.mxu0 0.0
        %2275 = vmatprep.subr.mxu0 0.0
        %2276 = vmatpush1.xpose.msra.mxu0 0.0
        %2277 = vmatprep.subr.mxu0 0.0
        %2278 = vmatpush1.xpose.msra.mxu0 0.0
        %2279 = vmatprep.subr.mxu0 0.0
        %2280 = vmatpush1.xpose.msra.mxu0 0.0
        %2281 = vmatprep.subr.mxu0 0.0
        %2282 = vmatpush1.xpose.msra.mxu0 0.0
        %2283 = vmatprep.subr.mxu0 0.0
        %2284 = vmatpush1.xpose.msra.mxu0 0.0
        %2285 = vmatprep.subr.mxu0 0.0
        %2286 = vmatpush1.xpose.msra.mxu0 0.0
        %2287 = vmatprep.subr.mxu0 0.0
        %2288 = vmatpush1.xpose.msra.mxu0 0.0
        %2289 = vmatprep.subr.mxu0 0.0
        %2290 = vmatpush1.xpose.msra.mxu0 0.0
        %2291 = vmatprep.subr.mxu0 0.0
        %2292 = vmatpush1.xpose.msra.mxu0 0.0
        %2293 = vmatprep.subr.mxu0 0.0
        %2294 = vmatpush1.xpose.msra.mxu0 0.0
        %2295 = vmatprep.subr.mxu0 0.0
        %2296 = vmatpush1.xpose.msra.mxu0 0.0
        %2297 = vmatprep.subr.mxu0 0.0
        %2298 = vmatpush1.xpose.msra.mxu0 0.0
        %2299 = vmatprep.mubr.f32.mxu0 0.0
        %2300 = vmatmul.mubr.f32.gmra.mrb[0].mxu0 %v2224
        %v2301 = vpop.f32.mrb[0].mxu0
        %v2302 = vadd.f32 %v2045, %v2301
        %v2303 = vpop.f32.mrb[0].mxu0
        %2304 = vmatprep.mubr.f32.mxu0 0.0
        %2305 = vmatmul.mubr.f32.gmra.mrb[0].mxu0 %v2227
        %v2306 = vpop.f32.mrb[0].mxu0
        %v2307 = vadd.f32 %v2046, %v2306
        %v2308 = vpop.f32.mrb[0].mxu0
        %2309 = vdwg.mxu0
        %v2311 = vsel %vm934, %v1388, 0
        %v2314 = vsel %vm934, %v1456, 0
        %v2317 = vsel %vm934, %v1680, 0
        %v2320 = vsel %vm934, %v1748, 0
        %2322 = vmatprep.subr.mxu0 0.0
        %2323 = vmatpush1.xpose.msra.mxu0 %v2317
        %2324 = vmatprep.subr.mxu0 0.0
        %2325 = vmatpush1.xpose.msra.mxu0 %v2320
        %2326 = vmatprep.subr.mxu0 0.0
        %2327 = vmatpush1.xpose.msra.mxu0 0.0
        %2328 = vmatprep.subr.mxu0 0.0
        %2329 = vmatpush1.xpose.msra.mxu0 0.0
        %2330 = vmatprep.subr.mxu0 0.0
        %2331 = vmatpush1.xpose.msra.mxu0 0.0
        %2332 = vmatprep.subr.mxu0 0.0
        %2333 = vmatpush1.xpose.msra.mxu0 0.0
        %2334 = vmatprep.subr.mxu0 0.0
        %2335 = vmatpush1.xpose.msra.mxu0 0.0
        %2336 = vmatprep.subr.mxu0 0.0
        %2337 = vmatpush1.xpose.msra.mxu0 0.0
        %2338 = vmatprep.subr.mxu0 0.0
        %2339 = vmatpush1.xpose.msra.mxu0 0.0
        %2340 = vmatprep.subr.mxu0 0.0
        %2341 = vmatpush1.xpose.msra.mxu0 0.0
        %2342 = vmatprep.subr.mxu0 0.0
        %2343 = vmatpush1.xpose.msra.mxu0 0.0
        %2344 = vmatprep.subr.mxu0 0.0
        %2345 = vmatpush1.xpose.msra.mxu0 0.0
        %2346 = vmatprep.subr.mxu0 0.0
        %2347 = vmatpush1.xpose.msra.mxu0 0.0
        %2348 = vmatprep.subr.mxu0 0.0
        %2349 = vmatpush1.xpose.msra.mxu0 0.0
        %2350 = vmatprep.subr.mxu0 0.0
        %2351 = vmatpush1.xpose.msra.mxu0 0.0
        %2352 = vmatprep.subr.mxu0 0.0
        %2353 = vmatpush1.xpose.msra.mxu0 0.0
        %2354 = vmatprep.subr.mxu0 0.0
        %2355 = vmatpush1.xpose.msra.mxu0 0.0
        %2356 = vmatprep.subr.mxu0 0.0
        %2357 = vmatpush1.xpose.msra.mxu0 0.0
        %2358 = vmatprep.subr.mxu0 0.0
        %2359 = vmatpush1.xpose.msra.mxu0 0.0
        %2360 = vmatprep.subr.mxu0 0.0
        %2361 = vmatpush1.xpose.msra.mxu0 0.0
        %2362 = vmatprep.subr.mxu0 0.0
        %2363 = vmatpush1.xpose.msra.mxu0 0.0
        %2364 = vmatprep.subr.mxu0 0.0
        %2365 = vmatpush1.xpose.msra.mxu0 0.0
        %2366 = vmatprep.subr.mxu0 0.0
        %2367 = vmatpush1.xpose.msra.mxu0 0.0
        %2368 = vmatprep.subr.mxu0 0.0
        %2369 = vmatpush1.xpose.msra.mxu0 0.0
        %2370 = vmatprep.subr.mxu0 0.0
        %2371 = vmatpush1.xpose.msra.mxu0 0.0
        %2372 = vmatprep.subr.mxu0 0.0
        %2373 = vmatpush1.xpose.msra.mxu0 0.0
        %2374 = vmatprep.subr.mxu0 0.0
        %2375 = vmatpush1.xpose.msra.mxu0 0.0
        %2376 = vmatprep.subr.mxu0 0.0
        %2377 = vmatpush1.xpose.msra.mxu0 0.0
        %2378 = vmatprep.subr.mxu0 0.0
        %2379 = vmatpush1.xpose.msra.mxu0 0.0
        %2380 = vmatprep.subr.mxu0 0.0
        %2381 = vmatpush1.xpose.msra.mxu0 0.0
        %2382 = vmatprep.subr.mxu0 0.0
        %2383 = vmatpush1.xpose.msra.mxu0 0.0
        %2384 = vmatprep.subr.mxu0 0.0
        %2385 = vmatpush1.xpose.msra.mxu0 0.0
        %2386 = vmatprep.mubr.f32.mxu0 0.0
        %2387 = vmatmul.mubr.f32.gmra.mrb[0].mxu0 %v2311
        %v2388 = vpop.f32.mrb[0].mxu0
        %v2389 = vadd.f32 %v2047, %v2388
        %v2390 = vpop.f32.mrb[0].mxu0
        %2391 = vmatprep.mubr.f32.mxu0 0.0
        %2392 = vmatmul.mubr.f32.gmra.mrb[0].mxu0 %v2314
        %v2393 = vpop.f32.mrb[0].mxu0
        %v2394 = vadd.f32 %v2048, %v2393
        %v2395 = vpop.f32.mrb[0].mxu0
        %2396 = vdwg.mxu0
        %vm2397 = vcmask 130048
        %v2398 = vsel %vm2397, %v2128, -inf
        %2399 = vmax.xlane.f32.xlu0 %v2398
        %v2400 = vpop.xlane.xlu0 %2399
        %v2401 = vsel %vm2397, %v2133, -inf
        %2402 = vmax.xlane.f32.xlu0 %v2401
        %v2403 = vpop.xlane.xlu0 %2402
        %v2404 = vsel %vm2397, %v2215, -inf
        %2405 = vmax.xlane.f32.xlu0 %v2404
        %v2406 = vpop.xlane.xlu0 %2405
        %v2407 = vsel %vm2397, %v2220, -inf
        %2408 = vmax.xlane.f32.xlu0 %v2407
        %v2409 = vpop.xlane.xlu0 %2408
        %v2410 = vsel %vm2397, %v2302, -inf
        %2411 = vmax.xlane.f32.xlu0 %v2410
        %v2412 = vpop.xlane.xlu0 %2411
        %v2413 = vsel %vm2397, %v2307, -inf
        %2414 = vmax.xlane.f32.xlu0 %v2413
        %v2415 = vpop.xlane.xlu0 %2414
        %v2416 = vsel %vm2397, %v2389, -inf
        %2417 = vmax.xlane.f32.xlu0 %v2416
        %v2418 = vpop.xlane.xlu0 %2417
        %v2419 = vsel %vm2397, %v2394, -inf
        %2420 = vmax.xlane.f32.xlu0 %v2419
        %v2421 = vpop.xlane.xlu0 %2420
        %v2422 = vsub.f32 %v2128, %v2400
        %v2423 = vsub.f32 %v2133, %v2403
        %v2424 = vsub.f32 %v2215, %v2406
        %v2425 = vsub.f32 %v2220, %v2409
        %v2426 = vsub.f32 %v2302, %v2412
        %v2427 = vsub.f32 %v2307, %v2415
        %v2428 = vsub.f32 %v2389, %v2418
        %v2429 = vsub.f32 %v2394, %v2421
        %v2430 = vmul.f32 %v2422, 1.442695
        %v2431 = vpow.pop %v2430
        %v2432 = vmul.f32 %v2423, 1.442695
        %v2433 = vpow.pop %v2432
        %v2434 = vmul.f32 %v2424, 1.442695
        %v2435 = vpow.pop %v2434
        %v2436 = vmul.f32 %v2425, 1.442695
        %v2437 = vpow.pop %v2436
        %v2438 = vmul.f32 %v2426, 1.442695
        %v2439 = vpow.pop %v2438
        %v2440 = vmul.f32 %v2427, 1.442695
        %v2441 = vpow.pop %v2440
        %v2442 = vmul.f32 %v2428, 1.442695
        %v2443 = vpow.pop %v2442
        %v2444 = vmul.f32 %v2429, 1.442695
        %v2445 = vpow.pop %v2444
        %v2446 = vsel %vm2397, %v2431, 0.0
        %2447 = vadd.xlane.f32.xlu0 %v2446
        %v2448 = vpop.xlane.xlu0 %2447
        %v2449 = vsel %vm2397, %v2433, 0.0
        %2450 = vadd.xlane.f32.xlu0 %v2449
        %v2451 = vpop.xlane.xlu0 %2450
        %v2452 = vsel %vm2397, %v2435, 0.0
        %2453 = vadd.xlane.f32.xlu0 %v2452
        %v2454 = vpop.xlane.xlu0 %2453
        %v2455 = vsel %vm2397, %v2437, 0.0
        %2456 = vadd.xlane.f32.xlu0 %v2455
        %v2457 = vpop.xlane.xlu0 %2456
        %v2458 = vsel %vm2397, %v2439, 0.0
        %2459 = vadd.xlane.f32.xlu0 %v2458
        %v2460 = vpop.xlane.xlu0 %2459
        %v2461 = vsel %vm2397, %v2441, 0.0
        %2462 = vadd.xlane.f32.xlu0 %v2461
        %v2463 = vpop.xlane.xlu0 %2462
        %v2464 = vsel %vm2397, %v2443, 0.0
        %2465 = vadd.xlane.f32.xlu0 %v2464
        %v2466 = vpop.xlane.xlu0 %2465
        %v2467 = vsel %vm2397, %v2445, 0.0
        %2468 = vadd.xlane.f32.xlu0 %v2467
        %v2469 = vpop.xlane.xlu0 %2468
        %v2470 = vrcp.pop %v2448
        %v2471 = vrcp.pop %v2451
        %v2472 = vrcp.pop %v2454
        %v2473 = vrcp.pop %v2457
        %v2474 = vrcp.pop %v2460
        %v2475 = vrcp.pop %v2463
        %v2476 = vrcp.pop %v2466
        %v2477 = vrcp.pop %v2469
        %v2478 = vmul.f32 %v2431, %v2470
        %v2479 = vmul.f32 %v2433, %v2471
        %v2480 = vmul.f32 %v2435, %v2472
        %v2481 = vmul.f32 %v2437, %v2473
        %v2482 = vmul.f32 %v2439, %v2474
        %v2483 = vmul.f32 %v2441, %v2475
        %v2484 = vmul.f32 %v2443, %v2476
        %v2485 = vmul.f32 %v2445, %v2477
        %v2487 = vsel %vm2397, %v2478, 0
        %v2490 = vsel %vm2397, %v2479, 0
        %2492 = vmatprep.subr.mxu0 0.0
        %2493 = vmatpush1.msra.mxu0 %v1969
        %2494 = vmatprep.subr.mxu0 0.0
        %2495 = vmatpush1.msra.mxu0 %v2037
        %2496 = vmatprep.subr.mxu0 0.0
        %2497 = vmatpush1.msra.mxu0 0.0
        %2498 = vmatprep.subr.mxu0 0.0
        %2499 = vmatpush1.msra.mxu0 0.0
        %2500 = vmatprep.subr.mxu0 0.0
        %2501 = vmatpush1.msra.mxu0 0.0
        %2502 = vmatprep.subr.mxu0 0.0
        %2503 = vmatpush1.msra.mxu0 0.0
        %2504 = vmatprep.subr.mxu0 0.0
        %2505 = vmatpush1.msra.mxu0 0.0
        %2506 = vmatprep.subr.mxu0 0.0
        %2507 = vmatpush1.msra.mxu0 0.0
        %2508 = vmatprep.subr.mxu0 0.0
        %2509 = vmatpush1.msra.mxu0 0.0
        %2510 = vmatprep.subr.mxu0 0.0
        %2511 = vmatpush1.msra.mxu0 0.0
        %2512 = vmatprep.subr.mxu0 0.0
        %2513 = vmatpush1.msra.mxu0 0.0
        %2514 = vmatprep.subr.mxu0 0.0
        %2515 = vmatpush1.msra.mxu0 0.0
        %2516 = vmatprep.subr.mxu0 0.0
        %2517 = vmatpush1.msra.mxu0 0.0
        %2518 = vmatprep.subr.mxu0 0.0
        %2519 = vmatpush1.msra.mxu0 0.0
        %2520 = vmatprep.subr.mxu0 0.0
        %2521 = vmatpush1.msra.mxu0 0.0
        %2522 = vmatprep.subr.mxu0 0.0
        %2523 = vmatpush1.msra.mxu0 0.0
        %2524 = vmatprep.subr.mxu0 0.0
        %2525 = vmatpush1.msra.mxu0 0.0
        %2526 = vmatprep.subr.mxu0 0.0
        %2527 = vmatpush1.msra.mxu0 0.0
        %2528 = vmatprep.subr.mxu0 0.0
        %2529 = vmatpush1.msra.mxu0 0.0
        %2530 = vmatprep.subr.mxu0 0.0
        %2531 = vmatpush1.msra.mxu0 0.0
        %2532 = vmatprep.subr.mxu0 0.0
        %2533 = vmatpush1.msra.mxu0 0.0
        %2534 = vmatprep.subr.mxu0 0.0
        %2535 = vmatpush1.msra.mxu0 0.0
        %2536 = vmatprep.subr.mxu0 0.0
        %2537 = vmatpush1.msra.mxu0 0.0
        %2538 = vmatprep.subr.mxu0 0.0
        %2539 = vmatpush1.msra.mxu0 0.0
        %2540 = vmatprep.subr.mxu0 0.0
        %2541 = vmatpush1.msra.mxu0 0.0
        %2542 = vmatprep.subr.mxu0 0.0
        %2543 = vmatpush1.msra.mxu0 0.0
        %2544 = vmatprep.subr.mxu0 0.0
        %2545 = vmatpush1.msra.mxu0 0.0
        %2546 = vmatprep.subr.mxu0 0.0
        %2547 = vmatpush1.msra.mxu0 0.0
        %2548 = vmatprep.subr.mxu0 0.0
        %2549 = vmatpush1.msra.mxu0 0.0
        %2550 = vmatprep.subr.mxu0 0.0
        %2551 = vmatpush1.msra.mxu0 0.0
        %2552 = vmatprep.subr.mxu0 0.0
        %2553 = vmatpush1.msra.mxu0 0.0
        %2554 = vmatprep.subr.mxu0 0.0
        %2555 = vmatpush1.msra.mxu0 0.0
        %2556 = vmatprep.mubr.f32.mxu0 0.0
        %2557 = vmatmul.mubr.f32.gmra.mrb[0].mxu0 %v2487
        %v2558 = vpop.f32.mrb[0].mxu0
        %v2559 = vadd.f32 0.0, %v2558
        %v2560 = vpop.f32.mrb[0].mxu0
        %2561 = vmatprep.mubr.f32.mxu0 0.0
        %2562 = vmatmul.mubr.f32.gmra.mrb[0].mxu0 %v2490
        %v2563 = vpop.f32.mrb[0].mxu0
        %v2564 = vadd.f32 0.0, %v2563
        %v2565 = vpop.f32.mrb[0].mxu0
        %2566 = vdwg.mxu0
        %v2568 = vsel %vm2397, %v2480, 0
        %v2571 = vsel %vm2397, %v2481, 0
        %2573 = vmatprep.subr.mxu0 0.0
        %2574 = vmatpush1.msra.mxu0 %v1970
        %2575 = vmatprep.subr.mxu0 0.0
        %2576 = vmatpush1.msra.mxu0 %v2038
        %2577 = vmatprep.subr.mxu0 0.0
        %2578 = vmatpush1.msra.mxu0 0.0
        %2579 = vmatprep.subr.mxu0 0.0
        %2580 = vmatpush1.msra.mxu0 0.0
        %2581 = vmatprep.subr.mxu0 0.0
        %2582 = vmatpush1.msra.mxu0 0.0
        %2583 = vmatprep.subr.mxu0 0.0
        %2584 = vmatpush1.msra.mxu0 0.0
        %2585 = vmatprep.subr.mxu0 0.0
        %2586 = vmatpush1.msra.mxu0 0.0
        %2587 = vmatprep.subr.mxu0 0.0
        %2588 = vmatpush1.msra.mxu0 0.0
        %2589 = vmatprep.subr.mxu0 0.0
        %2590 = vmatpush1.msra.mxu0 0.0
        %2591 = vmatprep.subr.mxu0 0.0
        %2592 = vmatpush1.msra.mxu0 0.0
        %2593 = vmatprep.subr.mxu0 0.0
        %2594 = vmatpush1.msra.mxu0 0.0
        %2595 = vmatprep.subr.mxu0 0.0
        %2596 = vmatpush1.msra.mxu0 0.0
        %2597 = vmatprep.subr.mxu0 0.0
        %2598 = vmatpush1.msra.mxu0 0.0
        %2599 = vmatprep.subr.mxu0 0.0
        %2600 = vmatpush1.msra.mxu0 0.0
        %2601 = vmatprep.subr.mxu0 0.0
        %2602 = vmatpush1.msra.mxu0 0.0
        %2603 = vmatprep.subr.mxu0 0.0
        %2604 = vmatpush1.msra.mxu0 0.0
        %2605 = vmatprep.subr.mxu0 0.0
        %2606 = vmatpush1.msra.mxu0 0.0
        %2607 = vmatprep.subr.mxu0 0.0
        %2608 = vmatpush1.msra.mxu0 0.0
        %2609 = vmatprep.subr.mxu0 0.0
        %2610 = vmatpush1.msra.mxu0 0.0
        %2611 = vmatprep.subr.mxu0 0.0
        %2612 = vmatpush1.msra.mxu0 0.0
        %2613 = vmatprep.subr.mxu0 0.0
        %2614 = vmatpush1.msra.mxu0 0.0
        %2615 = vmatprep.subr.mxu0 0.0
        %2616 = vmatpush1.msra.mxu0 0.0
        %2617 = vmatprep.subr.mxu0 0.0
        %2618 = vmatpush1.msra.mxu0 0.0
        %2619 = vmatprep.subr.mxu0 0.0
        %2620 = vmatpush1.msra.mxu0 0.0
        %2621 = vmatprep.subr.mxu0 0.0
        %2622 = vmatpush1.msra.mxu0 0.0
        %2623 = vmatprep.subr.mxu0 0.0
        %2624 = vmatpush1.msra.mxu0 0.0
        %2625 = vmatprep.subr.mxu0 0.0
        %2626 = vmatpush1.msra.mxu0 0.0
        %2627 = vmatprep.subr.mxu0 0.0
        %2628 = vmatpush1.msra.mxu0 0.0
        %2629 = vmatprep.subr.mxu0 0.0
        %2630 = vmatpush1.msra.mxu0 0.0
        %2631 = vmatprep.subr.mxu0 0.0
        %2632 = vmatpush1.msra.mxu0 0.0
        %2633 = vmatprep.subr.mxu0 0.0
        %2634 = vmatpush1.msra.mxu0 0.0
        %2635 = vmatprep.subr.mxu0 0.0
        %2636 = vmatpush1.msra.mxu0 0.0
        %2637 = vmatprep.mubr.f32.mxu0 0.0
        %2638 = vmatmul.mubr.f32.gmra.mrb[0].mxu0 %v2568
        %v2639 = vpop.f32.mrb[0].mxu0
        %v2640 = vadd.f32 0.0, %v2639
        %v2641 = vpop.f32.mrb[0].mxu0
        %2642 = vmatprep.mubr.f32.mxu0 0.0
        %2643 = vmatmul.mubr.f32.gmra.mrb[0].mxu0 %v2571
        %v2644 = vpop.f32.mrb[0].mxu0
        %v2645 = vadd.f32 0.0, %v2644
        %v2646 = vpop.f32.mrb[0].mxu0
        %2647 = vdwg.mxu0
        %v2649 = vsel %vm2397, %v2482, 0
        %v2652 = vsel %vm2397, %v2483, 0
        %2654 = vmatprep.subr.mxu0 0.0
        %2655 = vmatpush1.msra.mxu0 %v1971
        %2656 = vmatprep.subr.mxu0 0.0
        %2657 = vmatpush1.msra.mxu0 %v2039
        %2658 = vmatprep.subr.mxu0 0.0
        %2659 = vmatpush1.msra.mxu0 0.0
        %2660 = vmatprep.subr.mxu0 0.0
        %2661 = vmatpush1.msra.mxu0 0.0
        %2662 = vmatprep.subr.mxu0 0.0
        %2663 = vmatpush1.msra.mxu0 0.0
        %2664 = vmatprep.subr.mxu0 0.0
        %2665 = vmatpush1.msra.mxu0 0.0
        %2666 = vmatprep.subr.mxu0 0.0
        %2667 = vmatpush1.msra.mxu0 0.0
        %2668 = vmatprep.subr.mxu0 0.0
        %2669 = vmatpush1.msra.mxu0 0.0
        %2670 = vmatprep.subr.mxu0 0.0
        %2671 = vmatpush1.msra.mxu0 0.0
        %2672 = vmatprep.subr.mxu0 0.0
        %2673 = vmatpush1.msra.mxu0 0.0
        %2674 = vmatprep.subr.mxu0 0.0
        %2675 = vmatpush1.msra.mxu0 0.0
        %2676 = vmatprep.subr.mxu0 0.0
        %2677 = vmatpush1.msra.mxu0 0.0
        %2678 = vmatprep.subr.mxu0 0.0
        %2679 = vmatpush1.msra.mxu0 0.0
        %2680 = vmatprep.subr.mxu0 0.0
        %2681 = vmatpush1.msra.mxu0 0.0
        %2682 = vmatprep.subr.mxu0 0.0
        %2683 = vmatpush1.msra.mxu0 0.0
        %2684 = vmatprep.subr.mxu0 0.0
        %2685 = vmatpush1.msra.mxu0 0.0
        %2686 = vmatprep.subr.mxu0 0.0
        %2687 = vmatpush1.msra.mxu0 0.0
        %2688 = vmatprep.subr.mxu0 0.0
        %2689 = vmatpush1.msra.mxu0 0.0
        %2690 = vmatprep.subr.mxu0 0.0
        %2691 = vmatpush1.msra.mxu0 0.0
        %2692 = vmatprep.subr.mxu0 0.0
        %2693 = vmatpush1.msra.mxu0 0.0
        %2694 = vmatprep.subr.mxu0 0.0
        %2695 = vmatpush1.msra.mxu0 0.0
        %2696 = vmatprep.subr.mxu0 0.0
        %2697 = vmatpush1.msra.mxu0 0.0
        %2698 = vmatprep.subr.mxu0 0.0
        %2699 = vmatpush1.msra.mxu0 0.0
        %2700 = vmatprep.subr.mxu0 0.0
        %2701 = vmatpush1.msra.mxu0 0.0
        %2702 = vmatprep.subr.mxu0 0.0
        %2703 = vmatpush1.msra.mxu0 0.0
        %2704 = vmatprep.subr.mxu0 0.0
        %2705 = vmatpush1.msra.mxu0 0.0
        %2706 = vmatprep.subr.mxu0 0.0
        %2707 = vmatpush1.msra.mxu0 0.0
        %2708 = vmatprep.subr.mxu0 0.0
        %2709 = vmatpush1.msra.mxu0 0.0
        %2710 = vmatprep.subr.mxu0 0.0
        %2711 = vmatpush1.msra.mxu0 0.0
        %2712 = vmatprep.subr.mxu0 0.0
        %2713 = vmatpush1.msra.mxu0 0.0
        %2714 = vmatprep.subr.mxu0 0.0
        %2715 = vmatpush1.msra.mxu0 0.0
        %2716 = vmatprep.subr.mxu0 0.0
        %2717 = vmatpush1.msra.mxu0 0.0
        %2718 = vmatprep.mubr.f32.mxu0 0.0
        %2719 = vmatmul.mubr.f32.gmra.mrb[0].mxu0 %v2649
        %v2720 = vpop.f32.mrb[0].mxu0
        %v2721 = vadd.f32 0.0, %v2720
        %v2722 = vpop.f32.mrb[0].mxu0
        %2723 = vmatprep.mubr.f32.mxu0 0.0
        %2724 = vmatmul.mubr.f32.gmra.mrb[0].mxu0 %v2652
        %v2725 = vpop.f32.mrb[0].mxu0
        %v2726 = vadd.f32 0.0, %v2725
        %v2727 = vpop.f32.mrb[0].mxu0
        %2728 = vdwg.mxu0
        %v2730 = vsel %vm2397, %v2484, 0
        %v2733 = vsel %vm2397, %v2485, 0
        %2735 = vmatprep.subr.mxu0 0.0
        %2736 = vmatpush1.msra.mxu0 %v1972
        %2737 = vmatprep.subr.mxu0 0.0
        %2738 = vmatpush1.msra.mxu0 %v2040
        %2739 = vmatprep.subr.mxu0 0.0
        %2740 = vmatpush1.msra.mxu0 0.0
        %2741 = vmatprep.subr.mxu0 0.0
        %2742 = vmatpush1.msra.mxu0 0.0
        %2743 = vmatprep.subr.mxu0 0.0
        %2744 = vmatpush1.msra.mxu0 0.0
        %2745 = vmatprep.subr.mxu0 0.0
        %2746 = vmatpush1.msra.mxu0 0.0
        %2747 = vmatprep.subr.mxu0 0.0
        %2748 = vmatpush1.msra.mxu0 0.0
        %2749 = vmatprep.subr.mxu0 0.0
        %2750 = vmatpush1.msra.mxu0 0.0
        %2751 = vmatprep.subr.mxu0 0.0
        %2752 = vmatpush1.msra.mxu0 0.0
        %2753 = vmatprep.subr.mxu0 0.0
        %2754 = vmatpush1.msra.mxu0 0.0
        %2755 = vmatprep.subr.mxu0 0.0
        %2756 = vmatpush1.msra.mxu0 0.0
        %2757 = vmatprep.subr.mxu0 0.0
        %2758 = vmatpush1.msra.mxu0 0.0
        %2759 = vmatprep.subr.mxu0 0.0
        %2760 = vmatpush1.msra.mxu0 0.0
        %2761 = vmatprep.subr.mxu0 0.0
        %2762 = vmatpush1.msra.mxu0 0.0
        %2763 = vmatprep.subr.mxu0 0.0
        %2764 = vmatpush1.msra.mxu0 0.0
        %2765 = vmatprep.subr.mxu0 0.0
        %2766 = vmatpush1.msra.mxu0 0.0
        %2767 = vmatprep.subr.mxu0 0.0
        %2768 = vmatpush1.msra.mxu0 0.0
        %2769 = vmatprep.subr.mxu0 0.0
        %2770 = vmatpush1.msra.mxu0 0.0
        %2771 = vmatprep.subr.mxu0 0.0
        %2772 = vmatpush1.msra.mxu0 0.0
        %2773 = vmatprep.subr.mxu0 0.0
        %2774 = vmatpush1.msra.mxu0 0.0
        %2775 = vmatprep.subr.mxu0 0.0
        %2776 = vmatpush1.msra.mxu0 0.0
        %2777 = vmatprep.subr.mxu0 0.0
        %2778 = vmatpush1.msra.mxu0 0.0
        %2779 = vmatprep.subr.mxu0 0.0
        %2780 = vmatpush1.msra.mxu0 0.0
        %2781 = vmatprep.subr.mxu0 0.0
        %2782 = vmatpush1.msra.mxu0 0.0
        %2783 = vmatprep.subr.mxu0 0.0
        %2784 = vmatpush1.msra.mxu0 0.0
        %2785 = vmatprep.subr.mxu0 0.0
        %2786 = vmatpush1.msra.mxu0 0.0
        %2787 = vmatprep.subr.mxu0 0.0
        %2788 = vmatpush1.msra.mxu0 0.0
        %2789 = vmatprep.subr.mxu0 0.0
        %2790 = vmatpush1.msra.mxu0 0.0
        %2791 = vmatprep.subr.mxu0 0.0
        %2792 = vmatpush1.msra.mxu0 0.0
        %2793 = vmatprep.subr.mxu0 0.0
        %2794 = vmatpush1.msra.mxu0 0.0
        %2795 = vmatprep.subr.mxu0 0.0
        %2796 = vmatpush1.msra.mxu0 0.0
        %2797 = vmatprep.subr.mxu0 0.0
        %2798 = vmatpush1.msra.mxu0 0.0
        %2799 = vmatprep.mubr.f32.mxu0 0.0
        %2800 = vmatmul.mubr.f32.gmra.mrb[0].mxu0 %v2730
        %v2801 = vpop.f32.mrb[0].mxu0
        %v2802 = vadd.f32 0.0, %v2801
        %v2803 = vpop.f32.mrb[0].mxu0
        %2804 = vmatprep.mubr.f32.mxu0 0.0
        %2805 = vmatmul.mubr.f32.gmra.mrb[0].mxu0 %v2733
        %v2806 = vpop.f32.mrb[0].mxu0
        %v2807 = vadd.f32 0.0, %v2806
        %v2808 = vpop.f32.mrb[0].mxu0
        %2809 = vdwg.mxu0
        %v2810 = vcombine.low %v2559, %v2721
        %v2811 = vcombine.high %v2559, %v2721
        %v2813 = vunpack.c.l.s4 1983009808
        %v2814 = vunpack.c.0.s8 %v2813
        %v2815 = vlaneseq
        %v2816 = vshrl.u32 %v2815, 7
        %v2817 = vsub.s32 %v2814, %v2816
        %v2818 = vrot.slane %v2810, %v2817
        %v2820 = vunpack.c.l.s4 1983009808
        %v2821 = vunpack.c.0.s8 %v2820
        %v2822 = vlaneseq
        %v2823 = vshrl.u32 %v2822, 7
        %v2824 = vsub.s32 %v2821, %v2823
        %v2825 = vrot.slane %v2811, %v2824
        %v2826 = vcombine.low %v2640, %v2802
        %v2827 = vcombine.high %v2640, %v2802
        %v2829 = vunpack.c.l.s4 1983009808
        %v2830 = vunpack.c.0.s8 %v2829
        %v2831 = vlaneseq
        %v2832 = vshrl.u32 %v2831, 7
        %v2833 = vsub.s32 %v2830, %v2832
        %v2834 = vrot.slane %v2826, %v2833
        %v2836 = vunpack.c.l.s4 1983009808
        %v2837 = vunpack.c.0.s8 %v2836
        %v2838 = vlaneseq
        %v2839 = vshrl.u32 %v2838, 7
        %v2840 = vsub.s32 %v2837, %v2839
        %v2841 = vrot.slane %v2827, %v2840
        %v2842 = vcombine.low %v2818, %v2834
        %v2843 = vcombine.high %v2818, %v2834
        %v2845 = vunpack.c.l.s4 1934713408
        %v2846 = vunpack.c.0.s8 %v2845
        %v2847 = vlaneseq
        %v2848 = vshrl.u32 %v2847, 7
        %v2849 = vsub.s32 %v2846, %v2848
        %v2850 = vrot.slane %v2842, %v2849
        %v2852 = vunpack.c.l.s4 1934713408
        %v2853 = vunpack.c.0.s8 %v2852
        %v2854 = vlaneseq
        %v2855 = vshrl.u32 %v2854, 7
        %v2856 = vsub.s32 %v2853, %v2855
        %v2857 = vrot.slane %v2843, %v2856
        %v2858 = vcombine.low %v2825, %v2841
        %v2859 = vcombine.high %v2825, %v2841
        %v2861 = vunpack.c.l.s4 1934713408
        %v2862 = vunpack.c.0.s8 %v2861
        %v2863 = vlaneseq
        %v2864 = vshrl.u32 %v2863, 7
        %v2865 = vsub.s32 %v2862, %v2864
        %v2866 = vrot.slane %v2858, %v2865
        %v2868 = vunpack.c.l.s4 1934713408
        %v2869 = vunpack.c.0.s8 %v2868
        %v2870 = vlaneseq
        %v2871 = vshrl.u32 %v2870, 7
        %v2872 = vsub.s32 %v2869, %v2871
        %v2873 = vrot.slane %v2859, %v2872
        %v2874 = vcombine.high %v2850, 0.0
        %v2875 = vcombine.high %v2857, 0.0
        %v2876 = vcombine.high %v2866, 0.0
        %v2877 = vcombine.high %v2873, 0.0
        %v2878 = vcombine.low %v2564, %v2726
        %v2879 = vcombine.high %v2564, %v2726
        %v2881 = vunpack.c.l.s4 1983009808
        %v2882 = vunpack.c.0.s8 %v2881
        %v2883 = vlaneseq
        %v2884 = vshrl.u32 %v2883, 7
        %v2885 = vsub.s32 %v2882, %v2884
        %v2886 = vrot.slane %v2878, %v2885
        %v2888 = vunpack.c.l.s4 1983009808
        %v2889 = vunpack.c.0.s8 %v2888
        %v2890 = vlaneseq
        %v2891 = vshrl.u32 %v2890, 7
        %v2892 = vsub.s32 %v2889, %v2891
        %v2893 = vrot.slane %v2879, %v2892
        %v2894 = vcombine.low %v2645, %v2807
        %v2895 = vcombine.high %v2645, %v2807
        %v2897 = vunpack.c.l.s4 1983009808
        %v2898 = vunpack.c.0.s8 %v2897
        %v2899 = vlaneseq
        %v2900 = vshrl.u32 %v2899, 7
        %v2901 = vsub.s32 %v2898, %v2900
        %v2902 = vrot.slane %v2894, %v2901
        %v2904 = vunpack.c.l.s4 1983009808
        %v2905 = vunpack.c.0.s8 %v2904
        %v2906 = vlaneseq
        %v2907 = vshrl.u32 %v2906, 7
        %v2908 = vsub.s32 %v2905, %v2907
        %v2909 = vrot.slane %v2895, %v2908
        %v2910 = vcombine.low %v2886, %v2902
        %v2911 = vcombine.high %v2886, %v2902
        %v2913 = vunpack.c.l.s4 1934713408
        %v2914 = vunpack.c.0.s8 %v2913
        %v2915 = vlaneseq
        %v2916 = vshrl.u32 %v2915, 7
        %v2917 = vsub.s32 %v2914, %v2916
        %v2918 = vrot.slane %v2910, %v2917
        %v2920 = vunpack.c.l.s4 1934713408
        %v2921 = vunpack.c.0.s8 %v2920
        %v2922 = vlaneseq
        %v2923 = vshrl.u32 %v2922, 7
        %v2924 = vsub.s32 %v2921, %v2923
        %v2925 = vrot.slane %v2911, %v2924
        %v2926 = vcombine.low %v2893, %v2909
        %v2927 = vcombine.high %v2893, %v2909
        %v2929 = vunpack.c.l.s4 1934713408
        %v2930 = vunpack.c.0.s8 %v2929
        %v2931 = vlaneseq
        %v2932 = vshrl.u32 %v2931, 7
        %v2933 = vsub.s32 %v2930, %v2932
        %v2934 = vrot.slane %v2926, %v2933
        %v2936 = vunpack.c.l.s4 1934713408
        %v2937 = vunpack.c.0.s8 %v2936
        %v2938 = vlaneseq
        %v2939 = vshrl.u32 %v2938, 7
        %v2940 = vsub.s32 %v2937, %v2939
        %v2941 = vrot.slane %v2927, %v2940
        %v2942 = vcombine.high %v2918, 0.0
        %v2943 = vcombine.high %v2925, 0.0
        %v2944 = vcombine.high %v2934, 0.0
        %v2945 = vcombine.high %v2941, 0.0
        %v2946 = vcombine.low %v2850, %v2857
        %v2948 = vunpack.c.l.s4 1983009808
        %v2949 = vunpack.c.0.s8 %v2948
        %v2950 = vlaneseq
        %v2951 = vshrl.u32 %v2950, 7
        %v2952 = vsub.s32 %v2949, %v2951
        %v2953 = vrot.slane %v2946, %v2952
        %v2954 = vcombine.low %v2874, %v2875
        %v2956 = vunpack.c.l.s4 1983009808
        %v2957 = vunpack.c.0.s8 %v2956
        %v2958 = vlaneseq
        %v2959 = vshrl.u32 %v2958, 7
        %v2960 = vsub.s32 %v2957, %v2959
        %v2961 = vrot.slane %v2954, %v2960
        %v2962 = vcombine.low %v2866, %v2873
        %v2964 = vunpack.c.l.s4 1983009808
        %v2965 = vunpack.c.0.s8 %v2964
        %v2966 = vlaneseq
        %v2967 = vshrl.u32 %v2966, 7
        %v2968 = vsub.s32 %v2965, %v2967
        %v2969 = vrot.slane %v2962, %v2968
        %v2970 = vcombine.low %v2876, %v2877
        %v2972 = vunpack.c.l.s4 1983009808
        %v2973 = vunpack.c.0.s8 %v2972
        %v2974 = vlaneseq
        %v2975 = vshrl.u32 %v2974, 7
        %v2976 = vsub.s32 %v2973, %v2975
        %v2977 = vrot.slane %v2970, %v2976
        %v2978 = vcombine.low %v2953, %v2961
        %v2979 = vcombine.high %v2953, %v2961
        %v2981 = vunpack.c.l.s4 1934713408
        %v2982 = vunpack.c.0.s8 %v2981
        %v2983 = vlaneseq
        %v2984 = vshrl.u32 %v2983, 7
        %v2985 = vsub.s32 %v2982, %v2984
        %v2986 = vrot.slane %v2978, %v2985
        %v2988 = vunpack.c.l.s4 1934713408
        %v2989 = vunpack.c.0.s8 %v2988
        %v2990 = vlaneseq
        %v2991 = vshrl.u32 %v2990, 7
        %v2992 = vsub.s32 %v2989, %v2991
        %v2993 = vrot.slane %v2979, %v2992
        %v2994 = vcombine.low %v2969, %v2977
        %v2995 = vcombine.high %v2969, %v2977
        %v2997 = vunpack.c.l.s4 1934713408
        %v2998 = vunpack.c.0.s8 %v2997
        %v2999 = vlaneseq
        %v3000 = vshrl.u32 %v2999, 7
        %v3001 = vsub.s32 %v2998, %v3000
        %v3002 = vrot.slane %v2994, %v3001
        %v3004 = vunpack.c.l.s4 1934713408
        %v3005 = vunpack.c.0.s8 %v3004
        %v3006 = vlaneseq
        %v3007 = vshrl.u32 %v3006, 7
        %v3008 = vsub.s32 %v3005, %v3007
        %v3009 = vrot.slane %v2995, %v3008
        %v3010 = vcombine.low %v2986, %v3002
        %v3011 = vcombine.high %v2986, %v3002
        %v3012 = vcombine.low %v2993, %v3009
        %v3013 = vcombine.high %v2993, %v3009
        %v3014 = vcombine.low %v2918, %v2925
        %v3016 = vunpack.c.l.s4 1983009808
        %v3017 = vunpack.c.0.s8 %v3016
        %v3018 = vlaneseq
        %v3019 = vshrl.u32 %v3018, 7
        %v3020 = vsub.s32 %v3017, %v3019
        %v3021 = vrot.slane %v3014, %v3020
        %v3022 = vcombine.low %v2942, %v2943
        %v3024 = vunpack.c.l.s4 1983009808
        %v3025 = vunpack.c.0.s8 %v3024
        %v3026 = vlaneseq
        %v3027 = vshrl.u32 %v3026, 7
        %v3028 = vsub.s32 %v3025, %v3027
        %v3029 = vrot.slane %v3022, %v3028
        %v3030 = vcombine.low %v2934, %v2941
        %v3032 = vunpack.c.l.s4 1983009808
        %v3033 = vunpack.c.0.s8 %v3032
        %v3034 = vlaneseq
        %v3035 = vshrl.u32 %v3034, 7
        %v3036 = vsub.s32 %v3033, %v3035
        %v3037 = vrot.slane %v3030, %v3036
        %v3038 = vcombine.low %v2944, %v2945
        %v3040 = vunpack.c.l.s4 1983009808
        %v3041 = vunpack.c.0.s8 %v3040
        %v3042 = vlaneseq
        %v3043 = vshrl.u32 %v3042, 7
        %v3044 = vsub.s32 %v3041, %v3043
        %v3045 = vrot.slane %v3038, %v3044
        %v3046 = vcombine.low %v3021, %v3029
        %v3047 = vcombine.high %v3021, %v3029
        %v3049 = vunpack.c.l.s4 1934713408
        %v3050 = vunpack.c.0.s8 %v3049
        %v3051 = vlaneseq
        %v3052 = vshrl.u32 %v3051, 7
        %v3053 = vsub.s32 %v3050, %v3052
        %v3054 = vrot.slane %v3046, %v3053
        %v3056 = vunpack.c.l.s4 1934713408
        %v3057 = vunpack.c.0.s8 %v3056
        %v3058 = vlaneseq
        %v3059 = vshrl.u32 %v3058, 7
        %v3060 = vsub.s32 %v3057, %v3059
        %v3061 = vrot.slane %v3047, %v3060
        %v3062 = vcombine.low %v3037, %v3045
        %v3063 = vcombine.high %v3037, %v3045
        %v3065 = vunpack.c.l.s4 1934713408
        %v3066 = vunpack.c.0.s8 %v3065
        %v3067 = vlaneseq
        %v3068 = vshrl.u32 %v3067, 7
        %v3069 = vsub.s32 %v3066, %v3068
        %v3070 = vrot.slane %v3062, %v3069
        %v3072 = vunpack.c.l.s4 1934713408
        %v3073 = vunpack.c.0.s8 %v3072
        %v3074 = vlaneseq
        %v3075 = vshrl.u32 %v3074, 7
        %v3076 = vsub.s32 %v3073, %v3075
        %v3077 = vrot.slane %v3063, %v3076
        %v3078 = vcombine.low %v3054, %v3070
        %v3079 = vcombine.high %v3054, %v3070
        %v3080 = vcombine.low %v3061, %v3077
        %v3081 = vcombine.high %v3061, %v3077
        %3084 = vrot.lane.b32.xlu0 %v3011, 32
        %v3085 = vpop.permute.xlu0 %3084
        %3086 = vrot.lane.b32.xlu0 %v3079, 32
        %v3087 = vpop.permute.xlu0 %3086
        %3092 = vrot.lane.b32.xlu0 %v3012, 64
        %v3093 = vpop.permute.xlu0 %3092
        %3094 = vrot.lane.b32.xlu0 %v3080, 64
        %v3095 = vpop.permute.xlu0 %3094
        %3100 = vrot.lane.b32.xlu0 %v3013, 96
        %v3101 = vpop.permute.xlu0 %3100
        %3102 = vrot.lane.b32.xlu0 %v3081, 96
        %v3103 = vpop.permute.xlu0 %3102
        %v3106 = vsel %vm934, %v3010, %v3085
        %v3107 = vsel %vm934, %v3078, %v3087
        %vm3108 = vcmask 523264
        %v3109 = vsel %vm3108, %v3106, %v3093
        %v3110 = vsel %vm3108, %v3107, %v3095
        %vm3111 = vcmask 785408
        %v3112 = vsel %vm3111, %v3109, %v3101
        %v3113 = vsel %vm3111, %v3110, %v3103
        %v3114 = vld [vmem:[%s798] sm:$0xff]
        %v3115 = vld [vmem:[%s798 + $0x8] sm:$0xff]
        %v3116 = vld [vmem:[%s798 + $0x10] sm:$0xff]
        %v3117 = vld [vmem:[%s798 + $0x18] sm:$0xff]
        %v3118 = vld [vmem:[%s798 + $0x20] sm:$0xff]
        %v3119 = vld [vmem:[%s798 + $0x28] sm:$0xff]
        %v3120 = vld [vmem:[%s798 + $0x30] sm:$0xff]
        %v3121 = vld [vmem:[%s798 + $0x38] sm:$0xff]
        %v3122 = vld [vmem:[%s798 + $0x40] sm:$0xff]
        %v3123 = vld [vmem:[%s798 + $0x48] sm:$0xff]
        %v3124 = vld [vmem:[%s798 + $0x50] sm:$0xff]
        %v3125 = vld [vmem:[%s798 + $0x58] sm:$0xff]
        %v3126 = vld [vmem:[%s798 + $0x60] sm:$0xff]
        %v3127 = vld [vmem:[%s798 + $0x68] sm:$0xff]
        %v3128 = vld [vmem:[%s798 + $0x70] sm:$0xff]
        %v3129 = vld [vmem:[%s798 + $0x78] sm:$0xff]
        %v3130 = vld [vmem:[%s801] sm:$0x1]
        %v3132 = vlaneseq
        %v3133 = vshrl.u32 %v3132, 7
        %v3134 = vsub.s32 0, %v3133
        %v3135 = vrot.slane %v3130, %v3134
        %3137 = vmatprep.subr.mxu0 0.0
        %3138 = vmatpush1.msra.mxu0 %v3114
        %3139 = vmatprep.subr.mxu0 0.0
        %3140 = vmatpush1.msra.mxu0 %v3115
        %3141 = vmatprep.subr.mxu0 0.0
        %3142 = vmatpush1.msra.mxu0 %v3116
        %3143 = vmatprep.subr.mxu0 0.0
        %3144 = vmatpush1.msra.mxu0 %v3117
        %3145 = vmatprep.subr.mxu0 0.0
        %3146 = vmatpush1.msra.mxu0 %v3118
        %3147 = vmatprep.subr.mxu0 0.0
        %3148 = vmatpush1.msra.mxu0 %v3119
        %3149 = vmatprep.subr.mxu0 0.0
        %3150 = vmatpush1.msra.mxu0 %v3120
        %3151 = vmatprep.subr.mxu0 0.0
        %3152 = vmatpush1.msra.mxu0 %v3121
        %3153 = vmatprep.subr.mxu0 0.0
        %3154 = vmatpush1.msra.mxu0 %v3122
        %3155 = vmatprep.subr.mxu0 0.0
        %3156 = vmatpush1.msra.mxu0 %v3123
        %3157 = vmatprep.subr.mxu0 0.0
        %3158 = vmatpush1.msra.mxu0 %v3124
        %3159 = vmatprep.subr.mxu0 0.0
        %3160 = vmatpush1.msra.mxu0 %v3125
        %3161 = vmatprep.subr.mxu0 0.0
        %3162 = vmatpush1.msra.mxu0 %v3126
        %3163 = vmatprep.subr.mxu0 0.0
        %3164 = vmatpush1.msra.mxu0 %v3127
        %3165 = vmatprep.subr.mxu0 0.0
        %3166 = vmatpush1.msra.mxu0 %v3128
        %3167 = vmatprep.subr.mxu0 0.0
        %3168 = vmatpush1.msra.mxu0 %v3129
        %3169 = vmatprep.subr.mxu0 0.0
        %3170 = vmatpush1.msra.mxu0 0.0
        %3171 = vmatprep.subr.mxu0 0.0
        %3172 = vmatpush1.msra.mxu0 0.0
        %3173 = vmatprep.subr.mxu0 0.0
        %3174 = vmatpush1.msra.mxu0 0.0
        %3175 = vmatprep.subr.mxu0 0.0
        %3176 = vmatpush1.msra.mxu0 0.0
        %3177 = vmatprep.subr.mxu0 0.0
        %3178 = vmatpush1.msra.mxu0 0.0
        %3179 = vmatprep.subr.mxu0 0.0
        %3180 = vmatpush1.msra.mxu0 0.0
        %3181 = vmatprep.subr.mxu0 0.0
        %3182 = vmatpush1.msra.mxu0 0.0
        %3183 = vmatprep.subr.mxu0 0.0
        %3184 = vmatpush1.msra.mxu0 0.0
        %3185 = vmatprep.subr.mxu0 0.0
        %3186 = vmatpush1.msra.mxu0 0.0
        %3187 = vmatprep.subr.mxu0 0.0
        %3188 = vmatpush1.msra.mxu0 0.0
        %3189 = vmatprep.subr.mxu0 0.0
        %3190 = vmatpush1.msra.mxu0 0.0
        %3191 = vmatprep.subr.mxu0 0.0
        %3192 = vmatpush1.msra.mxu0 0.0
        %3193 = vmatprep.subr.mxu0 0.0
        %3194 = vmatpush1.msra.mxu0 0.0
        %3195 = vmatprep.subr.mxu0 0.0
        %3196 = vmatpush1.msra.mxu0 0.0
        %3197 = vmatprep.subr.mxu0 0.0
        %3198 = vmatpush1.msra.mxu0 0.0
        %3199 = vmatprep.subr.mxu0 0.0
        %3200 = vmatpush1.msra.mxu0 0.0
        %3201 = vmatprep.mubr.f32.mxu0 0.0
        %3202 = vmatmul.mubr.f32.gmra.mrb[0].mxu0 %v3112
        %v3203 = vpop.f32.mrb[0].mxu0
        %v3204 = vadd.f32 %v3135, %v3203
        %v3205 = vpop.f32.mrb[0].mxu0
        %3206 = vmatprep.mubr.f32.mxu0 0.0
        %3207 = vmatmul.mubr.f32.gmra.mrb[0].mxu0 %v3113
        %v3208 = vpop.f32.mrb[0].mxu0
        %v3209 = vadd.f32 %v3135, %v3208
        %v3210 = vpop.f32.mrb[0].mxu0
        %3211 = vdwg.mxu0
        %v3212 = vadd.f32 %v3204, %v930
        %v3213 = vadd.f32 %v3209, %v931
        %v3214 = vld [vmem:[%s810] sm:$0x1]
        %v3215 = vld [vmem:[%s813] sm:$0x1]
        %v3216 = vsel %vm934, %v3212, 0.0
        %3217 = vadd.xlane.f32.xlu0 %v3216
        %v3218 = vpop.xlane.xlu0 %3217
        %v3219 = vsel %vm934, %v3213, 0.0
        %3220 = vadd.xlane.f32.xlu0 %v3219
        %v3221 = vpop.xlane.xlu0 %3220
        %v3222 = vmul.f32 %v3218, %v941
        %v3223 = vmul.f32 %v3221, %v941
        %v3224 = vsub.f32 %v3212, %v3222
        %v3225 = vsub.f32 %v3213, %v3223
        %v3226 = vmul.f32 %v3224, %v3224
        %v3227 = vmul.f32 %v3225, %v3225
        %v3228 = vsel %vm934, %v3226, 0.0
        %3229 = vadd.xlane.f32.xlu0 %v3228
        %v3230 = vpop.xlane.xlu0 %3229
        %v3231 = vsel %vm934, %v3227, 0.0
        %3232 = vadd.xlane.f32.xlu0 %v3231
        %v3233 = vpop.xlane.xlu0 %3232
        %v3234 = vmul.f32 %v3230, %v941
        %v3235 = vmul.f32 %v3233, %v941
        %v3236 = vadd.f32 %v3234, 1e-05
        %v3237 = vadd.f32 %v3235, 1e-05
        %v3238 = vrsqrt.pop %v3236
        %v3239 = vrsqrt.pop %v3237
        %v3240 = vmul.f32 %v3224, %v3238
        %v3241 = vmul.f32 %v3225, %v3239
        %v3243 = vlaneseq
        %v3244 = vshrl.u32 %v3243, 7
        %v3245 = vsub.s32 0, %v3244
        %v3246 = vrot.slane %v3214, %v3245
        %v3248 = vmul.f32 %v3240, %v3246
        %v3249 = vmul.f32 %v3241, %v3246
        %v3251 = vlaneseq
        %v3252 = vshrl.u32 %v3251, 7
        %v3253 = vsub.s32 0, %v3252
        %v3254 = vrot.slane %v3215, %v3253
        %v3256 = vadd.f32 %v3248, %v3254
        %v3257 = vadd.f32 %v3249, %v3254
        %v3258 = vld [vmem:[%s818] sm:$0xff]
        %v3259 = vld [vmem:[%s818 + $0x8] sm:$0xff]
        %v3260 = vld [vmem:[%s818 + $0x10] sm:$0xff]
        %v3261 = vld [vmem:[%s818 + $0x18] sm:$0xff]
        %v3262 = vld [vmem:[%s821] sm:$0x1]
        %v3264 = vlaneseq
        %v3265 = vshrl.u32 %v3264, 7
        %v3266 = vsub.s32 0, %v3265
        %v3267 = vrot.slane %v3262, %v3266
        %v3270 = vsel %vm934, %v3256, 0
        %v3273 = vsel %vm934, %v3257, 0
        %3275 = vmatprep.subr.mxu0 0.0
        %3276 = vmatpush1.msra.mxu0 %v3258
        %3277 = vmatprep.subr.mxu0 0.0
        %3278 = vmatpush1.msra.mxu0 %v3259
        %3279 = vmatprep.subr.mxu0 0.0
        %3280 = vmatpush1.msra.mxu0 %v3260
        %3281 = vmatprep.subr.mxu0 0.0
        %3282 = vmatpush1.msra.mxu0 %v3261
        %3283 = vmatprep.subr.mxu0 0.0
        %3284 = vmatpush1.msra.mxu0 0.0
        %3285 = vmatprep.subr.mxu0 0.0
        %3286 = vmatpush1.msra.mxu0 0.0
        %3287 = vmatprep.subr.mxu0 0.0
        %3288 = vmatpush1.msra.mxu0 0.0
        %3289 = vmatprep.subr.mxu0 0.0
        %3290 = vmatpush1.msra.mxu0 0.0
        %3291 = vmatprep.subr.mxu0 0.0
        %3292 = vmatpush1.msra.mxu0 0.0
        %3293 = vmatprep.subr.mxu0 0.0
        %3294 = vmatpush1.msra.mxu0 0.0
        %3295 = vmatprep.subr.mxu0 0.0
        %3296 = vmatpush1.msra.mxu0 0.0
        %3297 = vmatprep.subr.mxu0 0.0
        %3298 = vmatpush1.msra.mxu0 0.0
        %3299 = vmatprep.subr.mxu0 0.0
        %3300 = vmatpush1.msra.mxu0 0.0
        %3301 = vmatprep.subr.mxu0 0.0
        %3302 = vmatpush1.msra.mxu0 0.0
        %3303 = vmatprep.subr.mxu0 0.0
        %3304 = vmatpush1.msra.mxu0 0.0
        %3305 = vmatprep.subr.mxu0 0.0
        %3306 = vmatpush1.msra.mxu0 0.0
        %3307 = vmatprep.subr.mxu0 0.0
        %3308 = vmatpush1.msra.mxu0 0.0
        %3309 = vmatprep.subr.mxu0 0.0
        %3310 = vmatpush1.msra.mxu0 0.0
        %3311 = vmatprep.subr.mxu0 0.0
        %3312 = vmatpush1.msra.mxu0 0.0
        %3313 = vmatprep.subr.mxu0 0.0
        %3314 = vmatpush1.msra.mxu0 0.0
        %3315 = vmatprep.subr.mxu0 0.0
        %3316 = vmatpush1.msra.mxu0 0.0
        %3317 = vmatprep.subr.mxu0 0.0
        %3318 = vmatpush1.msra.mxu0 0.0
        %3319 = vmatprep.subr.mxu0 0.0
        %3320 = vmatpush1.msra.mxu0 0.0
        %3321 = vmatprep.subr.mxu0 0.0
        %3322 = vmatpush1.msra.mxu0 0.0
        %3323 = vmatprep.subr.mxu0 0.0
        %3324 = vmatpush1.msra.mxu0 0.0
        %3325 = vmatprep.subr.mxu0 0.0
        %3326 = vmatpush1.msra.mxu0 0.0
        %3327 = vmatprep.subr.mxu0 0.0
        %3328 = vmatpush1.msra.mxu0 0.0
        %3329 = vmatprep.subr.mxu0 0.0
        %3330 = vmatpush1.msra.mxu0 0.0
        %3331 = vmatprep.subr.mxu0 0.0
        %3332 = vmatpush1.msra.mxu0 0.0
        %3333 = vmatprep.subr.mxu0 0.0
        %3334 = vmatpush1.msra.mxu0 0.0
        %3335 = vmatprep.subr.mxu0 0.0
        %3336 = vmatpush1.msra.mxu0 0.0
        %3337 = vmatprep.subr.mxu0 0.0
        %3338 = vmatpush1.msra.mxu0 0.0
        %3339 = vmatprep.mubr.f32.mxu0 0.0
        %3340 = vmatmul.mubr.f32.gmra.mrb[0].mxu0 %v3270
        %v3341 = vpop.f32.mrb[0].mxu0
        %v3342 = vadd.f32 %v3267, %v3341
        %v3343 = vpop.f32.mrb[0].mxu0
        %3344 = vmatprep.mubr.f32.mxu0 0.0
        %3345 = vmatmul.mubr.f32.gmra.mrb[0].mxu0 %v3273
        %v3346 = vpop.f32.mrb[0].mxu0
        %v3347 = vadd.f32 %v3267, %v3346
        %v3348 = vpop.f32.mrb[0].mxu0
        %3349 = vdwg.mxu0
        %v3350 = vadd.f32 %v3342, %v3212
        %v3351 = vadd.f32 %v3347, %v3213
        %3352 = vst.msk [vmem:[#allocation2] sm:$0xff] %vm934, %v3350
        %3353 = vst.msk [vmem:[#allocation2 + $0x8] sm:$0xff] %vm934, %v3351
        %p3354 = scmp.eq.s32.totalorder %s37, 1
        // Predicated region
        $region105: #{tpu_custom_call.1} parent=87 // pred_check
          %p3355 = pneg %p3354
        $region106: #{tpu_custom_call.1} parent=87 // pred_check_branch
          %3357 = sbr.rel (%p3355) target = $region108
        $region107: #{tpu_custom_call.1} parent=87 // pred_region
          %v3358 = vld [vmem:[%s15] sm:$0xff]
          %v3359 = vld [vmem:[%s15 + $0x8] sm:$0xff]
          %v3360 = vld [vmem:[%s15 + $0x10] sm:$0xff]
          %v3361 = vld [vmem:[%s15 + $0x18] sm:$0xff]
          %v3362 = vld [vmem:[%s16] sm:$0x1]
          %v3364 = vlaneseq
          %v3365 = vshrl.u32 %v3364, 7
          %v3366 = vsub.s32 0, %v3365
          %v3367 = vrot.slane %v3362, %v3366
          %v3370 = vsel %vm934, %v3350, 0
          %v3373 = vsel %vm934, %v3351, 0
          %3375 = vmatprep.subr.mxu0 0.0
          %3376 = vmatpush1.msra.mxu0 %v3358
          %3377 = vmatprep.subr.mxu0 0.0
          %3378 = vmatpush1.msra.mxu0 %v3359
          %3379 = vmatprep.subr.mxu0 0.0
          %3380 = vmatpush1.msra.mxu0 %v3360
          %3381 = vmatprep.subr.mxu0 0.0
          %3382 = vmatpush1.msra.mxu0 %v3361
          %3383 = vmatprep.subr.mxu0 0.0
          %3384 = vmatpush1.msra.mxu0 0.0
          %3385 = vmatprep.subr.mxu0 0.0
          %3386 = vmatpush1.msra.mxu0 0.0
          %3387 = vmatprep.subr.mxu0 0.0
          %3388 = vmatpush1.msra.mxu0 0.0
          %3389 = vmatprep.subr.mxu0 0.0
          %3390 = vmatpush1.msra.mxu0 0.0
          %3391 = vmatprep.subr.mxu0 0.0
          %3392 = vmatpush1.msra.mxu0 0.0
          %3393 = vmatprep.subr.mxu0 0.0
          %3394 = vmatpush1.msra.mxu0 0.0
          %3395 = vmatprep.subr.mxu0 0.0
          %3396 = vmatpush1.msra.mxu0 0.0
          %3397 = vmatprep.subr.mxu0 0.0
          %3398 = vmatpush1.msra.mxu0 0.0
          %3399 = vmatprep.subr.mxu0 0.0
          %3400 = vmatpush1.msra.mxu0 0.0
          %3401 = vmatprep.subr.mxu0 0.0
          %3402 = vmatpush1.msra.mxu0 0.0
          %3403 = vmatprep.subr.mxu0 0.0
          %3404 = vmatpush1.msra.mxu0 0.0
          %3405 = vmatprep.subr.mxu0 0.0
          %3406 = vmatpush1.msra.mxu0 0.0
          %3407 = vmatprep.subr.mxu0 0.0
          %3408 = vmatpush1.msra.mxu0 0.0
          %3409 = vmatprep.subr.mxu0 0.0
          %3410 = vmatpush1.msra.mxu0 0.0
          %3411 = vmatprep.subr.mxu0 0.0
          %3412 = vmatpush1.msra.mxu0 0.0
          %3413 = vmatprep.subr.mxu0 0.0
          %3414 = vmatpush1.msra.mxu0 0.0
          %3415 = vmatprep.subr.mxu0 0.0
          %3416 = vmatpush1.msra.mxu0 0.0
          %3417 = vmatprep.subr.mxu0 0.0
          %3418 = vmatpush1.msra.mxu0 0.0
          %3419 = vmatprep.subr.mxu0 0.0
          %3420 = vmatpush1.msra.mxu0 0.0
          %3421 = vmatprep.subr.mxu0 0.0
          %3422 = vmatpush1.msra.mxu0 0.0
          %3423 = vmatprep.subr.mxu0 0.0
          %3424 = vmatpush1.msra.mxu0 0.0
          %3425 = vmatprep.subr.mxu0 0.0
          %3426 = vmatpush1.msra.mxu0 0.0
          %3427 = vmatprep.subr.mxu0 0.0
          %3428 = vmatpush1.msra.mxu0 0.0
          %3429 = vmatprep.subr.mxu0 0.0
          %3430 = vmatpush1.msra.mxu0 0.0
          %3431 = vmatprep.subr.mxu0 0.0
          %3432 = vmatpush1.msra.mxu0 0.0
          %3433 = vmatprep.subr.mxu0 0.0
          %3434 = vmatpush1.msra.mxu0 0.0
          %3435 = vmatprep.subr.mxu0 0.0
          %3436 = vmatpush1.msra.mxu0 0.0
          %3437 = vmatprep.subr.mxu0 0.0
          %3438 = vmatpush1.msra.mxu0 0.0
          %3439 = vmatprep.mubr.f32.mxu0 0.0
          %3440 = vmatmul.mubr.f32.gmra.mrb[0].mxu0 %v3370
          %v3441 = vpop.f32.mrb[0].mxu0
          %v3442 = vadd.f32 %v3367, %v3441
          %v3443 = vpop.f32.mrb[0].mxu0
          %3444 = vmatprep.mubr.f32.mxu0 0.0
          %3445 = vmatmul.mubr.f32.gmra.mrb[0].mxu0 %v3373
          %v3446 = vpop.f32.mrb[0].mxu0
          %v3447 = vadd.f32 %v3367, %v3446
          %v3448 = vpop.f32.mrb[0].mxu0
          %3449 = vdwg.mxu0
          %vm3450 = vcmask 64512
          %3451 = vst.msk [vmem:[%s826] sm:$0xff] %vm3450, %v3442
          %3452 = vst.msk [vmem:[%s826 + $0x8] sm:$0xff] %vm3450, %v3447
        $region108: #{tpu_custom_call.1} parent=87 // pred_fallthru
          _
        %p3453 = scmp.lt.s32.totalorder %s36, 1
        %s3454 = scalar_select %p3453, %s36, 1
        %s3455 = smul.addr %s3454, 2
        %s3456 = smul.addr %s3455, 8
        %s3457 = scalar_lea.vmem %s17, %s3456
        // Predicated region
        $region109: #{tpu_custom_call.1} parent=87 // pred_check
          %p3458 = pneg %p488
        $region110: #{tpu_custom_call.1} parent=87 // pred_check_branch
          %3460 = sbr.rel (%p3458) target = $region112
        $region111: #{tpu_custom_call.1} parent=87 // pred_region
          _
        $region112: #{tpu_custom_call.1} parent=87 // pred_fallthru
          _
      $region88: #{tpu_custom_call.1} parent=5 // pred_fallthru
        _
      %p3461 = scmp.le.s32.totalorder 2, %s27
      // Predicated region
      $region113: #{tpu_custom_call.1} parent=5 // pred_check
        %p3462 = pneg %p3461
      $region114: #{tpu_custom_call.1} parent=5 // pred_check_branch
        %3464 = sbr.rel (%p3462) target = $region116
      $region115: #{tpu_custom_call.1} parent=5 // pred_region
        %s3465 = ssub.s32 %s27, 2
        // Predicated region
        $region117: #{tpu_custom_call.1} parent=115 // pred_check
          %p3466 = pneg %p494
        $region118: #{tpu_custom_call.1} parent=115 // pred_check_branch
          %3468 = sbr.rel (%p3466) target = $region120
        $region119: #{tpu_custom_call.1} parent=115 // pred_region
          %p3469 = scmp.lt.s32.totalorder %s38, 1
          %s3470 = scalar_select %p3469, %s38, 1
          %s3471 = smul.addr %s3470, 2
          %s3472 = smul.addr %s3471, 8
          %s3473 = scalar_lea.vmem %s17, %s3472
        $region120: #{tpu_custom_call.1} parent=115 // pred_fallthru
          _
      $region116: #{tpu_custom_call.1} parent=5 // pred_fallthru
        _
    $region6: #{tpu_custom_call.1} parent=1 // loop_footer
      %s31 = sadd.s32 1, %s27
    $region7: #{tpu_custom_call.1} parent=1 // loop_footer_branch
      %26 = sbr.rel target = $region3
    $region8: #{tpu_custom_call.1} parent=1 // loop_exit
      _
    %3474 = vsyncpa [#allocation4], 1
    %s3475 = scalar_lea.sflag [#allocation4], 1
    %3476 = vsyncpa %s3475, 1
    %3477 = vsyncpa [#allocation6], 1
    %s3478 = scalar_lea.sflag [#allocation6], 1
    %3479 = vsyncpa %s3478, 1

</llo_original>
